<compile_context>
chip_gen: v7x
topology: tpu7x:2x2x1
jax: 0.10.0
libtpu: 0.0.40
codegen_flags: <defaults>
</compile_context>

<pallas_src>
import functools

import jax
import jax.numpy as jnp
from jax.experimental import pallas as pl
from jax.experimental.pallas import tpu as pltpu

LANE = 128
BF16_SUBLANE = 16   # a bf16 vreg packs (16, 128): align batch tiles/padding to 16 rows


def _round_up(n, m):
    return ((n + m - 1) // m) * m


# ----------------------------------------------------------------------------
# Pallas kernel: fused 4-layer MLP over one batch tile (weights stay resident)
# ----------------------------------------------------------------------------
def _feature_model_kernel(x_ref,
                          w1_ref, b1_ref,
                          w2_ref, b2_ref,
                          w3_ref, b3_ref,
                          w4_ref, b4_ref,
                          out_ref):
    # fc1 + ReLU (bf16 operands, f32 MXU accumulate, f32 bias/ReLU epilogue on VPU)
    h = jnp.dot(x_ref[...], w1_ref[...], preferred_element_type=jnp.float32)
    h = jnp.maximum(h + b1_ref[...], 0.0).astype(jnp.bfloat16)

    # fc2 + ReLU (dominant matmul: 2048 x 512)
    h = jnp.dot(h, w2_ref[...], preferred_element_type=jnp.float32)
    h = jnp.maximum(h + b2_ref[...], 0.0).astype(jnp.bfloat16)

    # fc3 + ReLU
    h = jnp.dot(h, w3_ref[...], preferred_element_type=jnp.float32)
    h = jnp.maximum(h + b3_ref[...], 0.0).astype(jnp.bfloat16)

    # output layer (lane-padded to 128; padded columns carry zero weight/bias)
    y = jnp.dot(h, w4_ref[...], preferred_element_type=jnp.float32) + b4_ref[...]
    out_ref[...] = y.astype(out_ref.dtype)


# ----------------------------------------------------------------------------
# One-time parameter preparation (hoisted out of the per-call forward path)
# ----------------------------------------------------------------------------
def prepare_params(params):
    """Cast weights to bf16, biases to f32 row vectors, and lane-pad the output
    head to a multiple of 128 (zero-filled) so the kernel's stores are unmasked.
    Returns (prepared_dict_of_arrays, out_len)."""
    (w1, b1), (w2, b2), (w3, b3), (w4, b4) = params
    out_len = int(w4.shape[1])
    out_pad = _round_up(out_len, LANE)

    def _bias(b):
        return jnp.asarray(b, jnp.float32).reshape(1, -1)

    w4_p = jnp.zeros((w4.shape[0], out_pad), jnp.bfloat16)
    w4_p = w4_p.at[:, :out_len].set(jnp.asarray(w4, jnp.bfloat16))
    b4_p = jnp.zeros((1, out_pad), jnp.float32)
    b4_p = b4_p.at[:, :out_len].set(_bias(b4)[0])

    prepared = {
        "w1": jnp.asarray(w1, jnp.bfloat16), "b1": _bias(b1),
        "w2": jnp.asarray(w2, jnp.bfloat16), "b2": _bias(b2),
        "w3": jnp.asarray(w3, jnp.bfloat16), "b3": _bias(b3),
        "w4": w4_p, "b4": b4_p,
    }
    return prepared, out_len


# ----------------------------------------------------------------------------
# Batch tile selection
# ----------------------------------------------------------------------------
def _choose_batch_tiling(batch):
    """Pick a bf16-sublane-aligned batch tile that (a) minimizes padding waste,
    (b) yields >= 2 grid tiles whenever batch allows (keeps both v7x TCs busy),
    (c) caps at 256 (512 for batch >= 1024 to amortize per-step overhead)."""
    max_tile = 512 if batch >= 1024 else 256
    b_aligned = _round_up(batch, BF16_SUBLANE)
    n_tiles = pl.cdiv(b_aligned, max_tile)
    if b_aligned >= 2 * BF16_SUBLANE:
        n_tiles = max(n_tiles, 2)
    tile_b = _round_up(pl.cdiv(b_aligned, n_tiles), BF16_SUBLANE)
    b_pad = _round_up(b_aligned, tile_b)
    return tile_b, b_pad


# ----------------------------------------------------------------------------
# Forward wrapper (jit this with static out_len / version)
# ----------------------------------------------------------------------------
def feature_model_forward(x, prepared, *, out_len, version="v0"):
    w1, b1 = prepared["w1"], prepared["b1"]
    w2, b2 = prepared["w2"], prepared["b2"]
    w3, b3 = prepared["w3"], prepared["b3"]
    w4, b4 = prepared["w4"], prepared["b4"]

    batch, in_len = x.shape
    out_pad = w4.shape[1]

    tile_b, b_pad = _choose_batch_tiling(batch)
    x_bf = x.astype(jnp.bfloat16)
    if b_pad != batch:
        x_bf = jnp.pad(x_bf, ((0, b_pad - batch), (0, 0)))
    grid = (b_pad // tile_b,)

    def resident(arr):
        # Constant block index -> loaded once, stays resident in VMEM across grid
        # steps (no re-DMA). Default double-buffering kept: total VMEM is well under
        # the 32 MiB scoped limit even at tile_b=512.
        return pl.BlockSpec(arr.shape, lambda i: (0, 0))

    flops = 2 * b_pad * (in_len * 2048 + 2048 * 512 + 512 * 256 + 256 * out_pad)
    bytes_accessed = (
        x_bf.size * 2
        + (w1.size + w2.size + w3.size + w4.size) * 2
        + (b1.size + b2.size + b3.size + b4.size) * 4
        + b_pad * out_pad * 4
    )

    logits_padded = pl.pallas_call(
        _feature_model_kernel,
        out_shape=jax.ShapeDtypeStruct((b_pad, out_pad), jnp.float32),
        grid=grid,
        in_specs=[
            pl.BlockSpec((tile_b, in_len), lambda i: (i, 0)),   # x batch tile
            resident(w1), resident(b1),
            resident(w2), resident(b2),
            resident(w3), resident(b3),
            resident(w4), resident(b4),
        ],
        out_specs=pl.BlockSpec((tile_b, out_pad), lambda i: (i, 0)),
        compiler_params=pltpu.CompilerParams(
            dimension_semantics=("parallel",),        # megacore: shard batch tiles
            vmem_limit_bytes=32 * 1024 * 1024,        # <= 64 MiB physical on v7x
        ),
        cost_estimate=pl.CostEstimate(
            flops=flops, transcendentals=0, bytes_accessed=bytes_accessed),
    )(x_bf, w1, b1, w2, b2, w3, b3, w4, b4)

    logits = logits_padded[:batch, :out_len]

    # `version` post-processing (plain-JAX glue mirroring the PyTorch branches;
    # fused into the same jit-compiled executable as the kernel).
    sm = lambda v: jax.nn.softmax(v, axis=-1)
    sg = jax.nn.sigmoid
    if version == "v0":
        return logits
    if version == "v1":
        return sm(logits)
    if version == "v2":
        return jnp.concatenate(
            [sg(logits[:, :24]), sm(logits[:, 24:28]), sg(logits[:, 28:29])], axis=1)
    if version in ("v6", "v7"):
        return jnp.concatenate([sm(logits[:, :8]), logits[:, 8:]], axis=1)
    if version == "v8":
        return jnp.concatenate(
            [logits[:, :60], sm(logits[:, 60:64]), sg(logits[:, 64:65])], axis=1)
    if version in ("v9", "v10"):
        return jnp.concatenate(
            [sg(logits[:, :12]), sm(logits[:, 12:16]), sg(logits[:, 16:17])], axis=1)
    if version in ("GFVs_all_1", "GVFs_all_2"):
        return jnp.concatenate(
            [sm(logits[:, :8]), logits[:, 8:-1], sg(logits[:, -1:])], axis=1)
    if version == "v11":
        return jnp.concatenate(
            [sg(logits[:, :12]), sm(logits[:, 12:17])], axis=1)
    return logits


# ----------------------------------------------------------------------------
# Deterministic parameter init (PyTorch nn.Linear default uniform bounds)
# ----------------------------------------------------------------------------
def init_params(key, input_len, output_len):
    dims = [(input_len, 2048), (2048, 512), (512, 256), (256, output_len)]
    params = []
    for (fan_in, fan_out) in dims:
        key, kw, kb = jax.random.split(key, 3)
        bound = 1.0 / jnp.sqrt(jnp.float32(fan_in))
        w = jax.random.uniform(kw, (fan_in, fan_out), jnp.float32, -bound, bound)
        b = jax.random.uniform(kb, (1, fan_out), jnp.float32, -bound, bound)
        params.append((w, b))
    return params


def reference_forward(x, params):
    (w1, b1), (w2, b2), (w3, b3), (w4, b4) = params
    h = jnp.maximum(x @ w1 + b1, 0.0)
    h = jnp.maximum(h @ w2 + b2, 0.0)
    h = jnp.maximum(h @ w3 + b3, 0.0)
    return h @ w4 + b4


if __name__ == "__main__":
    INPUT_LEN = 32
    OUTPUT_LEN = 17
    BATCH = 8

    key = jax.random.PRNGKey(0)
    key, kx, kx2 = jax.random.split(key, 3)
    params = init_params(key, INPUT_LEN, OUTPUT_LEN)

    # One-time prep (bf16 cast + head padding) and a jitted forward.
    prepared, out_len = prepare_params(params)
    fwd = jax.jit(feature_model_forward, static_argnames=("out_len", "version"))

    # Small DQN-style batch (single grid tile).
    x = jax.random.normal(kx, (BATCH, INPUT_LEN), dtype=jnp.float32)
    out = jax.block_until_ready(fwd(x, prepared, out_len=out_len, version="v0"))
    ref = reference_forward(x, params)
    assert out.shape == (BATCH, OUTPUT_LEN)
    # bf16 operands vs f32 reference -> loosened tolerance (DQN-tolerant regime).
    assert jnp.allclose(out, ref, atol=5e-2, rtol=5e-2), "mismatch vs reference (batch=8)"

    # Larger batch: exercises batch padding + the multi-tile ("parallel") grid path.
    x2 = jax.random.normal(kx2, (40, INPUT_LEN), dtype=jnp.float32)
    out2 = jax.block_until_ready(fwd(x2, prepared, out_len=out_len, version="v0"))
    ref2 = reference_forward(x2, params)
    assert out2.shape == (40, OUTPUT_LEN)
    assert jnp.allclose(out2, ref2, atol=5e-2, rtol=5e-2), "mismatch vs reference (batch=40)"

    # Exercise one version epilogue under jit (v11: sigmoid(:12) ++ softmax(12:17)).
    out_v11 = jax.block_until_ready(fwd(x, prepared, out_len=out_len, version="v11"))
    assert out_v11.shape == (BATCH, OUTPUT_LEN)

    print("KERNEL_OK")
</pallas_src>

<mosaic_0001>
module attributes {stable_mosaic.version = 11 : i64} {
  func.func @_feature_model_kernel(%arg0: i32, %arg1: memref<16x32xbf16, #tpu.memory_space<vmem>>, %arg2: memref<32x2048xbf16, #tpu.memory_space<vmem>>, %arg3: memref<1x2048xf32, #tpu.memory_space<vmem>>, %arg4: memref<2048x512xbf16, #tpu.memory_space<vmem>>, %arg5: memref<1x512xf32, #tpu.memory_space<vmem>>, %arg6: memref<512x256xbf16, #tpu.memory_space<vmem>>, %arg7: memref<1x256xf32, #tpu.memory_space<vmem>>, %arg8: memref<256x128xbf16, #tpu.memory_space<vmem>>, %arg9: memref<1x128xf32, #tpu.memory_space<vmem>>, %arg10: memref<16x128xf32, #tpu.memory_space<vmem>>) attributes {dimension_semantics = [#tpu.dimension_semantics<parallel>], iteration_bounds = array<i64: 1>, scalar_prefetch = 0 : i64, scratch_operands = 0 : i64, tpu.core_type = #tpu.core_type<tc>, window_params = [{transform_indices = @transform_0, window_bounds = array<i64: 16, 32>}, {pipeline_mode = #tpu.pipeline_mode<synchronous>, transform_indices = @transform_1, window_bounds = array<i64: 32, 2048>}, {pipeline_mode = #tpu.pipeline_mode<synchronous>, transform_indices = @transform_2, window_bounds = array<i64: 1, 2048>}, {pipeline_mode = #tpu.pipeline_mode<synchronous>, transform_indices = @transform_3, window_bounds = array<i64: 2048, 512>}, {pipeline_mode = #tpu.pipeline_mode<synchronous>, transform_indices = @transform_4, window_bounds = array<i64: 1, 512>}, {pipeline_mode = #tpu.pipeline_mode<synchronous>, transform_indices = @transform_5, window_bounds = array<i64: 512, 256>}, {pipeline_mode = #tpu.pipeline_mode<synchronous>, transform_indices = @transform_6, window_bounds = array<i64: 1, 256>}, {pipeline_mode = #tpu.pipeline_mode<synchronous>, transform_indices = @transform_7, window_bounds = array<i64: 256, 128>}, {pipeline_mode = #tpu.pipeline_mode<synchronous>, transform_indices = @transform_8, window_bounds = array<i64: 1, 128>}, {transform_indices = @transform_9, window_bounds = array<i64: 16, 128>}]} {
    %c0 = arith.constant 0 : index
    %c0_0 = arith.constant 0 : index
    %0 = vector.load %arg1[%c0, %c0_0] : memref<16x32xbf16, #tpu.memory_space<vmem>>, vector<16x32xbf16>
    %c0_1 = arith.constant 0 : index
    %c0_2 = arith.constant 0 : index
    %1 = vector.load %arg2[%c0_1, %c0_2] : memref<32x2048xbf16, #tpu.memory_space<vmem>>, vector<32x2048xbf16>
    %cst = arith.constant dense<0.000000e+00> : vector<16x2048xf32>
    %2 = tpu.matmul %0, %1, %cst {dimension_numbers = #tpu.dot_dimension_numbers<[1], [0], [0], [1], [0, 0, 1, 1], [], []>} : vector<16x32xbf16>, vector<32x2048xbf16>, vector<16x2048xf32> -> vector<16x2048xf32>
    %c0_3 = arith.constant 0 : index
    %c0_4 = arith.constant 0 : index
    %3 = vector.load %arg3[%c0_3, %c0_4] : memref<1x2048xf32, #tpu.memory_space<vmem>>, vector<1x2048xf32>
    %4 = vector.broadcast %3 : vector<1x2048xf32> to vector<16x2048xf32>
    %5 = arith.addf %2, %4 : vector<16x2048xf32>
    %cst_5 = arith.constant 0.000000e+00 : f32
    %6 = vector.broadcast %cst_5 : f32 to vector<16x2048xf32>
    %7 = arith.maximumf %5, %6 : vector<16x2048xf32>
    %8 = arith.truncf %7 : vector<16x2048xf32> to vector<16x2048xbf16>
    %c0_6 = arith.constant 0 : index
    %c0_7 = arith.constant 0 : index
    %9 = vector.load %arg4[%c0_6, %c0_7] : memref<2048x512xbf16, #tpu.memory_space<vmem>>, vector<2048x512xbf16>
    %cst_8 = arith.constant dense<0.000000e+00> : vector<16x512xf32>
    %10 = tpu.matmul %8, %9, %cst_8 {dimension_numbers = #tpu.dot_dimension_numbers<[1], [0], [0], [1], [0, 0, 1, 1], [], []>} : vector<16x2048xbf16>, vector<2048x512xbf16>, vector<16x512xf32> -> vector<16x512xf32>
    %c0_9 = arith.constant 0 : index
    %c0_10 = arith.constant 0 : index
    %11 = vector.load %arg5[%c0_9, %c0_10] : memref<1x512xf32, #tpu.memory_space<vmem>>, vector<1x512xf32>
    %12 = vector.broadcast %11 : vector<1x512xf32> to vector<16x512xf32>
    %13 = arith.addf %10, %12 : vector<16x512xf32>
    %cst_11 = arith.constant 0.000000e+00 : f32
    %14 = vector.broadcast %cst_11 : f32 to vector<16x512xf32>
    %15 = arith.maximumf %13, %14 : vector<16x512xf32>
    %16 = arith.truncf %15 : vector<16x512xf32> to vector<16x512xbf16>
    %c0_12 = arith.constant 0 : index
    %c0_13 = arith.constant 0 : index
    %17 = vector.load %arg6[%c0_12, %c0_13] : memref<512x256xbf16, #tpu.memory_space<vmem>>, vector<512x256xbf16>
    %cst_14 = arith.constant dense<0.000000e+00> : vector<16x256xf32>
    %18 = tpu.matmul %16, %17, %cst_14 {dimension_numbers = #tpu.dot_dimension_numbers<[1], [0], [0], [1], [0, 0, 1, 1], [], []>} : vector<16x512xbf16>, vector<512x256xbf16>, vector<16x256xf32> -> vector<16x256xf32>
    %c0_15 = arith.constant 0 : index
    %c0_16 = arith.constant 0 : index
    %19 = vector.load %arg7[%c0_15, %c0_16] : memref<1x256xf32, #tpu.memory_space<vmem>>, vector<1x256xf32>
    %20 = vector.broadcast %19 : vector<1x256xf32> to vector<16x256xf32>
    %21 = arith.addf %18, %20 : vector<16x256xf32>
    %cst_17 = arith.constant 0.000000e+00 : f32
    %22 = vector.broadcast %cst_17 : f32 to vector<16x256xf32>
    %23 = arith.maximumf %21, %22 : vector<16x256xf32>
    %24 = arith.truncf %23 : vector<16x256xf32> to vector<16x256xbf16>
    %c0_18 = arith.constant 0 : index
    %c0_19 = arith.constant 0 : index
    %25 = vector.load %arg8[%c0_18, %c0_19] : memref<256x128xbf16, #tpu.memory_space<vmem>>, vector<256x128xbf16>
    %cst_20 = arith.constant dense<0.000000e+00> : vector<16x128xf32>
    %26 = tpu.matmul %24, %25, %cst_20 {dimension_numbers = #tpu.dot_dimension_numbers<[1], [0], [0], [1], [0, 0, 1, 1], [], []>} : vector<16x256xbf16>, vector<256x128xbf16>, vector<16x128xf32> -> vector<16x128xf32>
    %c0_21 = arith.constant 0 : index
    %c0_22 = arith.constant 0 : index
    %27 = vector.load %arg9[%c0_21, %c0_22] : memref<1x128xf32, #tpu.memory_space<vmem>>, vector<1x128xf32>
    %28 = vector.broadcast %27 : vector<1x128xf32> to vector<16x128xf32>
    %29 = arith.addf %26, %28 : vector<16x128xf32>
    %c0_23 = arith.constant 0 : index
    %c0_24 = arith.constant 0 : index
    %30 = vector.load %arg10[%c0_23, %c0_24] : memref<16x128xf32, #tpu.memory_space<vmem>>, vector<16x128xf32>
    tpu.vector_store %arg10[%c0_23, %c0_24], %29 {strides = array<i32>} : memref<16x128xf32, #tpu.memory_space<vmem>>, vector<16x128xf32>,
    return
  }
  func.func @transform_0(%arg0: i32) -> (i32, i32) {
    %c0_i32 = arith.constant 0 : i32
    %c0_i32_0 = arith.constant 0 : i32
    return %arg0, %c0_i32 : i32, i32
  }
  func.func @transform_1(%arg0: i32) -> (i32, i32) {
    %c0_i32 = arith.constant 0 : i32
    %c0_i32_0 = arith.constant 0 : i32
    %c0_i32_1 = arith.constant 0 : i32
    return %c0_i32, %c0_i32_0 : i32, i32
  }
  func.func @transform_2(%arg0: i32) -> (i32, i32) {
    %c0_i32 = arith.constant 0 : i32
    %c0_i32_0 = arith.constant 0 : i32
    %c0_i32_1 = arith.constant 0 : i32
    return %c0_i32, %c0_i32_0 : i32, i32
  }
  func.func @transform_3(%arg0: i32) -> (i32, i32) {
    %c0_i32 = arith.constant 0 : i32
    %c0_i32_0 = arith.constant 0 : i32
    %c0_i32_1 = arith.constant 0 : i32
    return %c0_i32, %c0_i32_0 : i32, i32
  }
  func.func @transform_4(%arg0: i32) -> (i32, i32) {
    %c0_i32 = arith.constant 0 : i32
    %c0_i32_0 = arith.constant 0 : i32
    %c0_i32_1 = arith.constant 0 : i32
    return %c0_i32, %c0_i32_0 : i32, i32
  }
  func.func @transform_5(%arg0: i32) -> (i32, i32) {
    %c0_i32 = arith.constant 0 : i32
    %c0_i32_0 = arith.constant 0 : i32
    %c0_i32_1 = arith.constant 0 : i32
    return %c0_i32, %c0_i32_0 : i32, i32
  }
  func.func @transform_6(%arg0: i32) -> (i32, i32) {
    %c0_i32 = arith.constant 0 : i32
    %c0_i32_0 = arith.constant 0 : i32
    %c0_i32_1 = arith.constant 0 : i32
    return %c0_i32, %c0_i32_0 : i32, i32
  }
  func.func @transform_7(%arg0: i32) -> (i32, i32) {
    %c0_i32 = arith.constant 0 : i32
    %c0_i32_0 = arith.constant 0 : i32
    %c0_i32_1 = arith.constant 0 : i32
    return %c0_i32, %c0_i32_0 : i32, i32
  }
  func.func @transform_8(%arg0: i32) -> (i32, i32) {
    %c0_i32 = arith.constant 0 : i32
    %c0_i32_0 = arith.constant 0 : i32
    %c0_i32_1 = arith.constant 0 : i32
    return %c0_i32, %c0_i32_0 : i32, i32
  }
  func.func @transform_9(%arg0: i32) -> (i32, i32) {
    %c0_i32 = arith.constant 0 : i32
    %c0_i32_0 = arith.constant 0 : i32
    return %arg0, %c0_i32 : i32, i32
  }
}

</mosaic_0001>

<llo_original>
// kernel: feature_model_forward.1
$region0: #{feature_model_forward.1}
  #allocation0 [shape = 'u32[]', space=smem, size = 0x4, offset = 0x4, fixed_abs, tag = 'smem constant byte address 0x4 - core index']
  #allocation1 [shape = 'u32[144,128]{1,0:T(1,128)}', space=vmem, size = 0x12000, scoped, tag = 'internal scratch']
  %s0 = inlined_call_operand.vmem [shape: bf16[16,32], index: 0, kind: input, shape index: {}]
  %s1 = inlined_call_operand.hbm [shape: bf16[32,2048], index: 1, kind: input, shape index: {}]
  %s2 = inlined_call_operand.hbm [shape: f32[1,2048], index: 2, kind: input, shape index: {}]
  %s3 = inlined_call_operand.hbm [shape: bf16[2048,512], index: 3, kind: input, shape index: {}]
  %s4 = inlined_call_operand.hbm [shape: f32[1,512], index: 4, kind: input, shape index: {}]
  %s5 = inlined_call_operand.hbm [shape: bf16[512,256], index: 5, kind: input, shape index: {}]
  %s6 = inlined_call_operand.hbm [shape: f32[1,256], index: 6, kind: input, shape index: {}]
  %s7 = inlined_call_operand.hbm [shape: bf16[256,128], index: 7, kind: input, shape index: {}]
  %s8 = inlined_call_operand.hbm [shape: f32[1,128], index: 8, kind: input, shape index: {}]
  %s9 = inlined_call_operand.vmem [shape: f32[16,128], index: 9, kind: output, shape index: {}]
  %s10 = sld [smem:[#allocation0]]
  $region78: #{feature_model_forward.1} parent=0
    _
  %s12 = ssub.s32 1, %s10
  %s13 = scalar_select 0, %s12, %s10
  $region1: #{feature_model_forward.1} parent=0
    #allocation2 [shape = 'u8[131072]{0}', space=vmem, size = 0x20000, scoped, tag = 'input window, operand 1, single buffered']
    #allocation3 [shape = 's32[1]{0}', space=sflag, size = 0x4, scoped, tag = 'scoped memory for feature_model_forward.1']
    #allocation4 [shape = 'u8[8192]{0}', space=vmem, size = 0x2000, scoped, tag = 'input window, operand 2, single buffered']
    #allocation5 [shape = 's32[1]{0}', space=sflag, size = 0x4, scoped, tag = 'scoped memory for feature_model_forward.1']
    #allocation6 [shape = 'u8[2097152]{0}', space=vmem, size = 0x200000, scoped, tag = 'input window, operand 3, single buffered']
    #allocation7 [shape = 'u8[2048]{0}', space=vmem, size = 0x800, scoped, tag = 'input window, operand 4, single buffered']
    #allocation8 [shape = 's32[1]{0}', space=sflag, size = 0x4, scoped, tag = 'scoped memory for feature_model_forward.1']
    #allocation9 [shape = 'u8[262144]{0}', space=vmem, size = 0x40000, scoped, tag = 'input window, operand 5, single buffered']
    #allocation10 [shape = 'u8[1024]{0}', space=vmem, size = 0x400, scoped, tag = 'input window, operand 6, single buffered']
    #allocation11 [shape = 's32[1]{0}', space=sflag, size = 0x4, scoped, tag = 'scoped memory for feature_model_forward.1']
    #allocation12 [shape = 'u8[65536]{0}', space=vmem, size = 0x10000, scoped, tag = 'input window, operand 7, single buffered']
    #allocation13 [shape = 'u8[512]{0}', space=vmem, size = 0x400, scoped, tag = 'input window, operand 8, single buffered']
    #allocation14 [shape = 's32[1]{0}', space=sflag, size = 0x4, scoped, tag = 'scoped memory for feature_model_forward.1']
    %14 = vsyncpa [#allocation3], 0
    %15 = vsyncpa [#allocation5], 0
    %16 = vsyncpa [#allocation8], 0
    %17 = vsyncpa [#allocation11], 0
    %18 = vsyncpa [#allocation14], 0
    // Predicated region
    $region2: #{feature_model_forward.1} parent=1 // pred_check
      _
    $region3: #{feature_model_forward.1} parent=1 // pred_check_branch
      %20 = sbr.rel (0) target = $region5
    $region4: #{feature_model_forward.1} parent=1 // pred_region
      _
    $region5: #{feature_model_forward.1} parent=1 // pred_fallthru
      _
    // Predicated region
    $region6: #{feature_model_forward.1} parent=1 // pred_check
      _
    $region7: #{feature_model_forward.1} parent=1 // pred_check_branch
      %22 = sbr.rel (0) target = $region9
    $region8: #{feature_model_forward.1} parent=1 // pred_region
      %s24 = ssub.s32 4096, 4096
      %25 = vsyncadd [#allocation3], %s24
      %s26 = sshll.u32 [#allocation2], 4
      %s27 = int_to_ptr.vmem [resolvable:$true] %s26
      %32 = dma.hbm_to_vmem [thread:$0]  %s1, 4096, %s27, [#allocation3], 1024, 1024, 64
    $region9: #{feature_model_forward.1} parent=1 // pred_fallthru
      _
    // Predicated region
    $region10: #{feature_model_forward.1} parent=1 // pred_check
      _
    $region11: #{feature_model_forward.1} parent=1 // pred_check_branch
      %34 = sbr.rel (0) target = $region13
    $region12: #{feature_model_forward.1} parent=1 // pred_region
      %s36 = ssub.s32 256, 256
      %37 = vsyncadd [#allocation5], %s36
      %s39 = sshll.u32 [#allocation4], 4
      %s40 = int_to_ptr.vmem [resolvable:$true] %s39
      %42 = dma.hbm_to_vmem [thread:$0]  %s2, 256, %s40, [#allocation5]
    $region13: #{feature_model_forward.1} parent=1 // pred_fallthru
      _
    // Predicated region
    $region14: #{feature_model_forward.1} parent=1 // pred_check
      _
    $region15: #{feature_model_forward.1} parent=1 // pred_check_branch
      %44 = sbr.rel (0) target = $region17
    $region16: #{feature_model_forward.1} parent=1 // pred_region
      %s46 = ssub.s32 65536, 65536
      %47 = vsyncadd [#allocation5], %s46
      %s48 = sshll.u32 [#allocation6], 4
      %s49 = int_to_ptr.vmem [resolvable:$true] %s48
      %54 = dma.hbm_to_vmem [thread:$0]  %s3, 65536, %s49, [#allocation5], 256, 256, 16
    $region17: #{feature_model_forward.1} parent=1 // pred_fallthru
      _
    // Predicated region
    $region18: #{feature_model_forward.1} parent=1 // pred_check
      _
    $region19: #{feature_model_forward.1} parent=1 // pred_check_branch
      %56 = sbr.rel (0) target = $region21
    $region20: #{feature_model_forward.1} parent=1 // pred_region
      %s58 = ssub.s32 64, 64
      %59 = vsyncadd [#allocation8], %s58
      %s61 = sshll.u32 [#allocation7], 4
      %s62 = int_to_ptr.vmem [resolvable:$true] %s61
      %64 = dma.hbm_to_vmem [thread:$0]  %s4, 64, %s62, [#allocation8]
    $region21: #{feature_model_forward.1} parent=1 // pred_fallthru
      _
    // Predicated region
    $region22: #{feature_model_forward.1} parent=1 // pred_check
      _
    $region23: #{feature_model_forward.1} parent=1 // pred_check_branch
      %66 = sbr.rel (0) target = $region25
    $region24: #{feature_model_forward.1} parent=1 // pred_region
      %s68 = ssub.s32 8192, 8192
      %69 = vsyncadd [#allocation8], %s68
      %s70 = sshll.u32 [#allocation9], 4
      %s71 = int_to_ptr.vmem [resolvable:$true] %s70
      %76 = dma.hbm_to_vmem [thread:$0]  %s5, 8192, %s71, [#allocation8], 128, 128, 8
    $region25: #{feature_model_forward.1} parent=1 // pred_fallthru
      _
    // Predicated region
    $region26: #{feature_model_forward.1} parent=1 // pred_check
      _
    $region27: #{feature_model_forward.1} parent=1 // pred_check_branch
      %78 = sbr.rel (0) target = $region29
    $region28: #{feature_model_forward.1} parent=1 // pred_region
      %s80 = ssub.s32 32, 32
      %81 = vsyncadd [#allocation11], %s80
      %s83 = sshll.u32 [#allocation10], 4
      %s84 = int_to_ptr.vmem [resolvable:$true] %s83
      %86 = dma.hbm_to_vmem [thread:$0]  %s6, 32, %s84, [#allocation11]
    $region29: #{feature_model_forward.1} parent=1 // pred_fallthru
      _
    // Predicated region
    $region30: #{feature_model_forward.1} parent=1 // pred_check
      _
    $region31: #{feature_model_forward.1} parent=1 // pred_check_branch
      %88 = sbr.rel (0) target = $region33
    $region32: #{feature_model_forward.1} parent=1 // pred_region
      %s90 = ssub.s32 2048, 2048
      %91 = vsyncadd [#allocation11], %s90
      %s92 = sshll.u32 [#allocation12], 4
      %s93 = int_to_ptr.vmem [resolvable:$true] %s92
      %98 = dma.hbm_to_vmem [thread:$0]  %s7, 2048, %s93, [#allocation11], 64, 64, 4
    $region33: #{feature_model_forward.1} parent=1 // pred_fallthru
      _
    // Predicated region
    $region34: #{feature_model_forward.1} parent=1 // pred_check
      _
    $region35: #{feature_model_forward.1} parent=1 // pred_check_branch
      %100 = sbr.rel (0) target = $region37
    $region36: #{feature_model_forward.1} parent=1 // pred_region
      %s102 = ssub.s32 16, 16
      %103 = vsyncadd [#allocation14], %s102
      %s105 = sshll.u32 [#allocation13], 4
      %s106 = int_to_ptr.vmem [resolvable:$true] %s105
      %108 = dma.hbm_to_vmem [thread:$0]  %s8, 16, %s106, [#allocation14]
    $region37: #{feature_model_forward.1} parent=1 // pred_fallthru
      _
    // Predicated region
    $region38: #{feature_model_forward.1} parent=1 // pred_check
      _
    $region39: #{feature_model_forward.1} parent=1 // pred_check_branch
      %110 = sbr.rel (0) target = $region41
    $region40: #{feature_model_forward.1} parent=1 // pred_region
      %111 = dma.done [#allocation3], 4096
    $region41: #{feature_model_forward.1} parent=1 // pred_fallthru
      _
    // Predicated region
    $region42: #{feature_model_forward.1} parent=1 // pred_check
      _
    $region43: #{feature_model_forward.1} parent=1 // pred_check_branch
      %113 = sbr.rel (0) target = $region45
    $region44: #{feature_model_forward.1} parent=1 // pred_region
      %114 = dma.done [#allocation5], 256
    $region45: #{feature_model_forward.1} parent=1 // pred_fallthru
      _
    // Predicated region
    $region46: #{feature_model_forward.1} parent=1 // pred_check
      _
    $region47: #{feature_model_forward.1} parent=1 // pred_check_branch
      %116 = sbr.rel (0) target = $region49
    $region48: #{feature_model_forward.1} parent=1 // pred_region
      %117 = dma.done [#allocation5], 65536
    $region49: #{feature_model_forward.1} parent=1 // pred_fallthru
      _
    // Predicated region
    $region50: #{feature_model_forward.1} parent=1 // pred_check
      _
    $region51: #{feature_model_forward.1} parent=1 // pred_check_branch
      %119 = sbr.rel (0) target = $region53
    $region52: #{feature_model_forward.1} parent=1 // pred_region
      %120 = dma.done [#allocation8], 64
    $region53: #{feature_model_forward.1} parent=1 // pred_fallthru
      _
    // Predicated region
    $region54: #{feature_model_forward.1} parent=1 // pred_check
      _
    $region55: #{feature_model_forward.1} parent=1 // pred_check_branch
      %122 = sbr.rel (0) target = $region57
    $region56: #{feature_model_forward.1} parent=1 // pred_region
      %123 = dma.done [#allocation8], 8192
    $region57: #{feature_model_forward.1} parent=1 // pred_fallthru
      _
    // Predicated region
    $region58: #{feature_model_forward.1} parent=1 // pred_check
      _
    $region59: #{feature_model_forward.1} parent=1 // pred_check_branch
      %125 = sbr.rel (0) target = $region61
    $region60: #{feature_model_forward.1} parent=1 // pred_region
      %126 = dma.done [#allocation11], 32
    $region61: #{feature_model_forward.1} parent=1 // pred_fallthru
      _
    // Predicated region
    $region62: #{feature_model_forward.1} parent=1 // pred_check
      _
    $region63: #{feature_model_forward.1} parent=1 // pred_check_branch
      %128 = sbr.rel (0) target = $region65
    $region64: #{feature_model_forward.1} parent=1 // pred_region
      %129 = dma.done [#allocation11], 2048
    $region65: #{feature_model_forward.1} parent=1 // pred_fallthru
      _
    // Predicated region
    $region66: #{feature_model_forward.1} parent=1 // pred_check
      _
    $region67: #{feature_model_forward.1} parent=1 // pred_check_branch
      %131 = sbr.rel (0) target = $region69
    $region68: #{feature_model_forward.1} parent=1 // pred_region
      %132 = dma.done [#allocation14], 16
    $region69: #{feature_model_forward.1} parent=1 // pred_fallthru
      _
    %v134 = vld [vmem:[%s0] sm:$0xf]
    %v135 = vld [vmem:[%s0 + $0x4] sm:$0xf]
    %v136 = vld [vmem:[#allocation2] sm:$0xff]
    %v137 = vld [vmem:[#allocation2 + $0x8] sm:$0xff]
    %v138 = vld [vmem:[#allocation2 + $0x10] sm:$0xff]
    %v139 = vld [vmem:[#allocation2 + $0x18] sm:$0xff]
    %v140 = vld [vmem:[#allocation2 + $0x20] sm:$0xff]
    %v141 = vld [vmem:[#allocation2 + $0x28] sm:$0xff]
    %v142 = vld [vmem:[#allocation2 + $0x30] sm:$0xff]
    %v143 = vld [vmem:[#allocation2 + $0x38] sm:$0xff]
    %v144 = vld [vmem:[#allocation2 + $0x40] sm:$0xff]
    %v145 = vld [vmem:[#allocation2 + $0x48] sm:$0xff]
    %v146 = vld [vmem:[#allocation2 + $0x50] sm:$0xff]
    %v147 = vld [vmem:[#allocation2 + $0x58] sm:$0xff]
    %v148 = vld [vmem:[#allocation2 + $0x60] sm:$0xff]
    %v149 = vld [vmem:[#allocation2 + $0x68] sm:$0xff]
    %v150 = vld [vmem:[#allocation2 + $0x70] sm:$0xff]
    %v151 = vld [vmem:[#allocation2 + $0x78] sm:$0xff]
    %v152 = vld [vmem:[#allocation2 + $0x80] sm:$0xff]
    %v153 = vld [vmem:[#allocation2 + $0x88] sm:$0xff]
    %v154 = vld [vmem:[#allocation2 + $0x90] sm:$0xff]
    %v155 = vld [vmem:[#allocation2 + $0x98] sm:$0xff]
    %v156 = vld [vmem:[#allocation2 + $0xa0] sm:$0xff]
    %v157 = vld [vmem:[#allocation2 + $0xa8] sm:$0xff]
    %v158 = vld [vmem:[#allocation2 + $0xb0] sm:$0xff]
    %v159 = vld [vmem:[#allocation2 + $0xb8] sm:$0xff]
    %v160 = vld [vmem:[#allocation2 + $0xc0] sm:$0xff]
    %v161 = vld [vmem:[#allocation2 + $0xc8] sm:$0xff]
    %v162 = vld [vmem:[#allocation2 + $0xd0] sm:$0xff]
    %v163 = vld [vmem:[#allocation2 + $0xd8] sm:$0xff]
    %v164 = vld [vmem:[#allocation2 + $0xe0] sm:$0xff]
    %v165 = vld [vmem:[#allocation2 + $0xe8] sm:$0xff]
    %v166 = vld [vmem:[#allocation2 + $0xf0] sm:$0xff]
    %v167 = vld [vmem:[#allocation2 + $0xf8] sm:$0xff]
    %v168 = vld [vmem:[#allocation4] sm:$0xff]
    %v169 = vld [vmem:[#allocation4 + $0x8] sm:$0xff]
    %v172 = vlaneseq
    %v173 = vshrl.u32 %v172, 7
    %v174 = vsub.s32 0, %v173
    %v175 = vrot.slane %v168, %v174
    %v176 = vlaneseq
    %v177 = vshrl.u32 %v176, 7
    %v178 = vsub.s32 1, %v177
    %v179 = vrot.slane %v168, %v178
    %v180 = vlaneseq
    %v181 = vshrl.u32 %v180, 7
    %v182 = vsub.s32 2, %v181
    %v183 = vrot.slane %v168, %v182
    %v184 = vlaneseq
    %v185 = vshrl.u32 %v184, 7
    %v186 = vsub.s32 3, %v185
    %v187 = vrot.slane %v168, %v186
    %v188 = vlaneseq
    %v189 = vshrl.u32 %v188, 7
    %v190 = vsub.s32 4, %v189
    %v191 = vrot.slane %v168, %v190
    %v192 = vlaneseq
    %v193 = vshrl.u32 %v192, 7
    %v194 = vsub.s32 5, %v193
    %v195 = vrot.slane %v168, %v194
    %v196 = vlaneseq
    %v197 = vshrl.u32 %v196, 7
    %v198 = vsub.s32 6, %v197
    %v199 = vrot.slane %v168, %v198
    %v200 = vlaneseq
    %v201 = vshrl.u32 %v200, 7
    %v202 = vsub.s32 7, %v201
    %v203 = vrot.slane %v168, %v202
    %v204 = vlaneseq
    %v205 = vshrl.u32 %v204, 7
    %v206 = vsub.s32 0, %v205
    %v207 = vrot.slane %v169, %v206
    %v208 = vlaneseq
    %v209 = vshrl.u32 %v208, 7
    %v210 = vsub.s32 1, %v209
    %v211 = vrot.slane %v169, %v210
    %v212 = vlaneseq
    %v213 = vshrl.u32 %v212, 7
    %v214 = vsub.s32 2, %v213
    %v215 = vrot.slane %v169, %v214
    %v216 = vlaneseq
    %v217 = vshrl.u32 %v216, 7
    %v218 = vsub.s32 3, %v217
    %v219 = vrot.slane %v169, %v218
    %v220 = vlaneseq
    %v221 = vshrl.u32 %v220, 7
    %v222 = vsub.s32 4, %v221
    %v223 = vrot.slane %v169, %v222
    %v224 = vlaneseq
    %v225 = vshrl.u32 %v224, 7
    %v226 = vsub.s32 5, %v225
    %v227 = vrot.slane %v169, %v226
    %v228 = vlaneseq
    %v229 = vshrl.u32 %v228, 7
    %v230 = vsub.s32 6, %v229
    %v231 = vrot.slane %v169, %v230
    %v232 = vlaneseq
    %v233 = vshrl.u32 %v232, 7
    %v234 = vsub.s32 7, %v233
    %v235 = vrot.slane %v169, %v234
    %v254 = vunpack.c.l.b16 %v134
    %v255 = vunpack.c.l.b16 %v135
    %v256 = vpack.c.b16 %v255, %v254
    %v289 = vunpack.c.l.b16 %v136
    %v290 = vunpack.c.h.b16 %v136
    %v291 = vunpack.c.l.b16 %v137
    %v292 = vunpack.c.h.b16 %v137
    %v293 = vunpack.c.l.b16 %v138
    %v294 = vunpack.c.h.b16 %v138
    %v295 = vunpack.c.l.b16 %v139
    %v296 = vunpack.c.h.b16 %v139
    %v297 = vunpack.c.l.b16 %v140
    %v298 = vunpack.c.h.b16 %v140
    %v299 = vunpack.c.l.b16 %v141
    %v300 = vunpack.c.h.b16 %v141
    %v301 = vunpack.c.l.b16 %v142
    %v302 = vunpack.c.h.b16 %v142
    %v303 = vunpack.c.l.b16 %v143
    %v304 = vunpack.c.h.b16 %v143
    %v305 = vunpack.c.l.b16 %v144
    %v306 = vunpack.c.h.b16 %v144
    %v307 = vunpack.c.l.b16 %v145
    %v308 = vunpack.c.h.b16 %v145
    %v309 = vunpack.c.l.b16 %v146
    %v310 = vunpack.c.h.b16 %v146
    %v311 = vunpack.c.l.b16 %v147
    %v312 = vunpack.c.h.b16 %v147
    %v313 = vunpack.c.l.b16 %v148
    %v314 = vunpack.c.h.b16 %v148
    %v315 = vunpack.c.l.b16 %v149
    %v316 = vunpack.c.h.b16 %v149
    %v317 = vunpack.c.l.b16 %v150
    %v318 = vunpack.c.h.b16 %v150
    %v319 = vunpack.c.l.b16 %v151
    %v320 = vunpack.c.h.b16 %v151
    %v321 = vunpack.c.l.b16 %v152
    %v322 = vunpack.c.h.b16 %v152
    %v323 = vunpack.c.l.b16 %v153
    %v324 = vunpack.c.h.b16 %v153
    %v325 = vunpack.c.l.b16 %v154
    %v326 = vunpack.c.h.b16 %v154
    %v327 = vunpack.c.l.b16 %v155
    %v328 = vunpack.c.h.b16 %v155
    %v329 = vunpack.c.l.b16 %v156
    %v330 = vunpack.c.h.b16 %v156
    %v331 = vunpack.c.l.b16 %v157
    %v332 = vunpack.c.h.b16 %v157
    %v333 = vunpack.c.l.b16 %v158
    %v334 = vunpack.c.h.b16 %v158
    %v335 = vunpack.c.l.b16 %v159
    %v336 = vunpack.c.h.b16 %v159
    %v337 = vunpack.c.l.b16 %v160
    %v338 = vunpack.c.h.b16 %v160
    %v339 = vunpack.c.l.b16 %v161
    %v340 = vunpack.c.h.b16 %v161
    %v341 = vunpack.c.l.b16 %v162
    %v342 = vunpack.c.h.b16 %v162
    %v343 = vunpack.c.l.b16 %v163
    %v344 = vunpack.c.h.b16 %v163
    %v345 = vunpack.c.l.b16 %v164
    %v346 = vunpack.c.h.b16 %v164
    %v347 = vunpack.c.l.b16 %v165
    %v348 = vunpack.c.h.b16 %v165
    %v349 = vunpack.c.l.b16 %v166
    %v350 = vunpack.c.h.b16 %v166
    %v351 = vunpack.c.l.b16 %v167
    %v352 = vunpack.c.h.b16 %v167
    %v353 = vpack.c.b16 %v305, %v289
    %v354 = vpack.c.b16 %v306, %v290
    %v355 = vpack.c.b16 %v307, %v291
    %v356 = vpack.c.b16 %v308, %v292
    %v357 = vpack.c.b16 %v309, %v293
    %v358 = vpack.c.b16 %v310, %v294
    %v359 = vpack.c.b16 %v311, %v295
    %v360 = vpack.c.b16 %v312, %v296
    %v361 = vpack.c.b16 %v313, %v297
    %v362 = vpack.c.b16 %v314, %v298
    %v363 = vpack.c.b16 %v315, %v299
    %v364 = vpack.c.b16 %v316, %v300
    %v365 = vpack.c.b16 %v317, %v301
    %v366 = vpack.c.b16 %v318, %v302
    %v367 = vpack.c.b16 %v319, %v303
    %v368 = vpack.c.b16 %v320, %v304
    %v369 = vpack.c.b16 %v337, %v321
    %v370 = vpack.c.b16 %v338, %v322
    %v371 = vpack.c.b16 %v339, %v323
    %v372 = vpack.c.b16 %v340, %v324
    %v373 = vpack.c.b16 %v341, %v325
    %v374 = vpack.c.b16 %v342, %v326
    %v375 = vpack.c.b16 %v343, %v327
    %v376 = vpack.c.b16 %v344, %v328
    %v377 = vpack.c.b16 %v345, %v329
    %v378 = vpack.c.b16 %v346, %v330
    %v379 = vpack.c.b16 %v347, %v331
    %v380 = vpack.c.b16 %v348, %v332
    %v381 = vpack.c.b16 %v349, %v333
    %v382 = vpack.c.b16 %v350, %v334
    %v383 = vpack.c.b16 %v351, %v335
    %v384 = vpack.c.b16 %v352, %v336
    %vm417 = vcmask 261120
    %v419 = vsel %vm417, %v256, 0
    %421 = vmatprep.subr.bf16.mxu0 %v354
    %422 = vmatpush1.bf16.msra.mxu0 %v353
    %423 = vmatprep.subr.bf16.mxu0 %v370
    %424 = vmatpush1.bf16.msra.mxu0 %v369
    %425 = vmatprep.subr.bf16.mxu0 0
    %426 = vmatpush1.bf16.msra.mxu0 0
    %427 = vmatprep.subr.bf16.mxu0 0
    %428 = vmatpush1.bf16.msra.mxu0 0
    %429 = vmatprep.subr.bf16.mxu0 0
    %430 = vmatpush1.bf16.msra.mxu0 0
    %431 = vmatprep.subr.bf16.mxu0 0
    %432 = vmatpush1.bf16.msra.mxu0 0
    %433 = vmatprep.subr.bf16.mxu0 0
    %434 = vmatpush1.bf16.msra.mxu0 0
    %435 = vmatprep.subr.bf16.mxu0 0
    %436 = vmatpush1.bf16.msra.mxu0 0
    %437 = vmatprep.subr.bf16.mxu0 0
    %438 = vmatpush1.bf16.msra.mxu0 0
    %439 = vmatprep.subr.bf16.mxu0 0
    %440 = vmatpush1.bf16.msra.mxu0 0
    %441 = vmatprep.subr.bf16.mxu0 0
    %442 = vmatpush1.bf16.msra.mxu0 0
    %443 = vmatprep.subr.bf16.mxu0 0
    %444 = vmatpush1.bf16.msra.mxu0 0
    %445 = vmatprep.subr.bf16.mxu0 0
    %446 = vmatpush1.bf16.msra.mxu0 0
    %447 = vmatprep.subr.bf16.mxu0 0
    %448 = vmatpush1.bf16.msra.mxu0 0
    %449 = vmatprep.subr.bf16.mxu0 0
    %450 = vmatpush1.bf16.msra.mxu0 0
    %451 = vmatprep.subr.bf16.mxu0 0
    %452 = vmatpush1.bf16.msra.mxu0 0
    %453 = vmatprep.mubr.bf16.mxu0 0
    %454 = vmatmul.mubr.bf16.gmra.mrb[0].mxu0 %v419
    %v455 = vpop.f32.mrb[0].mxu0
    %v456 = vadd.f32 %v175, %v455
    %v457 = vpop.f32.mrb[0].mxu0
    %v458 = vadd.f32 %v179, %v457
    %v459 = vpop.f32.mrb[0].mxu0
    %v460 = vadd.f32 %v175, %v459
    %v461 = vpop.f32.mrb[0].mxu0
    %v462 = vadd.f32 %v179, %v461
    %463 = vdwg.mxu0
    %464 = vmatprep.subr.bf16.mxu0 %v356
    %465 = vmatpush1.bf16.msra.mxu0 %v355
    %466 = vmatprep.subr.bf16.mxu0 %v372
    %467 = vmatpush1.bf16.msra.mxu0 %v371
    %468 = vmatprep.subr.bf16.mxu0 0
    %469 = vmatpush1.bf16.msra.mxu0 0
    %470 = vmatprep.subr.bf16.mxu0 0
    %471 = vmatpush1.bf16.msra.mxu0 0
    %472 = vmatprep.subr.bf16.mxu0 0
    %473 = vmatpush1.bf16.msra.mxu0 0
    %474 = vmatprep.subr.bf16.mxu0 0
    %475 = vmatpush1.bf16.msra.mxu0 0
    %476 = vmatprep.subr.bf16.mxu0 0
    %477 = vmatpush1.bf16.msra.mxu0 0
    %478 = vmatprep.subr.bf16.mxu0 0
    %479 = vmatpush1.bf16.msra.mxu0 0
    %480 = vmatprep.subr.bf16.mxu0 0
    %481 = vmatpush1.bf16.msra.mxu0 0
    %482 = vmatprep.subr.bf16.mxu0 0
    %483 = vmatpush1.bf16.msra.mxu0 0
    %484 = vmatprep.subr.bf16.mxu0 0
    %485 = vmatpush1.bf16.msra.mxu0 0
    %486 = vmatprep.subr.bf16.mxu0 0
    %487 = vmatpush1.bf16.msra.mxu0 0
    %488 = vmatprep.subr.bf16.mxu0 0
    %489 = vmatpush1.bf16.msra.mxu0 0
    %490 = vmatprep.subr.bf16.mxu0 0
    %491 = vmatpush1.bf16.msra.mxu0 0
    %492 = vmatprep.subr.bf16.mxu0 0
    %493 = vmatpush1.bf16.msra.mxu0 0
    %494 = vmatprep.subr.bf16.mxu0 0
    %495 = vmatpush1.bf16.msra.mxu0 0
    %496 = vmatprep.mubr.bf16.mxu0 0
    %497 = vmatmul.mubr.bf16.gmra.mrb[0].mxu0 %v419
    %v498 = vpop.f32.mrb[0].mxu0
    %v499 = vadd.f32 %v183, %v498
    %v500 = vpop.f32.mrb[0].mxu0
    %v501 = vadd.f32 %v187, %v500
    %v502 = vpop.f32.mrb[0].mxu0
    %v503 = vadd.f32 %v183, %v502
    %v504 = vpop.f32.mrb[0].mxu0
    %v505 = vadd.f32 %v187, %v504
    %506 = vdwg.mxu0
    %507 = vmatprep.subr.bf16.mxu0 %v358
    %508 = vmatpush1.bf16.msra.mxu0 %v357
    %509 = vmatprep.subr.bf16.mxu0 %v374
    %510 = vmatpush1.bf16.msra.mxu0 %v373
    %511 = vmatprep.subr.bf16.mxu0 0
    %512 = vmatpush1.bf16.msra.mxu0 0
    %513 = vmatprep.subr.bf16.mxu0 0
    %514 = vmatpush1.bf16.msra.mxu0 0
    %515 = vmatprep.subr.bf16.mxu0 0
    %516 = vmatpush1.bf16.msra.mxu0 0
    %517 = vmatprep.subr.bf16.mxu0 0
    %518 = vmatpush1.bf16.msra.mxu0 0
    %519 = vmatprep.subr.bf16.mxu0 0
    %520 = vmatpush1.bf16.msra.mxu0 0
    %521 = vmatprep.subr.bf16.mxu0 0
    %522 = vmatpush1.bf16.msra.mxu0 0
    %523 = vmatprep.subr.bf16.mxu0 0
    %524 = vmatpush1.bf16.msra.mxu0 0
    %525 = vmatprep.subr.bf16.mxu0 0
    %526 = vmatpush1.bf16.msra.mxu0 0
    %527 = vmatprep.subr.bf16.mxu0 0
    %528 = vmatpush1.bf16.msra.mxu0 0
    %529 = vmatprep.subr.bf16.mxu0 0
    %530 = vmatpush1.bf16.msra.mxu0 0
    %531 = vmatprep.subr.bf16.mxu0 0
    %532 = vmatpush1.bf16.msra.mxu0 0
    %533 = vmatprep.subr.bf16.mxu0 0
    %534 = vmatpush1.bf16.msra.mxu0 0
    %535 = vmatprep.subr.bf16.mxu0 0
    %536 = vmatpush1.bf16.msra.mxu0 0
    %537 = vmatprep.subr.bf16.mxu0 0
    %538 = vmatpush1.bf16.msra.mxu0 0
    %539 = vmatprep.mubr.bf16.mxu0 0
    %540 = vmatmul.mubr.bf16.gmra.mrb[0].mxu0 %v419
    %v541 = vpop.f32.mrb[0].mxu0
    %v542 = vadd.f32 %v191, %v541
    %v543 = vpop.f32.mrb[0].mxu0
    %v544 = vadd.f32 %v195, %v543
    %v545 = vpop.f32.mrb[0].mxu0
    %v546 = vadd.f32 %v191, %v545
    %v547 = vpop.f32.mrb[0].mxu0
    %v548 = vadd.f32 %v195, %v547
    %549 = vdwg.mxu0
    %550 = vmatprep.subr.bf16.mxu0 %v360
    %551 = vmatpush1.bf16.msra.mxu0 %v359
    %552 = vmatprep.subr.bf16.mxu0 %v376
    %553 = vmatpush1.bf16.msra.mxu0 %v375
    %554 = vmatprep.subr.bf16.mxu0 0
    %555 = vmatpush1.bf16.msra.mxu0 0
    %556 = vmatprep.subr.bf16.mxu0 0
    %557 = vmatpush1.bf16.msra.mxu0 0
    %558 = vmatprep.subr.bf16.mxu0 0
    %559 = vmatpush1.bf16.msra.mxu0 0
    %560 = vmatprep.subr.bf16.mxu0 0
    %561 = vmatpush1.bf16.msra.mxu0 0
    %562 = vmatprep.subr.bf16.mxu0 0
    %563 = vmatpush1.bf16.msra.mxu0 0
    %564 = vmatprep.subr.bf16.mxu0 0
    %565 = vmatpush1.bf16.msra.mxu0 0
    %566 = vmatprep.subr.bf16.mxu0 0
    %567 = vmatpush1.bf16.msra.mxu0 0
    %568 = vmatprep.subr.bf16.mxu0 0
    %569 = vmatpush1.bf16.msra.mxu0 0
    %570 = vmatprep.subr.bf16.mxu0 0
    %571 = vmatpush1.bf16.msra.mxu0 0
    %572 = vmatprep.subr.bf16.mxu0 0
    %573 = vmatpush1.bf16.msra.mxu0 0
    %574 = vmatprep.subr.bf16.mxu0 0
    %575 = vmatpush1.bf16.msra.mxu0 0
    %576 = vmatprep.subr.bf16.mxu0 0
    %577 = vmatpush1.bf16.msra.mxu0 0
    %578 = vmatprep.subr.bf16.mxu0 0
    %579 = vmatpush1.bf16.msra.mxu0 0
    %580 = vmatprep.subr.bf16.mxu0 0
    %581 = vmatpush1.bf16.msra.mxu0 0
    %582 = vmatprep.mubr.bf16.mxu0 0
    %583 = vmatmul.mubr.bf16.gmra.mrb[0].mxu0 %v419
    %v584 = vpop.f32.mrb[0].mxu0
    %v585 = vadd.f32 %v199, %v584
    %v586 = vpop.f32.mrb[0].mxu0
    %v587 = vadd.f32 %v203, %v586
    %v588 = vpop.f32.mrb[0].mxu0
    %v589 = vadd.f32 %v199, %v588
    %v590 = vpop.f32.mrb[0].mxu0
    %v591 = vadd.f32 %v203, %v590
    %592 = vdwg.mxu0
    %593 = vmatprep.subr.bf16.mxu0 %v362
    %594 = vmatpush1.bf16.msra.mxu0 %v361
    %595 = vmatprep.subr.bf16.mxu0 %v378
    %596 = vmatpush1.bf16.msra.mxu0 %v377
    %597 = vmatprep.subr.bf16.mxu0 0
    %598 = vmatpush1.bf16.msra.mxu0 0
    %599 = vmatprep.subr.bf16.mxu0 0
    %600 = vmatpush1.bf16.msra.mxu0 0
    %601 = vmatprep.subr.bf16.mxu0 0
    %602 = vmatpush1.bf16.msra.mxu0 0
    %603 = vmatprep.subr.bf16.mxu0 0
    %604 = vmatpush1.bf16.msra.mxu0 0
    %605 = vmatprep.subr.bf16.mxu0 0
    %606 = vmatpush1.bf16.msra.mxu0 0
    %607 = vmatprep.subr.bf16.mxu0 0
    %608 = vmatpush1.bf16.msra.mxu0 0
    %609 = vmatprep.subr.bf16.mxu0 0
    %610 = vmatpush1.bf16.msra.mxu0 0
    %611 = vmatprep.subr.bf16.mxu0 0
    %612 = vmatpush1.bf16.msra.mxu0 0
    %613 = vmatprep.subr.bf16.mxu0 0
    %614 = vmatpush1.bf16.msra.mxu0 0
    %615 = vmatprep.subr.bf16.mxu0 0
    %616 = vmatpush1.bf16.msra.mxu0 0
    %617 = vmatprep.subr.bf16.mxu0 0
    %618 = vmatpush1.bf16.msra.mxu0 0
    %619 = vmatprep.subr.bf16.mxu0 0
    %620 = vmatpush1.bf16.msra.mxu0 0
    %621 = vmatprep.subr.bf16.mxu0 0
    %622 = vmatpush1.bf16.msra.mxu0 0
    %623 = vmatprep.subr.bf16.mxu0 0
    %624 = vmatpush1.bf16.msra.mxu0 0
    %625 = vmatprep.mubr.bf16.mxu0 0
    %626 = vmatmul.mubr.bf16.gmra.mrb[0].mxu0 %v419
    %v627 = vpop.f32.mrb[0].mxu0
    %v628 = vadd.f32 %v207, %v627
    %v629 = vpop.f32.mrb[0].mxu0
    %v630 = vadd.f32 %v211, %v629
    %v631 = vpop.f32.mrb[0].mxu0
    %v632 = vadd.f32 %v207, %v631
    %v633 = vpop.f32.mrb[0].mxu0
    %v634 = vadd.f32 %v211, %v633
    %635 = vdwg.mxu0
    %636 = vmatprep.subr.bf16.mxu0 %v364
    %637 = vmatpush1.bf16.msra.mxu0 %v363
    %638 = vmatprep.subr.bf16.mxu0 %v380
    %639 = vmatpush1.bf16.msra.mxu0 %v379
    %640 = vmatprep.subr.bf16.mxu0 0
    %641 = vmatpush1.bf16.msra.mxu0 0
    %642 = vmatprep.subr.bf16.mxu0 0
    %643 = vmatpush1.bf16.msra.mxu0 0
    %644 = vmatprep.subr.bf16.mxu0 0
    %645 = vmatpush1.bf16.msra.mxu0 0
    %646 = vmatprep.subr.bf16.mxu0 0
    %647 = vmatpush1.bf16.msra.mxu0 0
    %648 = vmatprep.subr.bf16.mxu0 0
    %649 = vmatpush1.bf16.msra.mxu0 0
    %650 = vmatprep.subr.bf16.mxu0 0
    %651 = vmatpush1.bf16.msra.mxu0 0
    %652 = vmatprep.subr.bf16.mxu0 0
    %653 = vmatpush1.bf16.msra.mxu0 0
    %654 = vmatprep.subr.bf16.mxu0 0
    %655 = vmatpush1.bf16.msra.mxu0 0
    %656 = vmatprep.subr.bf16.mxu0 0
    %657 = vmatpush1.bf16.msra.mxu0 0
    %658 = vmatprep.subr.bf16.mxu0 0
    %659 = vmatpush1.bf16.msra.mxu0 0
    %660 = vmatprep.subr.bf16.mxu0 0
    %661 = vmatpush1.bf16.msra.mxu0 0
    %662 = vmatprep.subr.bf16.mxu0 0
    %663 = vmatpush1.bf16.msra.mxu0 0
    %664 = vmatprep.subr.bf16.mxu0 0
    %665 = vmatpush1.bf16.msra.mxu0 0
    %666 = vmatprep.subr.bf16.mxu0 0
    %667 = vmatpush1.bf16.msra.mxu0 0
    %668 = vmatprep.mubr.bf16.mxu0 0
    %669 = vmatmul.mubr.bf16.gmra.mrb[0].mxu0 %v419
    %v670 = vpop.f32.mrb[0].mxu0
    %v671 = vadd.f32 %v215, %v670
    %v672 = vpop.f32.mrb[0].mxu0
    %v673 = vadd.f32 %v219, %v672
    %v674 = vpop.f32.mrb[0].mxu0
    %v675 = vadd.f32 %v215, %v674
    %v676 = vpop.f32.mrb[0].mxu0
    %v677 = vadd.f32 %v219, %v676
    %678 = vdwg.mxu0
    %679 = vmatprep.subr.bf16.mxu0 %v366
    %680 = vmatpush1.bf16.msra.mxu0 %v365
    %681 = vmatprep.subr.bf16.mxu0 %v382
    %682 = vmatpush1.bf16.msra.mxu0 %v381
    %683 = vmatprep.subr.bf16.mxu0 0
    %684 = vmatpush1.bf16.msra.mxu0 0
    %685 = vmatprep.subr.bf16.mxu0 0
    %686 = vmatpush1.bf16.msra.mxu0 0
    %687 = vmatprep.subr.bf16.mxu0 0
    %688 = vmatpush1.bf16.msra.mxu0 0
    %689 = vmatprep.subr.bf16.mxu0 0
    %690 = vmatpush1.bf16.msra.mxu0 0
    %691 = vmatprep.subr.bf16.mxu0 0
    %692 = vmatpush1.bf16.msra.mxu0 0
    %693 = vmatprep.subr.bf16.mxu0 0
    %694 = vmatpush1.bf16.msra.mxu0 0
    %695 = vmatprep.subr.bf16.mxu0 0
    %696 = vmatpush1.bf16.msra.mxu0 0
    %697 = vmatprep.subr.bf16.mxu0 0
    %698 = vmatpush1.bf16.msra.mxu0 0
    %699 = vmatprep.subr.bf16.mxu0 0
    %700 = vmatpush1.bf16.msra.mxu0 0
    %701 = vmatprep.subr.bf16.mxu0 0
    %702 = vmatpush1.bf16.msra.mxu0 0
    %703 = vmatprep.subr.bf16.mxu0 0
    %704 = vmatpush1.bf16.msra.mxu0 0
    %705 = vmatprep.subr.bf16.mxu0 0
    %706 = vmatpush1.bf16.msra.mxu0 0
    %707 = vmatprep.subr.bf16.mxu0 0
    %708 = vmatpush1.bf16.msra.mxu0 0
    %709 = vmatprep.subr.bf16.mxu0 0
    %710 = vmatpush1.bf16.msra.mxu0 0
    %711 = vmatprep.mubr.bf16.mxu0 0
    %712 = vmatmul.mubr.bf16.gmra.mrb[0].mxu0 %v419
    %v713 = vpop.f32.mrb[0].mxu0
    %v714 = vadd.f32 %v223, %v713
    %v715 = vpop.f32.mrb[0].mxu0
    %v716 = vadd.f32 %v227, %v715
    %v717 = vpop.f32.mrb[0].mxu0
    %v718 = vadd.f32 %v223, %v717
    %v719 = vpop.f32.mrb[0].mxu0
    %v720 = vadd.f32 %v227, %v719
    %721 = vdwg.mxu0
    %722 = vmatprep.subr.bf16.mxu0 %v368
    %723 = vmatpush1.bf16.msra.mxu0 %v367
    %724 = vmatprep.subr.bf16.mxu0 %v384
    %725 = vmatpush1.bf16.msra.mxu0 %v383
    %726 = vmatprep.subr.bf16.mxu0 0
    %727 = vmatpush1.bf16.msra.mxu0 0
    %728 = vmatprep.subr.bf16.mxu0 0
    %729 = vmatpush1.bf16.msra.mxu0 0
    %730 = vmatprep.subr.bf16.mxu0 0
    %731 = vmatpush1.bf16.msra.mxu0 0
    %732 = vmatprep.subr.bf16.mxu0 0
    %733 = vmatpush1.bf16.msra.mxu0 0
    %734 = vmatprep.subr.bf16.mxu0 0
    %735 = vmatpush1.bf16.msra.mxu0 0
    %736 = vmatprep.subr.bf16.mxu0 0
    %737 = vmatpush1.bf16.msra.mxu0 0
    %738 = vmatprep.subr.bf16.mxu0 0
    %739 = vmatpush1.bf16.msra.mxu0 0
    %740 = vmatprep.subr.bf16.mxu0 0
    %741 = vmatpush1.bf16.msra.mxu0 0
    %742 = vmatprep.subr.bf16.mxu0 0
    %743 = vmatpush1.bf16.msra.mxu0 0
    %744 = vmatprep.subr.bf16.mxu0 0
    %745 = vmatpush1.bf16.msra.mxu0 0
    %746 = vmatprep.subr.bf16.mxu0 0
    %747 = vmatpush1.bf16.msra.mxu0 0
    %748 = vmatprep.subr.bf16.mxu0 0
    %749 = vmatpush1.bf16.msra.mxu0 0
    %750 = vmatprep.subr.bf16.mxu0 0
    %751 = vmatpush1.bf16.msra.mxu0 0
    %752 = vmatprep.subr.bf16.mxu0 0
    %753 = vmatpush1.bf16.msra.mxu0 0
    %754 = vmatprep.mubr.bf16.mxu0 0
    %755 = vmatmul.mubr.bf16.gmra.mrb[0].mxu0 %v419
    %v756 = vpop.f32.mrb[0].mxu0
    %v757 = vadd.f32 %v231, %v756
    %v758 = vpop.f32.mrb[0].mxu0
    %v759 = vadd.f32 %v235, %v758
    %v760 = vpop.f32.mrb[0].mxu0
    %v761 = vadd.f32 %v231, %v760
    %v762 = vpop.f32.mrb[0].mxu0
    %v763 = vadd.f32 %v235, %v762
    %764 = vdwg.mxu0
    %v765 = vmax.f32 %v456, 0.0
    %v766 = vmax.f32 %v458, 0.0
    %v767 = vmax.f32 %v499, 0.0
    %v768 = vmax.f32 %v501, 0.0
    %v769 = vmax.f32 %v542, 0.0
    %v770 = vmax.f32 %v544, 0.0
    %v771 = vmax.f32 %v585, 0.0
    %v772 = vmax.f32 %v587, 0.0
    %v773 = vmax.f32 %v628, 0.0
    %v774 = vmax.f32 %v630, 0.0
    %v775 = vmax.f32 %v671, 0.0
    %v776 = vmax.f32 %v673, 0.0
    %v777 = vmax.f32 %v714, 0.0
    %v778 = vmax.f32 %v716, 0.0
    %v779 = vmax.f32 %v757, 0.0
    %v780 = vmax.f32 %v759, 0.0
    %v781 = vmax.f32 %v460, 0.0
    %v782 = vmax.f32 %v462, 0.0
    %v783 = vmax.f32 %v503, 0.0
    %v784 = vmax.f32 %v505, 0.0
    %v785 = vmax.f32 %v546, 0.0
    %v786 = vmax.f32 %v548, 0.0
    %v787 = vmax.f32 %v589, 0.0
    %v788 = vmax.f32 %v591, 0.0
    %v789 = vmax.f32 %v632, 0.0
    %v790 = vmax.f32 %v634, 0.0
    %v791 = vmax.f32 %v675, 0.0
    %v792 = vmax.f32 %v677, 0.0
    %v793 = vmax.f32 %v718, 0.0
    %v794 = vmax.f32 %v720, 0.0
    %v795 = vmax.f32 %v761, 0.0
    %v796 = vmax.f32 %v763, 0.0
    %v797 = vpack.c.bf16 %v781, %v765
    %v798 = vpack.c.bf16 %v782, %v766
    %v799 = vpack.c.bf16 %v783, %v767
    %v800 = vpack.c.bf16 %v784, %v768
    %v801 = vpack.c.bf16 %v785, %v769
    %v802 = vpack.c.bf16 %v786, %v770
    %v803 = vpack.c.bf16 %v787, %v771
    %v804 = vpack.c.bf16 %v788, %v772
    %v805 = vpack.c.bf16 %v789, %v773
    %v806 = vpack.c.bf16 %v790, %v774
    %v807 = vpack.c.bf16 %v791, %v775
    %v808 = vpack.c.bf16 %v792, %v776
    %v809 = vpack.c.bf16 %v793, %v777
    %v810 = vpack.c.bf16 %v794, %v778
    %v811 = vpack.c.bf16 %v795, %v779
    %v812 = vpack.c.bf16 %v796, %v780
    %v813 = vld [vmem:[#allocation6] sm:$0xff]
    %v814 = vld [vmem:[#allocation6 + $0x8] sm:$0xff]
    %v815 = vld [vmem:[#allocation6 + $0x10] sm:$0xff]
    %v816 = vld [vmem:[#allocation6 + $0x18] sm:$0xff]
    %v817 = vld [vmem:[#allocation6 + $0x20] sm:$0xff]
    %v818 = vld [vmem:[#allocation6 + $0x28] sm:$0xff]
    %v819 = vld [vmem:[#allocation6 + $0x30] sm:$0xff]
    %v820 = vld [vmem:[#allocation6 + $0x38] sm:$0xff]
    %v821 = vld [vmem:[#allocation6 + $0x40] sm:$0xff]
    %v822 = vld [vmem:[#allocation6 + $0x48] sm:$0xff]
    %v823 = vld [vmem:[#allocation6 + $0x50] sm:$0xff]
    %v824 = vld [vmem:[#allocation6 + $0x58] sm:$0xff]
    %v825 = vld [vmem:[#allocation6 + $0x60] sm:$0xff]
    %v826 = vld [vmem:[#allocation6 + $0x68] sm:$0xff]
    %v827 = vld [vmem:[#allocation6 + $0x70] sm:$0xff]
    %v828 = vld [vmem:[#allocation6 + $0x78] sm:$0xff]
    %v829 = vld [vmem:[#allocation6 + $0x80] sm:$0xff]
    %v830 = vld [vmem:[#allocation6 + $0x88] sm:$0xff]
    %v831 = vld [vmem:[#allocation6 + $0x90] sm:$0xff]
    %v832 = vld [vmem:[#allocation6 + $0x98] sm:$0xff]
    %v833 = vld [vmem:[#allocation6 + $0xa0] sm:$0xff]
    %v834 = vld [vmem:[#allocation6 + $0xa8] sm:$0xff]
    %v835 = vld [vmem:[#allocation6 + $0xb0] sm:$0xff]
    %v836 = vld [vmem:[#allocation6 + $0xb8] sm:$0xff]
    %v837 = vld [vmem:[#allocation6 + $0xc0] sm:$0xff]
    %v838 = vld [vmem:[#allocation6 + $0xc8] sm:$0xff]
    %v839 = vld [vmem:[#allocation6 + $0xd0] sm:$0xff]
    %v840 = vld [vmem:[#allocation6 + $0xd8] sm:$0xff]
    %v841 = vld [vmem:[#allocation6 + $0xe0] sm:$0xff]
    %v842 = vld [vmem:[#allocation6 + $0xe8] sm:$0xff]
    %v843 = vld [vmem:[#allocation6 + $0xf0] sm:$0xff]
    %v844 = vld [vmem:[#allocation6 + $0xf8] sm:$0xff]
    %v845 = vld [vmem:[#allocation6 + $0x100] sm:$0xff]
    %v846 = vld [vmem:[#allocation6 + $0x108] sm:$0xff]
    %v847 = vld [vmem:[#allocation6 + $0x110] sm:$0xff]
    %v848 = vld [vmem:[#allocation6 + $0x118] sm:$0xff]
    %v849 = vld [vmem:[#allocation6 + $0x120] sm:$0xff]
    %v850 = vld [vmem:[#allocation6 + $0x128] sm:$0xff]
    %v851 = vld [vmem:[#allocation6 + $0x130] sm:$0xff]
    %v852 = vld [vmem:[#allocation6 + $0x138] sm:$0xff]
    %v853 = vld [vmem:[#allocation6 + $0x140] sm:$0xff]
    %v854 = vld [vmem:[#allocation6 + $0x148] sm:$0xff]
    %v855 = vld [vmem:[#allocation6 + $0x150] sm:$0xff]
    %v856 = vld [vmem:[#allocation6 + $0x158] sm:$0xff]
    %v857 = vld [vmem:[#allocation6 + $0x160] sm:$0xff]
    %v858 = vld [vmem:[#allocation6 + $0x168] sm:$0xff]
    %v859 = vld [vmem:[#allocation6 + $0x170] sm:$0xff]
    %v860 = vld [vmem:[#allocation6 + $0x178] sm:$0xff]
    %v861 = vld [vmem:[#allocation6 + $0x180] sm:$0xff]
    %v862 = vld [vmem:[#allocation6 + $0x188] sm:$0xff]
    %v863 = vld [vmem:[#allocation6 + $0x190] sm:$0xff]
    %v864 = vld [vmem:[#allocation6 + $0x198] sm:$0xff]
    %v865 = vld [vmem:[#allocation6 + $0x1a0] sm:$0xff]
    %v866 = vld [vmem:[#allocation6 + $0x1a8] sm:$0xff]
    %v867 = vld [vmem:[#allocation6 + $0x1b0] sm:$0xff]
    %v868 = vld [vmem:[#allocation6 + $0x1b8] sm:$0xff]
    %v869 = vld [vmem:[#allocation6 + $0x1c0] sm:$0xff]
    %v870 = vld [vmem:[#allocation6 + $0x1c8] sm:$0xff]
    %v871 = vld [vmem:[#allocation6 + $0x1d0] sm:$0xff]
    %v872 = vld [vmem:[#allocation6 + $0x1d8] sm:$0xff]
    %v873 = vld [vmem:[#allocation6 + $0x1e0] sm:$0xff]
    %v874 = vld [vmem:[#allocation6 + $0x1e8] sm:$0xff]
    %v875 = vld [vmem:[#allocation6 + $0x1f0] sm:$0xff]
    %v876 = vld [vmem:[#allocation6 + $0x1f8] sm:$0xff]
    %v877 = vld [vmem:[#allocation6 + $0x200] sm:$0xff]
    %v878 = vld [vmem:[#allocation6 + $0x208] sm:$0xff]
    %v879 = vld [vmem:[#allocation6 + $0x210] sm:$0xff]
    %v880 = vld [vmem:[#allocation6 + $0x218] sm:$0xff]
    %v881 = vld [vmem:[#allocation6 + $0x220] sm:$0xff]
    %v882 = vld [vmem:[#allocation6 + $0x228] sm:$0xff]
    %v883 = vld [vmem:[#allocation6 + $0x230] sm:$0xff]
    %v884 = vld [vmem:[#allocation6 + $0x238] sm:$0xff]
    %v885 = vld [vmem:[#allocation6 + $0x240] sm:$0xff]
    %v886 = vld [vmem:[#allocation6 + $0x248] sm:$0xff]
    %v887 = vld [vmem:[#allocation6 + $0x250] sm:$0xff]
    %v888 = vld [vmem:[#allocation6 + $0x258] sm:$0xff]
    %v889 = vld [vmem:[#allocation6 + $0x260] sm:$0xff]
    %v890 = vld [vmem:[#allocation6 + $0x268] sm:$0xff]
    %v891 = vld [vmem:[#allocation6 + $0x270] sm:$0xff]
    %v892 = vld [vmem:[#allocation6 + $0x278] sm:$0xff]
    %v893 = vld [vmem:[#allocation6 + $0x280] sm:$0xff]
    %v894 = vld [vmem:[#allocation6 + $0x288] sm:$0xff]
    %v895 = vld [vmem:[#allocation6 + $0x290] sm:$0xff]
    %v896 = vld [vmem:[#allocation6 + $0x298] sm:$0xff]
    %v897 = vld [vmem:[#allocation6 + $0x2a0] sm:$0xff]
    %v898 = vld [vmem:[#allocation6 + $0x2a8] sm:$0xff]
    %v899 = vld [vmem:[#allocation6 + $0x2b0] sm:$0xff]
    %v900 = vld [vmem:[#allocation6 + $0x2b8] sm:$0xff]
    %v901 = vld [vmem:[#allocation6 + $0x2c0] sm:$0xff]
    %v902 = vld [vmem:[#allocation6 + $0x2c8] sm:$0xff]
    %v903 = vld [vmem:[#allocation6 + $0x2d0] sm:$0xff]
    %v904 = vld [vmem:[#allocation6 + $0x2d8] sm:$0xff]
    %v905 = vld [vmem:[#allocation6 + $0x2e0] sm:$0xff]
    %v906 = vld [vmem:[#allocation6 + $0x2e8] sm:$0xff]
    %v907 = vld [vmem:[#allocation6 + $0x2f0] sm:$0xff]
    %v908 = vld [vmem:[#allocation6 + $0x2f8] sm:$0xff]
    %v909 = vld [vmem:[#allocation6 + $0x300] sm:$0xff]
    %v910 = vld [vmem:[#allocation6 + $0x308] sm:$0xff]
    %v911 = vld [vmem:[#allocation6 + $0x310] sm:$0xff]
    %v912 = vld [vmem:[#allocation6 + $0x318] sm:$0xff]
    %v913 = vld [vmem:[#allocation6 + $0x320] sm:$0xff]
    %v914 = vld [vmem:[#allocation6 + $0x328] sm:$0xff]
    %v915 = vld [vmem:[#allocation6 + $0x330] sm:$0xff]
    %v916 = vld [vmem:[#allocation6 + $0x338] sm:$0xff]
    %v917 = vld [vmem:[#allocation6 + $0x340] sm:$0xff]
    %v918 = vld [vmem:[#allocation6 + $0x348] sm:$0xff]
    %v919 = vld [vmem:[#allocation6 + $0x350] sm:$0xff]
    %v920 = vld [vmem:[#allocation6 + $0x358] sm:$0xff]
    %v921 = vld [vmem:[#allocation6 + $0x360] sm:$0xff]
    %v922 = vld [vmem:[#allocation6 + $0x368] sm:$0xff]
    %v923 = vld [vmem:[#allocation6 + $0x370] sm:$0xff]
    %v924 = vld [vmem:[#allocation6 + $0x378] sm:$0xff]
    %v925 = vld [vmem:[#allocation6 + $0x380] sm:$0xff]
    %v926 = vld [vmem:[#allocation6 + $0x388] sm:$0xff]
    %v927 = vld [vmem:[#allocation6 + $0x390] sm:$0xff]
    %v928 = vld [vmem:[#allocation6 + $0x398] sm:$0xff]
    %v929 = vld [vmem:[#allocation6 + $0x3a0] sm:$0xff]
    %v930 = vld [vmem:[#allocation6 + $0x3a8] sm:$0xff]
    %v931 = vld [vmem:[#allocation6 + $0x3b0] sm:$0xff]
    %v932 = vld [vmem:[#allocation6 + $0x3b8] sm:$0xff]
    %v933 = vld [vmem:[#allocation6 + $0x3c0] sm:$0xff]
    %v934 = vld [vmem:[#allocation6 + $0x3c8] sm:$0xff]
    %v935 = vld [vmem:[#allocation6 + $0x3d0] sm:$0xff]
    %v936 = vld [vmem:[#allocation6 + $0x3d8] sm:$0xff]
    %v937 = vld [vmem:[#allocation6 + $0x3e0] sm:$0xff]
    %v938 = vld [vmem:[#allocation6 + $0x3e8] sm:$0xff]
    %v939 = vld [vmem:[#allocation6 + $0x3f0] sm:$0xff]
    %v940 = vld [vmem:[#allocation6 + $0x3f8] sm:$0xff]
    %v941 = vld [vmem:[#allocation6 + $0x400] sm:$0xff]
    %v942 = vld [vmem:[#allocation6 + $0x408] sm:$0xff]
    %v943 = vld [vmem:[#allocation6 + $0x410] sm:$0xff]
    %v944 = vld [vmem:[#allocation6 + $0x418] sm:$0xff]
    %v945 = vld [vmem:[#allocation6 + $0x420] sm:$0xff]
    %v946 = vld [vmem:[#allocation6 + $0x428] sm:$0xff]
    %v947 = vld [vmem:[#allocation6 + $0x430] sm:$0xff]
    %v948 = vld [vmem:[#allocation6 + $0x438] sm:$0xff]
    %v949 = vld [vmem:[#allocation6 + $0x440] sm:$0xff]
    %v950 = vld [vmem:[#allocation6 + $0x448] sm:$0xff]
    %v951 = vld [vmem:[#allocation6 + $0x450] sm:$0xff]
    %v952 = vld [vmem:[#allocation6 + $0x458] sm:$0xff]
    %v953 = vld [vmem:[#allocation6 + $0x460] sm:$0xff]
    %v954 = vld [vmem:[#allocation6 + $0x468] sm:$0xff]
    %v955 = vld [vmem:[#allocation6 + $0x470] sm:$0xff]
    %v956 = vld [vmem:[#allocation6 + $0x478] sm:$0xff]
    %v957 = vld [vmem:[#allocation6 + $0x480] sm:$0xff]
    %v958 = vld [vmem:[#allocation6 + $0x488] sm:$0xff]
    %v959 = vld [vmem:[#allocation6 + $0x490] sm:$0xff]
    %v960 = vld [vmem:[#allocation6 + $0x498] sm:$0xff]
    %v961 = vld [vmem:[#allocation6 + $0x4a0] sm:$0xff]
    %v962 = vld [vmem:[#allocation6 + $0x4a8] sm:$0xff]
    %v963 = vld [vmem:[#allocation6 + $0x4b0] sm:$0xff]
    %v964 = vld [vmem:[#allocation6 + $0x4b8] sm:$0xff]
    %v965 = vld [vmem:[#allocation6 + $0x4c0] sm:$0xff]
    %v966 = vld [vmem:[#allocation6 + $0x4c8] sm:$0xff]
    %v967 = vld [vmem:[#allocation6 + $0x4d0] sm:$0xff]
    %v968 = vld [vmem:[#allocation6 + $0x4d8] sm:$0xff]
    %v969 = vld [vmem:[#allocation6 + $0x4e0] sm:$0xff]
    %v970 = vld [vmem:[#allocation6 + $0x4e8] sm:$0xff]
    %v971 = vld [vmem:[#allocation6 + $0x4f0] sm:$0xff]
    %v972 = vld [vmem:[#allocation6 + $0x4f8] sm:$0xff]
    %v973 = vld [vmem:[#allocation6 + $0x500] sm:$0xff]
    %v974 = vld [vmem:[#allocation6 + $0x508] sm:$0xff]
    %v975 = vld [vmem:[#allocation6 + $0x510] sm:$0xff]
    %v976 = vld [vmem:[#allocation6 + $0x518] sm:$0xff]
    %v977 = vld [vmem:[#allocation6 + $0x520] sm:$0xff]
    %v978 = vld [vmem:[#allocation6 + $0x528] sm:$0xff]
    %v979 = vld [vmem:[#allocation6 + $0x530] sm:$0xff]
    %v980 = vld [vmem:[#allocation6 + $0x538] sm:$0xff]
    %v981 = vld [vmem:[#allocation6 + $0x540] sm:$0xff]
    %v982 = vld [vmem:[#allocation6 + $0x548] sm:$0xff]
    %v983 = vld [vmem:[#allocation6 + $0x550] sm:$0xff]
    %v984 = vld [vmem:[#allocation6 + $0x558] sm:$0xff]
    %v985 = vld [vmem:[#allocation6 + $0x560] sm:$0xff]
    %v986 = vld [vmem:[#allocation6 + $0x568] sm:$0xff]
    %v987 = vld [vmem:[#allocation6 + $0x570] sm:$0xff]
    %v988 = vld [vmem:[#allocation6 + $0x578] sm:$0xff]
    %v989 = vld [vmem:[#allocation6 + $0x580] sm:$0xff]
    %v990 = vld [vmem:[#allocation6 + $0x588] sm:$0xff]
    %v991 = vld [vmem:[#allocation6 + $0x590] sm:$0xff]
    %v992 = vld [vmem:[#allocation6 + $0x598] sm:$0xff]
    %v993 = vld [vmem:[#allocation6 + $0x5a0] sm:$0xff]
    %v994 = vld [vmem:[#allocation6 + $0x5a8] sm:$0xff]
    %v995 = vld [vmem:[#allocation6 + $0x5b0] sm:$0xff]
    %v996 = vld [vmem:[#allocation6 + $0x5b8] sm:$0xff]
    %v997 = vld [vmem:[#allocation6 + $0x5c0] sm:$0xff]
    %v998 = vld [vmem:[#allocation6 + $0x5c8] sm:$0xff]
    %v999 = vld [vmem:[#allocation6 + $0x5d0] sm:$0xff]
    %v1000 = vld [vmem:[#allocation6 + $0x5d8] sm:$0xff]
    %v1001 = vld [vmem:[#allocation6 + $0x5e0] sm:$0xff]
    %v1002 = vld [vmem:[#allocation6 + $0x5e8] sm:$0xff]
    %v1003 = vld [vmem:[#allocation6 + $0x5f0] sm:$0xff]
    %v1004 = vld [vmem:[#allocation6 + $0x5f8] sm:$0xff]
    %v1005 = vld [vmem:[#allocation6 + $0x600] sm:$0xff]
    %v1006 = vld [vmem:[#allocation6 + $0x608] sm:$0xff]
    %v1007 = vld [vmem:[#allocation6 + $0x610] sm:$0xff]
    %v1008 = vld [vmem:[#allocation6 + $0x618] sm:$0xff]
    %v1009 = vld [vmem:[#allocation6 + $0x620] sm:$0xff]
    %v1010 = vld [vmem:[#allocation6 + $0x628] sm:$0xff]
    %v1011 = vld [vmem:[#allocation6 + $0x630] sm:$0xff]
    %v1012 = vld [vmem:[#allocation6 + $0x638] sm:$0xff]
    %v1013 = vld [vmem:[#allocation6 + $0x640] sm:$0xff]
    %v1014 = vld [vmem:[#allocation6 + $0x648] sm:$0xff]
    %v1015 = vld [vmem:[#allocation6 + $0x650] sm:$0xff]
    %v1016 = vld [vmem:[#allocation6 + $0x658] sm:$0xff]
    %v1017 = vld [vmem:[#allocation6 + $0x660] sm:$0xff]
    %v1018 = vld [vmem:[#allocation6 + $0x668] sm:$0xff]
    %v1019 = vld [vmem:[#allocation6 + $0x670] sm:$0xff]
    %v1020 = vld [vmem:[#allocation6 + $0x678] sm:$0xff]
    %v1021 = vld [vmem:[#allocation6 + $0x680] sm:$0xff]
    %v1022 = vld [vmem:[#allocation6 + $0x688] sm:$0xff]
    %v1023 = vld [vmem:[#allocation6 + $0x690] sm:$0xff]
    %v1024 = vld [vmem:[#allocation6 + $0x698] sm:$0xff]
    %v1025 = vld [vmem:[#allocation6 + $0x6a0] sm:$0xff]
    %v1026 = vld [vmem:[#allocation6 + $0x6a8] sm:$0xff]
    %v1027 = vld [vmem:[#allocation6 + $0x6b0] sm:$0xff]
    %v1028 = vld [vmem:[#allocation6 + $0x6b8] sm:$0xff]
    %v1029 = vld [vmem:[#allocation6 + $0x6c0] sm:$0xff]
    %v1030 = vld [vmem:[#allocation6 + $0x6c8] sm:$0xff]
    %v1031 = vld [vmem:[#allocation6 + $0x6d0] sm:$0xff]
    %v1032 = vld [vmem:[#allocation6 + $0x6d8] sm:$0xff]
    %v1033 = vld [vmem:[#allocation6 + $0x6e0] sm:$0xff]
    %v1034 = vld [vmem:[#allocation6 + $0x6e8] sm:$0xff]
    %v1035 = vld [vmem:[#allocation6 + $0x6f0] sm:$0xff]
    %v1036 = vld [vmem:[#allocation6 + $0x6f8] sm:$0xff]
    %v1037 = vld [vmem:[#allocation6 + $0x700] sm:$0xff]
    %v1038 = vld [vmem:[#allocation6 + $0x708] sm:$0xff]
    %v1039 = vld [vmem:[#allocation6 + $0x710] sm:$0xff]
    %v1040 = vld [vmem:[#allocation6 + $0x718] sm:$0xff]
    %v1041 = vld [vmem:[#allocation6 + $0x720] sm:$0xff]
    %v1042 = vld [vmem:[#allocation6 + $0x728] sm:$0xff]
    %v1043 = vld [vmem:[#allocation6 + $0x730] sm:$0xff]
    %v1044 = vld [vmem:[#allocation6 + $0x738] sm:$0xff]
    %v1045 = vld [vmem:[#allocation6 + $0x740] sm:$0xff]
    %v1046 = vld [vmem:[#allocation6 + $0x748] sm:$0xff]
    %v1047 = vld [vmem:[#allocation6 + $0x750] sm:$0xff]
    %v1048 = vld [vmem:[#allocation6 + $0x758] sm:$0xff]
    %v1049 = vld [vmem:[#allocation6 + $0x760] sm:$0xff]
    %v1050 = vld [vmem:[#allocation6 + $0x768] sm:$0xff]
    %v1051 = vld [vmem:[#allocation6 + $0x770] sm:$0xff]
    %v1052 = vld [vmem:[#allocation6 + $0x778] sm:$0xff]
    %v1053 = vld [vmem:[#allocation6 + $0x780] sm:$0xff]
    %v1054 = vld [vmem:[#allocation6 + $0x788] sm:$0xff]
    %v1055 = vld [vmem:[#allocation6 + $0x790] sm:$0xff]
    %v1056 = vld [vmem:[#allocation6 + $0x798] sm:$0xff]
    %v1057 = vld [vmem:[#allocation6 + $0x7a0] sm:$0xff]
    %v1058 = vld [vmem:[#allocation6 + $0x7a8] sm:$0xff]
    %v1059 = vld [vmem:[#allocation6 + $0x7b0] sm:$0xff]
    %v1060 = vld [vmem:[#allocation6 + $0x7b8] sm:$0xff]
    %v1061 = vld [vmem:[#allocation6 + $0x7c0] sm:$0xff]
    %v1062 = vld [vmem:[#allocation6 + $0x7c8] sm:$0xff]
    %v1063 = vld [vmem:[#allocation6 + $0x7d0] sm:$0xff]
    %v1064 = vld [vmem:[#allocation6 + $0x7d8] sm:$0xff]
    %v1065 = vld [vmem:[#allocation6 + $0x7e0] sm:$0xff]
    %v1066 = vld [vmem:[#allocation6 + $0x7e8] sm:$0xff]
    %v1067 = vld [vmem:[#allocation6 + $0x7f0] sm:$0xff]
    %v1068 = vld [vmem:[#allocation6 + $0x7f8] sm:$0xff]
    %v1069 = vld [vmem:[#allocation6 + $0x800] sm:$0xff]
    %v1070 = vld [vmem:[#allocation6 + $0x808] sm:$0xff]
    %v1071 = vld [vmem:[#allocation6 + $0x810] sm:$0xff]
    %v1072 = vld [vmem:[#allocation6 + $0x818] sm:$0xff]
    %v1073 = vld [vmem:[#allocation6 + $0x820] sm:$0xff]
    %v1074 = vld [vmem:[#allocation6 + $0x828] sm:$0xff]
    %v1075 = vld [vmem:[#allocation6 + $0x830] sm:$0xff]
    %v1076 = vld [vmem:[#allocation6 + $0x838] sm:$0xff]
    %v1077 = vld [vmem:[#allocation6 + $0x840] sm:$0xff]
    %v1078 = vld [vmem:[#allocation6 + $0x848] sm:$0xff]
    %v1079 = vld [vmem:[#allocation6 + $0x850] sm:$0xff]
    %v1080 = vld [vmem:[#allocation6 + $0x858] sm:$0xff]
    %v1081 = vld [vmem:[#allocation6 + $0x860] sm:$0xff]
    %v1082 = vld [vmem:[#allocation6 + $0x868] sm:$0xff]
    %v1083 = vld [vmem:[#allocation6 + $0x870] sm:$0xff]
    %v1084 = vld [vmem:[#allocation6 + $0x878] sm:$0xff]
    %v1085 = vld [vmem:[#allocation6 + $0x880] sm:$0xff]
    %v1086 = vld [vmem:[#allocation6 + $0x888] sm:$0xff]
    %v1087 = vld [vmem:[#allocation6 + $0x890] sm:$0xff]
    %v1088 = vld [vmem:[#allocation6 + $0x898] sm:$0xff]
    %v1089 = vld [vmem:[#allocation6 + $0x8a0] sm:$0xff]
    %v1090 = vld [vmem:[#allocation6 + $0x8a8] sm:$0xff]
    %v1091 = vld [vmem:[#allocation6 + $0x8b0] sm:$0xff]
    %v1092 = vld [vmem:[#allocation6 + $0x8b8] sm:$0xff]
    %v1093 = vld [vmem:[#allocation6 + $0x8c0] sm:$0xff]
    %v1094 = vld [vmem:[#allocation6 + $0x8c8] sm:$0xff]
    %v1095 = vld [vmem:[#allocation6 + $0x8d0] sm:$0xff]
    %v1096 = vld [vmem:[#allocation6 + $0x8d8] sm:$0xff]
    %v1097 = vld [vmem:[#allocation6 + $0x8e0] sm:$0xff]
    %v1098 = vld [vmem:[#allocation6 + $0x8e8] sm:$0xff]
    %v1099 = vld [vmem:[#allocation6 + $0x8f0] sm:$0xff]
    %v1100 = vld [vmem:[#allocation6 + $0x8f8] sm:$0xff]
    %v1101 = vld [vmem:[#allocation6 + $0x900] sm:$0xff]
    %v1102 = vld [vmem:[#allocation6 + $0x908] sm:$0xff]
    %v1103 = vld [vmem:[#allocation6 + $0x910] sm:$0xff]
    %v1104 = vld [vmem:[#allocation6 + $0x918] sm:$0xff]
    %v1105 = vld [vmem:[#allocation6 + $0x920] sm:$0xff]
    %v1106 = vld [vmem:[#allocation6 + $0x928] sm:$0xff]
    %v1107 = vld [vmem:[#allocation6 + $0x930] sm:$0xff]
    %v1108 = vld [vmem:[#allocation6 + $0x938] sm:$0xff]
    %v1109 = vld [vmem:[#allocation6 + $0x940] sm:$0xff]
    %v1110 = vld [vmem:[#allocation6 + $0x948] sm:$0xff]
    %v1111 = vld [vmem:[#allocation6 + $0x950] sm:$0xff]
    %v1112 = vld [vmem:[#allocation6 + $0x958] sm:$0xff]
    %v1113 = vld [vmem:[#allocation6 + $0x960] sm:$0xff]
    %v1114 = vld [vmem:[#allocation6 + $0x968] sm:$0xff]
    %v1115 = vld [vmem:[#allocation6 + $0x970] sm:$0xff]
    %v1116 = vld [vmem:[#allocation6 + $0x978] sm:$0xff]
    %v1117 = vld [vmem:[#allocation6 + $0x980] sm:$0xff]
    %v1118 = vld [vmem:[#allocation6 + $0x988] sm:$0xff]
    %v1119 = vld [vmem:[#allocation6 + $0x990] sm:$0xff]
    %v1120 = vld [vmem:[#allocation6 + $0x998] sm:$0xff]
    %v1121 = vld [vmem:[#allocation6 + $0x9a0] sm:$0xff]
    %v1122 = vld [vmem:[#allocation6 + $0x9a8] sm:$0xff]
    %v1123 = vld [vmem:[#allocation6 + $0x9b0] sm:$0xff]
    %v1124 = vld [vmem:[#allocation6 + $0x9b8] sm:$0xff]
    %v1125 = vld [vmem:[#allocation6 + $0x9c0] sm:$0xff]
    %v1126 = vld [vmem:[#allocation6 + $0x9c8] sm:$0xff]
    %v1127 = vld [vmem:[#allocation6 + $0x9d0] sm:$0xff]
    %v1128 = vld [vmem:[#allocation6 + $0x9d8] sm:$0xff]
    %v1129 = vld [vmem:[#allocation6 + $0x9e0] sm:$0xff]
    %v1130 = vld [vmem:[#allocation6 + $0x9e8] sm:$0xff]
    %v1131 = vld [vmem:[#allocation6 + $0x9f0] sm:$0xff]
    %v1132 = vld [vmem:[#allocation6 + $0x9f8] sm:$0xff]
    %v1133 = vld [vmem:[#allocation6 + $0xa00] sm:$0xff]
    %v1134 = vld [vmem:[#allocation6 + $0xa08] sm:$0xff]
    %v1135 = vld [vmem:[#allocation6 + $0xa10] sm:$0xff]
    %v1136 = vld [vmem:[#allocation6 + $0xa18] sm:$0xff]
    %v1137 = vld [vmem:[#allocation6 + $0xa20] sm:$0xff]
    %v1138 = vld [vmem:[#allocation6 + $0xa28] sm:$0xff]
    %v1139 = vld [vmem:[#allocation6 + $0xa30] sm:$0xff]
    %v1140 = vld [vmem:[#allocation6 + $0xa38] sm:$0xff]
    %v1141 = vld [vmem:[#allocation6 + $0xa40] sm:$0xff]
    %v1142 = vld [vmem:[#allocation6 + $0xa48] sm:$0xff]
    %v1143 = vld [vmem:[#allocation6 + $0xa50] sm:$0xff]
    %v1144 = vld [vmem:[#allocation6 + $0xa58] sm:$0xff]
    %v1145 = vld [vmem:[#allocation6 + $0xa60] sm:$0xff]
    %v1146 = vld [vmem:[#allocation6 + $0xa68] sm:$0xff]
    %v1147 = vld [vmem:[#allocation6 + $0xa70] sm:$0xff]
    %v1148 = vld [vmem:[#allocation6 + $0xa78] sm:$0xff]
    %v1149 = vld [vmem:[#allocation6 + $0xa80] sm:$0xff]
    %v1150 = vld [vmem:[#allocation6 + $0xa88] sm:$0xff]
    %v1151 = vld [vmem:[#allocation6 + $0xa90] sm:$0xff]
    %v1152 = vld [vmem:[#allocation6 + $0xa98] sm:$0xff]
    %v1153 = vld [vmem:[#allocation6 + $0xaa0] sm:$0xff]
    %v1154 = vld [vmem:[#allocation6 + $0xaa8] sm:$0xff]
    %v1155 = vld [vmem:[#allocation6 + $0xab0] sm:$0xff]
    %v1156 = vld [vmem:[#allocation6 + $0xab8] sm:$0xff]
    %v1157 = vld [vmem:[#allocation6 + $0xac0] sm:$0xff]
    %v1158 = vld [vmem:[#allocation6 + $0xac8] sm:$0xff]
    %v1159 = vld [vmem:[#allocation6 + $0xad0] sm:$0xff]
    %v1160 = vld [vmem:[#allocation6 + $0xad8] sm:$0xff]
    %v1161 = vld [vmem:[#allocation6 + $0xae0] sm:$0xff]
    %v1162 = vld [vmem:[#allocation6 + $0xae8] sm:$0xff]
    %v1163 = vld [vmem:[#allocation6 + $0xaf0] sm:$0xff]
    %v1164 = vld [vmem:[#allocation6 + $0xaf8] sm:$0xff]
    %v1165 = vld [vmem:[#allocation6 + $0xb00] sm:$0xff]
    %v1166 = vld [vmem:[#allocation6 + $0xb08] sm:$0xff]
    %v1167 = vld [vmem:[#allocation6 + $0xb10] sm:$0xff]
    %v1168 = vld [vmem:[#allocation6 + $0xb18] sm:$0xff]
    %v1169 = vld [vmem:[#allocation6 + $0xb20] sm:$0xff]
    %v1170 = vld [vmem:[#allocation6 + $0xb28] sm:$0xff]
    %v1171 = vld [vmem:[#allocation6 + $0xb30] sm:$0xff]
    %v1172 = vld [vmem:[#allocation6 + $0xb38] sm:$0xff]
    %v1173 = vld [vmem:[#allocation6 + $0xb40] sm:$0xff]
    %v1174 = vld [vmem:[#allocation6 + $0xb48] sm:$0xff]
    %v1175 = vld [vmem:[#allocation6 + $0xb50] sm:$0xff]
    %v1176 = vld [vmem:[#allocation6 + $0xb58] sm:$0xff]
    %v1177 = vld [vmem:[#allocation6 + $0xb60] sm:$0xff]
    %v1178 = vld [vmem:[#allocation6 + $0xb68] sm:$0xff]
    %v1179 = vld [vmem:[#allocation6 + $0xb70] sm:$0xff]
    %v1180 = vld [vmem:[#allocation6 + $0xb78] sm:$0xff]
    %v1181 = vld [vmem:[#allocation6 + $0xb80] sm:$0xff]
    %v1182 = vld [vmem:[#allocation6 + $0xb88] sm:$0xff]
    %v1183 = vld [vmem:[#allocation6 + $0xb90] sm:$0xff]
    %v1184 = vld [vmem:[#allocation6 + $0xb98] sm:$0xff]
    %v1185 = vld [vmem:[#allocation6 + $0xba0] sm:$0xff]
    %v1186 = vld [vmem:[#allocation6 + $0xba8] sm:$0xff]
    %v1187 = vld [vmem:[#allocation6 + $0xbb0] sm:$0xff]
    %v1188 = vld [vmem:[#allocation6 + $0xbb8] sm:$0xff]
    %v1189 = vld [vmem:[#allocation6 + $0xbc0] sm:$0xff]
    %v1190 = vld [vmem:[#allocation6 + $0xbc8] sm:$0xff]
    %v1191 = vld [vmem:[#allocation6 + $0xbd0] sm:$0xff]
    %v1192 = vld [vmem:[#allocation6 + $0xbd8] sm:$0xff]
    %v1193 = vld [vmem:[#allocation6 + $0xbe0] sm:$0xff]
    %v1194 = vld [vmem:[#allocation6 + $0xbe8] sm:$0xff]
    %v1195 = vld [vmem:[#allocation6 + $0xbf0] sm:$0xff]
    %v1196 = vld [vmem:[#allocation6 + $0xbf8] sm:$0xff]
    %v1197 = vld [vmem:[#allocation6 + $0xc00] sm:$0xff]
    %v1198 = vld [vmem:[#allocation6 + $0xc08] sm:$0xff]
    %v1199 = vld [vmem:[#allocation6 + $0xc10] sm:$0xff]
    %v1200 = vld [vmem:[#allocation6 + $0xc18] sm:$0xff]
    %v1201 = vld [vmem:[#allocation6 + $0xc20] sm:$0xff]
    %v1202 = vld [vmem:[#allocation6 + $0xc28] sm:$0xff]
    %v1203 = vld [vmem:[#allocation6 + $0xc30] sm:$0xff]
    %v1204 = vld [vmem:[#allocation6 + $0xc38] sm:$0xff]
    %v1205 = vld [vmem:[#allocation6 + $0xc40] sm:$0xff]
    %v1206 = vld [vmem:[#allocation6 + $0xc48] sm:$0xff]
    %v1207 = vld [vmem:[#allocation6 + $0xc50] sm:$0xff]
    %v1208 = vld [vmem:[#allocation6 + $0xc58] sm:$0xff]
    %v1209 = vld [vmem:[#allocation6 + $0xc60] sm:$0xff]
    %v1210 = vld [vmem:[#allocation6 + $0xc68] sm:$0xff]
    %v1211 = vld [vmem:[#allocation6 + $0xc70] sm:$0xff]
    %v1212 = vld [vmem:[#allocation6 + $0xc78] sm:$0xff]
    %v1213 = vld [vmem:[#allocation6 + $0xc80] sm:$0xff]
    %v1214 = vld [vmem:[#allocation6 + $0xc88] sm:$0xff]
    %v1215 = vld [vmem:[#allocation6 + $0xc90] sm:$0xff]
    %v1216 = vld [vmem:[#allocation6 + $0xc98] sm:$0xff]
    %v1217 = vld [vmem:[#allocation6 + $0xca0] sm:$0xff]
    %v1218 = vld [vmem:[#allocation6 + $0xca8] sm:$0xff]
    %v1219 = vld [vmem:[#allocation6 + $0xcb0] sm:$0xff]
    %v1220 = vld [vmem:[#allocation6 + $0xcb8] sm:$0xff]
    %v1221 = vld [vmem:[#allocation6 + $0xcc0] sm:$0xff]
    %v1222 = vld [vmem:[#allocation6 + $0xcc8] sm:$0xff]
    %v1223 = vld [vmem:[#allocation6 + $0xcd0] sm:$0xff]
    %v1224 = vld [vmem:[#allocation6 + $0xcd8] sm:$0xff]
    %v1225 = vld [vmem:[#allocation6 + $0xce0] sm:$0xff]
    %v1226 = vld [vmem:[#allocation6 + $0xce8] sm:$0xff]
    %v1227 = vld [vmem:[#allocation6 + $0xcf0] sm:$0xff]
    %v1228 = vld [vmem:[#allocation6 + $0xcf8] sm:$0xff]
    %v1229 = vld [vmem:[#allocation6 + $0xd00] sm:$0xff]
    %v1230 = vld [vmem:[#allocation6 + $0xd08] sm:$0xff]
    %v1231 = vld [vmem:[#allocation6 + $0xd10] sm:$0xff]
    %v1232 = vld [vmem:[#allocation6 + $0xd18] sm:$0xff]
    %v1233 = vld [vmem:[#allocation6 + $0xd20] sm:$0xff]
    %v1234 = vld [vmem:[#allocation6 + $0xd28] sm:$0xff]
    %v1235 = vld [vmem:[#allocation6 + $0xd30] sm:$0xff]
    %v1236 = vld [vmem:[#allocation6 + $0xd38] sm:$0xff]
    %v1237 = vld [vmem:[#allocation6 + $0xd40] sm:$0xff]
    %v1238 = vld [vmem:[#allocation6 + $0xd48] sm:$0xff]
    %v1239 = vld [vmem:[#allocation6 + $0xd50] sm:$0xff]
    %v1240 = vld [vmem:[#allocation6 + $0xd58] sm:$0xff]
    %v1241 = vld [vmem:[#allocation6 + $0xd60] sm:$0xff]
    %v1242 = vld [vmem:[#allocation6 + $0xd68] sm:$0xff]
    %v1243 = vld [vmem:[#allocation6 + $0xd70] sm:$0xff]
    %v1244 = vld [vmem:[#allocation6 + $0xd78] sm:$0xff]
    %v1245 = vld [vmem:[#allocation6 + $0xd80] sm:$0xff]
    %v1246 = vld [vmem:[#allocation6 + $0xd88] sm:$0xff]
    %v1247 = vld [vmem:[#allocation6 + $0xd90] sm:$0xff]
    %v1248 = vld [vmem:[#allocation6 + $0xd98] sm:$0xff]
    %v1249 = vld [vmem:[#allocation6 + $0xda0] sm:$0xff]
    %v1250 = vld [vmem:[#allocation6 + $0xda8] sm:$0xff]
    %v1251 = vld [vmem:[#allocation6 + $0xdb0] sm:$0xff]
    %v1252 = vld [vmem:[#allocation6 + $0xdb8] sm:$0xff]
    %v1253 = vld [vmem:[#allocation6 + $0xdc0] sm:$0xff]
    %v1254 = vld [vmem:[#allocation6 + $0xdc8] sm:$0xff]
    %v1255 = vld [vmem:[#allocation6 + $0xdd0] sm:$0xff]
    %v1256 = vld [vmem:[#allocation6 + $0xdd8] sm:$0xff]
    %v1257 = vld [vmem:[#allocation6 + $0xde0] sm:$0xff]
    %v1258 = vld [vmem:[#allocation6 + $0xde8] sm:$0xff]
    %v1259 = vld [vmem:[#allocation6 + $0xdf0] sm:$0xff]
    %v1260 = vld [vmem:[#allocation6 + $0xdf8] sm:$0xff]
    %v1261 = vld [vmem:[#allocation6 + $0xe00] sm:$0xff]
    %v1262 = vld [vmem:[#allocation6 + $0xe08] sm:$0xff]
    %v1263 = vld [vmem:[#allocation6 + $0xe10] sm:$0xff]
    %v1264 = vld [vmem:[#allocation6 + $0xe18] sm:$0xff]
    %v1265 = vld [vmem:[#allocation6 + $0xe20] sm:$0xff]
    %v1266 = vld [vmem:[#allocation6 + $0xe28] sm:$0xff]
    %v1267 = vld [vmem:[#allocation6 + $0xe30] sm:$0xff]
    %v1268 = vld [vmem:[#allocation6 + $0xe38] sm:$0xff]
    %v1269 = vld [vmem:[#allocation6 + $0xe40] sm:$0xff]
    %v1270 = vld [vmem:[#allocation6 + $0xe48] sm:$0xff]
    %v1271 = vld [vmem:[#allocation6 + $0xe50] sm:$0xff]
    %v1272 = vld [vmem:[#allocation6 + $0xe58] sm:$0xff]
    %v1273 = vld [vmem:[#allocation6 + $0xe60] sm:$0xff]
    %v1274 = vld [vmem:[#allocation6 + $0xe68] sm:$0xff]
    %v1275 = vld [vmem:[#allocation6 + $0xe70] sm:$0xff]
    %v1276 = vld [vmem:[#allocation6 + $0xe78] sm:$0xff]
    %v1277 = vld [vmem:[#allocation6 + $0xe80] sm:$0xff]
    %v1278 = vld [vmem:[#allocation6 + $0xe88] sm:$0xff]
    %v1279 = vld [vmem:[#allocation6 + $0xe90] sm:$0xff]
    %v1280 = vld [vmem:[#allocation6 + $0xe98] sm:$0xff]
    %v1281 = vld [vmem:[#allocation6 + $0xea0] sm:$0xff]
    %v1282 = vld [vmem:[#allocation6 + $0xea8] sm:$0xff]
    %v1283 = vld [vmem:[#allocation6 + $0xeb0] sm:$0xff]
    %v1284 = vld [vmem:[#allocation6 + $0xeb8] sm:$0xff]
    %v1285 = vld [vmem:[#allocation6 + $0xec0] sm:$0xff]
    %v1286 = vld [vmem:[#allocation6 + $0xec8] sm:$0xff]
    %v1287 = vld [vmem:[#allocation6 + $0xed0] sm:$0xff]
    %v1288 = vld [vmem:[#allocation6 + $0xed8] sm:$0xff]
    %v1289 = vld [vmem:[#allocation6 + $0xee0] sm:$0xff]
    %v1290 = vld [vmem:[#allocation6 + $0xee8] sm:$0xff]
    %v1291 = vld [vmem:[#allocation6 + $0xef0] sm:$0xff]
    %v1292 = vld [vmem:[#allocation6 + $0xef8] sm:$0xff]
    %v1293 = vld [vmem:[#allocation6 + $0xf00] sm:$0xff]
    %v1294 = vld [vmem:[#allocation6 + $0xf08] sm:$0xff]
    %v1295 = vld [vmem:[#allocation6 + $0xf10] sm:$0xff]
    %v1296 = vld [vmem:[#allocation6 + $0xf18] sm:$0xff]
    %v1297 = vld [vmem:[#allocation6 + $0xf20] sm:$0xff]
    %v1298 = vld [vmem:[#allocation6 + $0xf28] sm:$0xff]
    %v1299 = vld [vmem:[#allocation6 + $0xf30] sm:$0xff]
    %v1300 = vld [vmem:[#allocation6 + $0xf38] sm:$0xff]
    %v1301 = vld [vmem:[#allocation6 + $0xf40] sm:$0xff]
    %v1302 = vld [vmem:[#allocation6 + $0xf48] sm:$0xff]
    %v1303 = vld [vmem:[#allocation6 + $0xf50] sm:$0xff]
    %v1304 = vld [vmem:[#allocation6 + $0xf58] sm:$0xff]
    %v1305 = vld [vmem:[#allocation6 + $0xf60] sm:$0xff]
    %v1306 = vld [vmem:[#allocation6 + $0xf68] sm:$0xff]
    %v1307 = vld [vmem:[#allocation6 + $0xf70] sm:$0xff]
    %v1308 = vld [vmem:[#allocation6 + $0xf78] sm:$0xff]
    %v1309 = vld [vmem:[#allocation6 + $0xf80] sm:$0xff]
    %v1310 = vld [vmem:[#allocation6 + $0xf88] sm:$0xff]
    %v1311 = vld [vmem:[#allocation6 + $0xf90] sm:$0xff]
    %v1312 = vld [vmem:[#allocation6 + $0xf98] sm:$0xff]
    %v1313 = vld [vmem:[#allocation6 + $0xfa0] sm:$0xff]
    %v1314 = vld [vmem:[#allocation6 + $0xfa8] sm:$0xff]
    %v1315 = vld [vmem:[#allocation6 + $0xfb0] sm:$0xff]
    %v1316 = vld [vmem:[#allocation6 + $0xfb8] sm:$0xff]
    %v1317 = vld [vmem:[#allocation6 + $0xfc0] sm:$0xff]
    %v1318 = vld [vmem:[#allocation6 + $0xfc8] sm:$0xff]
    %v1319 = vld [vmem:[#allocation6 + $0xfd0] sm:$0xff]
    %v1320 = vld [vmem:[#allocation6 + $0xfd8] sm:$0xff]
    %v1321 = vld [vmem:[#allocation6 + $0xfe0] sm:$0xff]
    %v1322 = vld [vmem:[#allocation6 + $0xfe8] sm:$0xff]
    %v1323 = vld [vmem:[#allocation6 + $0xff0] sm:$0xff]
    %v1324 = vld [vmem:[#allocation6 + $0xff8] sm:$0xff]
    %v1325 = vld [vmem:[#allocation7] sm:$0xf]
    %v1327 = vlaneseq
    %v1328 = vshrl.u32 %v1327, 7
    %v1329 = vsub.s32 0, %v1328
    %v1330 = vrot.slane %v1325, %v1329
    %v1331 = vlaneseq
    %v1332 = vshrl.u32 %v1331, 7
    %v1333 = vsub.s32 1, %v1332
    %v1334 = vrot.slane %v1325, %v1333
    %v1335 = vlaneseq
    %v1336 = vshrl.u32 %v1335, 7
    %v1337 = vsub.s32 2, %v1336
    %v1338 = vrot.slane %v1325, %v1337
    %v1339 = vlaneseq
    %v1340 = vshrl.u32 %v1339, 7
    %v1341 = vsub.s32 3, %v1340
    %v1342 = vrot.slane %v1325, %v1341
    %v1859 = vunpack.c.l.b16 %v813
    %v1860 = vunpack.c.h.b16 %v813
    %v1861 = vunpack.c.l.b16 %v814
    %v1862 = vunpack.c.h.b16 %v814
    %v1863 = vunpack.c.l.b16 %v815
    %v1864 = vunpack.c.h.b16 %v815
    %v1865 = vunpack.c.l.b16 %v816
    %v1866 = vunpack.c.h.b16 %v816
    %v1867 = vunpack.c.l.b16 %v817
    %v1868 = vunpack.c.h.b16 %v817
    %v1869 = vunpack.c.l.b16 %v818
    %v1870 = vunpack.c.h.b16 %v818
    %v1871 = vunpack.c.l.b16 %v819
    %v1872 = vunpack.c.h.b16 %v819
    %v1873 = vunpack.c.l.b16 %v820
    %v1874 = vunpack.c.h.b16 %v820
    %v1875 = vunpack.c.l.b16 %v821
    %v1876 = vunpack.c.h.b16 %v821
    %v1877 = vunpack.c.l.b16 %v822
    %v1878 = vunpack.c.h.b16 %v822
    %v1879 = vunpack.c.l.b16 %v823
    %v1880 = vunpack.c.h.b16 %v823
    %v1881 = vunpack.c.l.b16 %v824
    %v1882 = vunpack.c.h.b16 %v824
    %v1883 = vunpack.c.l.b16 %v825
    %v1884 = vunpack.c.h.b16 %v825
    %v1885 = vunpack.c.l.b16 %v826
    %v1886 = vunpack.c.h.b16 %v826
    %v1887 = vunpack.c.l.b16 %v827
    %v1888 = vunpack.c.h.b16 %v827
    %v1889 = vunpack.c.l.b16 %v828
    %v1890 = vunpack.c.h.b16 %v828
    %v1891 = vunpack.c.l.b16 %v829
    %v1892 = vunpack.c.h.b16 %v829
    %v1893 = vunpack.c.l.b16 %v830
    %v1894 = vunpack.c.h.b16 %v830
    %v1895 = vunpack.c.l.b16 %v831
    %v1896 = vunpack.c.h.b16 %v831
    %v1897 = vunpack.c.l.b16 %v832
    %v1898 = vunpack.c.h.b16 %v832
    %v1899 = vunpack.c.l.b16 %v833
    %v1900 = vunpack.c.h.b16 %v833
    %v1901 = vunpack.c.l.b16 %v834
    %v1902 = vunpack.c.h.b16 %v834
    %v1903 = vunpack.c.l.b16 %v835
    %v1904 = vunpack.c.h.b16 %v835
    %v1905 = vunpack.c.l.b16 %v836
    %v1906 = vunpack.c.h.b16 %v836
    %v1907 = vunpack.c.l.b16 %v837
    %v1908 = vunpack.c.h.b16 %v837
    %v1909 = vunpack.c.l.b16 %v838
    %v1910 = vunpack.c.h.b16 %v838
    %v1911 = vunpack.c.l.b16 %v839
    %v1912 = vunpack.c.h.b16 %v839
    %v1913 = vunpack.c.l.b16 %v840
    %v1914 = vunpack.c.h.b16 %v840
    %v1915 = vunpack.c.l.b16 %v841
    %v1916 = vunpack.c.h.b16 %v841
    %v1917 = vunpack.c.l.b16 %v842
    %v1918 = vunpack.c.h.b16 %v842
    %v1919 = vunpack.c.l.b16 %v843
    %v1920 = vunpack.c.h.b16 %v843
    %v1921 = vunpack.c.l.b16 %v844
    %v1922 = vunpack.c.h.b16 %v844
    %v1923 = vunpack.c.l.b16 %v845
    %v1924 = vunpack.c.h.b16 %v845
    %v1925 = vunpack.c.l.b16 %v846
    %v1926 = vunpack.c.h.b16 %v846
    %v1927 = vunpack.c.l.b16 %v847
    %v1928 = vunpack.c.h.b16 %v847
    %v1929 = vunpack.c.l.b16 %v848
    %v1930 = vunpack.c.h.b16 %v848
    %v1931 = vunpack.c.l.b16 %v849
    %v1932 = vunpack.c.h.b16 %v849
    %v1933 = vunpack.c.l.b16 %v850
    %v1934 = vunpack.c.h.b16 %v850
    %v1935 = vunpack.c.l.b16 %v851
    %v1936 = vunpack.c.h.b16 %v851
    %v1937 = vunpack.c.l.b16 %v852
    %v1938 = vunpack.c.h.b16 %v852
    %v1939 = vunpack.c.l.b16 %v853
    %v1940 = vunpack.c.h.b16 %v853
    %v1941 = vunpack.c.l.b16 %v854
    %v1942 = vunpack.c.h.b16 %v854
    %v1943 = vunpack.c.l.b16 %v855
    %v1944 = vunpack.c.h.b16 %v855
    %v1945 = vunpack.c.l.b16 %v856
    %v1946 = vunpack.c.h.b16 %v856
    %v1947 = vunpack.c.l.b16 %v857
    %v1948 = vunpack.c.h.b16 %v857
    %v1949 = vunpack.c.l.b16 %v858
    %v1950 = vunpack.c.h.b16 %v858
    %v1951 = vunpack.c.l.b16 %v859
    %v1952 = vunpack.c.h.b16 %v859
    %v1953 = vunpack.c.l.b16 %v860
    %v1954 = vunpack.c.h.b16 %v860
    %v1955 = vunpack.c.l.b16 %v861
    %v1956 = vunpack.c.h.b16 %v861
    %v1957 = vunpack.c.l.b16 %v862
    %v1958 = vunpack.c.h.b16 %v862
    %v1959 = vunpack.c.l.b16 %v863
    %v1960 = vunpack.c.h.b16 %v863
    %v1961 = vunpack.c.l.b16 %v864
    %v1962 = vunpack.c.h.b16 %v864
    %v1963 = vunpack.c.l.b16 %v865
    %v1964 = vunpack.c.h.b16 %v865
    %v1965 = vunpack.c.l.b16 %v866
    %v1966 = vunpack.c.h.b16 %v866
    %v1967 = vunpack.c.l.b16 %v867
    %v1968 = vunpack.c.h.b16 %v867
    %v1969 = vunpack.c.l.b16 %v868
    %v1970 = vunpack.c.h.b16 %v868
    %v1971 = vunpack.c.l.b16 %v869
    %v1972 = vunpack.c.h.b16 %v869
    %v1973 = vunpack.c.l.b16 %v870
    %v1974 = vunpack.c.h.b16 %v870
    %v1975 = vunpack.c.l.b16 %v871
    %v1976 = vunpack.c.h.b16 %v871
    %v1977 = vunpack.c.l.b16 %v872
    %v1978 = vunpack.c.h.b16 %v872
    %v1979 = vunpack.c.l.b16 %v873
    %v1980 = vunpack.c.h.b16 %v873
    %v1981 = vunpack.c.l.b16 %v874
    %v1982 = vunpack.c.h.b16 %v874
    %v1983 = vunpack.c.l.b16 %v875
    %v1984 = vunpack.c.h.b16 %v875
    %v1985 = vunpack.c.l.b16 %v876
    %v1986 = vunpack.c.h.b16 %v876
    %v1987 = vunpack.c.l.b16 %v877
    %v1988 = vunpack.c.h.b16 %v877
    %v1989 = vunpack.c.l.b16 %v878
    %v1990 = vunpack.c.h.b16 %v878
    %v1991 = vunpack.c.l.b16 %v879
    %v1992 = vunpack.c.h.b16 %v879
    %v1993 = vunpack.c.l.b16 %v880
    %v1994 = vunpack.c.h.b16 %v880
    %v1995 = vunpack.c.l.b16 %v881
    %v1996 = vunpack.c.h.b16 %v881
    %v1997 = vunpack.c.l.b16 %v882
    %v1998 = vunpack.c.h.b16 %v882
    %v1999 = vunpack.c.l.b16 %v883
    %v2000 = vunpack.c.h.b16 %v883
    %v2001 = vunpack.c.l.b16 %v884
    %v2002 = vunpack.c.h.b16 %v884
    %v2003 = vunpack.c.l.b16 %v885
    %v2004 = vunpack.c.h.b16 %v885
    %v2005 = vunpack.c.l.b16 %v886
    %v2006 = vunpack.c.h.b16 %v886
    %v2007 = vunpack.c.l.b16 %v887
    %v2008 = vunpack.c.h.b16 %v887
    %v2009 = vunpack.c.l.b16 %v888
    %v2010 = vunpack.c.h.b16 %v888
    %v2011 = vunpack.c.l.b16 %v889
    %v2012 = vunpack.c.h.b16 %v889
    %v2013 = vunpack.c.l.b16 %v890
    %v2014 = vunpack.c.h.b16 %v890
    %v2015 = vunpack.c.l.b16 %v891
    %v2016 = vunpack.c.h.b16 %v891
    %v2017 = vunpack.c.l.b16 %v892
    %v2018 = vunpack.c.h.b16 %v892
    %v2019 = vunpack.c.l.b16 %v893
    %v2020 = vunpack.c.h.b16 %v893
    %v2021 = vunpack.c.l.b16 %v894
    %v2022 = vunpack.c.h.b16 %v894
    %v2023 = vunpack.c.l.b16 %v895
    %v2024 = vunpack.c.h.b16 %v895
    %v2025 = vunpack.c.l.b16 %v896
    %v2026 = vunpack.c.h.b16 %v896
    %v2027 = vunpack.c.l.b16 %v897
    %v2028 = vunpack.c.h.b16 %v897
    %v2029 = vunpack.c.l.b16 %v898
    %v2030 = vunpack.c.h.b16 %v898
    %v2031 = vunpack.c.l.b16 %v899
    %v2032 = vunpack.c.h.b16 %v899
    %v2033 = vunpack.c.l.b16 %v900
    %v2034 = vunpack.c.h.b16 %v900
    %v2035 = vunpack.c.l.b16 %v901
    %v2036 = vunpack.c.h.b16 %v901
    %v2037 = vunpack.c.l.b16 %v902
    %v2038 = vunpack.c.h.b16 %v902
    %v2039 = vunpack.c.l.b16 %v903
    %v2040 = vunpack.c.h.b16 %v903
    %v2041 = vunpack.c.l.b16 %v904
    %v2042 = vunpack.c.h.b16 %v904
    %v2043 = vunpack.c.l.b16 %v905
    %v2044 = vunpack.c.h.b16 %v905
    %v2045 = vunpack.c.l.b16 %v906
    %v2046 = vunpack.c.h.b16 %v906
    %v2047 = vunpack.c.l.b16 %v907
    %v2048 = vunpack.c.h.b16 %v907
    %v2049 = vunpack.c.l.b16 %v908
    %v2050 = vunpack.c.h.b16 %v908
    %v2051 = vunpack.c.l.b16 %v909
    %v2052 = vunpack.c.h.b16 %v909
    %v2053 = vunpack.c.l.b16 %v910
    %v2054 = vunpack.c.h.b16 %v910
    %v2055 = vunpack.c.l.b16 %v911
    %v2056 = vunpack.c.h.b16 %v911
    %v2057 = vunpack.c.l.b16 %v912
    %v2058 = vunpack.c.h.b16 %v912
    %v2059 = vunpack.c.l.b16 %v913
    %v2060 = vunpack.c.h.b16 %v913
    %v2061 = vunpack.c.l.b16 %v914
    %v2062 = vunpack.c.h.b16 %v914
    %v2063 = vunpack.c.l.b16 %v915
    %v2064 = vunpack.c.h.b16 %v915
    %v2065 = vunpack.c.l.b16 %v916
    %v2066 = vunpack.c.h.b16 %v916
    %v2067 = vunpack.c.l.b16 %v917
    %v2068 = vunpack.c.h.b16 %v917
    %v2069 = vunpack.c.l.b16 %v918
    %v2070 = vunpack.c.h.b16 %v918
    %v2071 = vunpack.c.l.b16 %v919
    %v2072 = vunpack.c.h.b16 %v919
    %v2073 = vunpack.c.l.b16 %v920
    %v2074 = vunpack.c.h.b16 %v920
    %v2075 = vunpack.c.l.b16 %v921
    %v2076 = vunpack.c.h.b16 %v921
    %v2077 = vunpack.c.l.b16 %v922
    %v2078 = vunpack.c.h.b16 %v922
    %v2079 = vunpack.c.l.b16 %v923
    %v2080 = vunpack.c.h.b16 %v923
    %v2081 = vunpack.c.l.b16 %v924
    %v2082 = vunpack.c.h.b16 %v924
    %v2083 = vunpack.c.l.b16 %v925
    %v2084 = vunpack.c.h.b16 %v925
    %v2085 = vunpack.c.l.b16 %v926
    %v2086 = vunpack.c.h.b16 %v926
    %v2087 = vunpack.c.l.b16 %v927
    %v2088 = vunpack.c.h.b16 %v927
    %v2089 = vunpack.c.l.b16 %v928
    %v2090 = vunpack.c.h.b16 %v928
    %v2091 = vunpack.c.l.b16 %v929
    %v2092 = vunpack.c.h.b16 %v929
    %v2093 = vunpack.c.l.b16 %v930
    %v2094 = vunpack.c.h.b16 %v930
    %v2095 = vunpack.c.l.b16 %v931
    %v2096 = vunpack.c.h.b16 %v931
    %v2097 = vunpack.c.l.b16 %v932
    %v2098 = vunpack.c.h.b16 %v932
    %v2099 = vunpack.c.l.b16 %v933
    %v2100 = vunpack.c.h.b16 %v933
    %v2101 = vunpack.c.l.b16 %v934
    %v2102 = vunpack.c.h.b16 %v934
    %v2103 = vunpack.c.l.b16 %v935
    %v2104 = vunpack.c.h.b16 %v935
    %v2105 = vunpack.c.l.b16 %v936
    %v2106 = vunpack.c.h.b16 %v936
    %v2107 = vunpack.c.l.b16 %v937
    %v2108 = vunpack.c.h.b16 %v937
    %v2109 = vunpack.c.l.b16 %v938
    %v2110 = vunpack.c.h.b16 %v938
    %v2111 = vunpack.c.l.b16 %v939
    %v2112 = vunpack.c.h.b16 %v939
    %v2113 = vunpack.c.l.b16 %v940
    %v2114 = vunpack.c.h.b16 %v940
    %v2115 = vunpack.c.l.b16 %v941
    %v2116 = vunpack.c.h.b16 %v941
    %v2117 = vunpack.c.l.b16 %v942
    %v2118 = vunpack.c.h.b16 %v942
    %v2119 = vunpack.c.l.b16 %v943
    %v2120 = vunpack.c.h.b16 %v943
    %v2121 = vunpack.c.l.b16 %v944
    %v2122 = vunpack.c.h.b16 %v944
    %v2123 = vunpack.c.l.b16 %v945
    %v2124 = vunpack.c.h.b16 %v945
    %v2125 = vunpack.c.l.b16 %v946
    %v2126 = vunpack.c.h.b16 %v946
    %v2127 = vunpack.c.l.b16 %v947
    %v2128 = vunpack.c.h.b16 %v947
    %v2129 = vunpack.c.l.b16 %v948
    %v2130 = vunpack.c.h.b16 %v948
    %v2131 = vunpack.c.l.b16 %v949
    %v2132 = vunpack.c.h.b16 %v949
    %v2133 = vunpack.c.l.b16 %v950
    %v2134 = vunpack.c.h.b16 %v950
    %v2135 = vunpack.c.l.b16 %v951
    %v2136 = vunpack.c.h.b16 %v951
    %v2137 = vunpack.c.l.b16 %v952
    %v2138 = vunpack.c.h.b16 %v952
    %v2139 = vunpack.c.l.b16 %v953
    %v2140 = vunpack.c.h.b16 %v953
    %v2141 = vunpack.c.l.b16 %v954
    %v2142 = vunpack.c.h.b16 %v954
    %v2143 = vunpack.c.l.b16 %v955
    %v2144 = vunpack.c.h.b16 %v955
    %v2145 = vunpack.c.l.b16 %v956
    %v2146 = vunpack.c.h.b16 %v956
    %v2147 = vunpack.c.l.b16 %v957
    %v2148 = vunpack.c.h.b16 %v957
    %v2149 = vunpack.c.l.b16 %v958
    %v2150 = vunpack.c.h.b16 %v958
    %v2151 = vunpack.c.l.b16 %v959
    %v2152 = vunpack.c.h.b16 %v959
    %v2153 = vunpack.c.l.b16 %v960
    %v2154 = vunpack.c.h.b16 %v960
    %v2155 = vunpack.c.l.b16 %v961
    %v2156 = vunpack.c.h.b16 %v961
    %v2157 = vunpack.c.l.b16 %v962
    %v2158 = vunpack.c.h.b16 %v962
    %v2159 = vunpack.c.l.b16 %v963
    %v2160 = vunpack.c.h.b16 %v963
    %v2161 = vunpack.c.l.b16 %v964
    %v2162 = vunpack.c.h.b16 %v964
    %v2163 = vunpack.c.l.b16 %v965
    %v2164 = vunpack.c.h.b16 %v965
    %v2165 = vunpack.c.l.b16 %v966
    %v2166 = vunpack.c.h.b16 %v966
    %v2167 = vunpack.c.l.b16 %v967
    %v2168 = vunpack.c.h.b16 %v967
    %v2169 = vunpack.c.l.b16 %v968
    %v2170 = vunpack.c.h.b16 %v968
    %v2171 = vunpack.c.l.b16 %v969
    %v2172 = vunpack.c.h.b16 %v969
    %v2173 = vunpack.c.l.b16 %v970
    %v2174 = vunpack.c.h.b16 %v970
    %v2175 = vunpack.c.l.b16 %v971
    %v2176 = vunpack.c.h.b16 %v971
    %v2177 = vunpack.c.l.b16 %v972
    %v2178 = vunpack.c.h.b16 %v972
    %v2179 = vunpack.c.l.b16 %v973
    %v2180 = vunpack.c.h.b16 %v973
    %v2181 = vunpack.c.l.b16 %v974
    %v2182 = vunpack.c.h.b16 %v974
    %v2183 = vunpack.c.l.b16 %v975
    %v2184 = vunpack.c.h.b16 %v975
    %v2185 = vunpack.c.l.b16 %v976
    %v2186 = vunpack.c.h.b16 %v976
    %v2187 = vunpack.c.l.b16 %v977
    %v2188 = vunpack.c.h.b16 %v977
    %v2189 = vunpack.c.l.b16 %v978
    %v2190 = vunpack.c.h.b16 %v978
    %v2191 = vunpack.c.l.b16 %v979
    %v2192 = vunpack.c.h.b16 %v979
    %v2193 = vunpack.c.l.b16 %v980
    %v2194 = vunpack.c.h.b16 %v980
    %v2195 = vunpack.c.l.b16 %v981
    %v2196 = vunpack.c.h.b16 %v981
    %v2197 = vunpack.c.l.b16 %v982
    %v2198 = vunpack.c.h.b16 %v982
    %v2199 = vunpack.c.l.b16 %v983
    %v2200 = vunpack.c.h.b16 %v983
    %v2201 = vunpack.c.l.b16 %v984
    %v2202 = vunpack.c.h.b16 %v984
    %v2203 = vunpack.c.l.b16 %v985
    %v2204 = vunpack.c.h.b16 %v985
    %v2205 = vunpack.c.l.b16 %v986
    %v2206 = vunpack.c.h.b16 %v986
    %v2207 = vunpack.c.l.b16 %v987
    %v2208 = vunpack.c.h.b16 %v987
    %v2209 = vunpack.c.l.b16 %v988
    %v2210 = vunpack.c.h.b16 %v988
    %v2211 = vunpack.c.l.b16 %v989
    %v2212 = vunpack.c.h.b16 %v989
    %v2213 = vunpack.c.l.b16 %v990
    %v2214 = vunpack.c.h.b16 %v990
    %v2215 = vunpack.c.l.b16 %v991
    %v2216 = vunpack.c.h.b16 %v991
    %v2217 = vunpack.c.l.b16 %v992
    %v2218 = vunpack.c.h.b16 %v992
    %v2219 = vunpack.c.l.b16 %v993
    %v2220 = vunpack.c.h.b16 %v993
    %v2221 = vunpack.c.l.b16 %v994
    %v2222 = vunpack.c.h.b16 %v994
    %v2223 = vunpack.c.l.b16 %v995
    %v2224 = vunpack.c.h.b16 %v995
    %v2225 = vunpack.c.l.b16 %v996
    %v2226 = vunpack.c.h.b16 %v996
    %v2227 = vunpack.c.l.b16 %v997
    %v2228 = vunpack.c.h.b16 %v997
    %v2229 = vunpack.c.l.b16 %v998
    %v2230 = vunpack.c.h.b16 %v998
    %v2231 = vunpack.c.l.b16 %v999
    %v2232 = vunpack.c.h.b16 %v999
    %v2233 = vunpack.c.l.b16 %v1000
    %v2234 = vunpack.c.h.b16 %v1000
    %v2235 = vunpack.c.l.b16 %v1001
    %v2236 = vunpack.c.h.b16 %v1001
    %v2237 = vunpack.c.l.b16 %v1002
    %v2238 = vunpack.c.h.b16 %v1002
    %v2239 = vunpack.c.l.b16 %v1003
    %v2240 = vunpack.c.h.b16 %v1003
    %v2241 = vunpack.c.l.b16 %v1004
    %v2242 = vunpack.c.h.b16 %v1004
    %v2243 = vunpack.c.l.b16 %v1005
    %v2244 = vunpack.c.h.b16 %v1005
    %v2245 = vunpack.c.l.b16 %v1006
    %v2246 = vunpack.c.h.b16 %v1006
    %v2247 = vunpack.c.l.b16 %v1007
    %v2248 = vunpack.c.h.b16 %v1007
    %v2249 = vunpack.c.l.b16 %v1008
    %v2250 = vunpack.c.h.b16 %v1008
    %v2251 = vunpack.c.l.b16 %v1009
    %v2252 = vunpack.c.h.b16 %v1009
    %v2253 = vunpack.c.l.b16 %v1010
    %v2254 = vunpack.c.h.b16 %v1010
    %v2255 = vunpack.c.l.b16 %v1011
    %v2256 = vunpack.c.h.b16 %v1011
    %v2257 = vunpack.c.l.b16 %v1012
    %v2258 = vunpack.c.h.b16 %v1012
    %v2259 = vunpack.c.l.b16 %v1013
    %v2260 = vunpack.c.h.b16 %v1013
    %v2261 = vunpack.c.l.b16 %v1014
    %v2262 = vunpack.c.h.b16 %v1014
    %v2263 = vunpack.c.l.b16 %v1015
    %v2264 = vunpack.c.h.b16 %v1015
    %v2265 = vunpack.c.l.b16 %v1016
    %v2266 = vunpack.c.h.b16 %v1016
    %v2267 = vunpack.c.l.b16 %v1017
    %v2268 = vunpack.c.h.b16 %v1017
    %v2269 = vunpack.c.l.b16 %v1018
    %v2270 = vunpack.c.h.b16 %v1018
    %v2271 = vunpack.c.l.b16 %v1019
    %v2272 = vunpack.c.h.b16 %v1019
    %v2273 = vunpack.c.l.b16 %v1020
    %v2274 = vunpack.c.h.b16 %v1020
    %v2275 = vunpack.c.l.b16 %v1021
    %v2276 = vunpack.c.h.b16 %v1021
    %v2277 = vunpack.c.l.b16 %v1022
    %v2278 = vunpack.c.h.b16 %v1022
    %v2279 = vunpack.c.l.b16 %v1023
    %v2280 = vunpack.c.h.b16 %v1023
    %v2281 = vunpack.c.l.b16 %v1024
    %v2282 = vunpack.c.h.b16 %v1024
    %v2283 = vunpack.c.l.b16 %v1025
    %v2284 = vunpack.c.h.b16 %v1025
    %v2285 = vunpack.c.l.b16 %v1026
    %v2286 = vunpack.c.h.b16 %v1026
    %v2287 = vunpack.c.l.b16 %v1027
    %v2288 = vunpack.c.h.b16 %v1027
    %v2289 = vunpack.c.l.b16 %v1028
    %v2290 = vunpack.c.h.b16 %v1028
    %v2291 = vunpack.c.l.b16 %v1029
    %v2292 = vunpack.c.h.b16 %v1029
    %v2293 = vunpack.c.l.b16 %v1030
    %v2294 = vunpack.c.h.b16 %v1030
    %v2295 = vunpack.c.l.b16 %v1031
    %v2296 = vunpack.c.h.b16 %v1031
    %v2297 = vunpack.c.l.b16 %v1032
    %v2298 = vunpack.c.h.b16 %v1032
    %v2299 = vunpack.c.l.b16 %v1033
    %v2300 = vunpack.c.h.b16 %v1033
    %v2301 = vunpack.c.l.b16 %v1034
    %v2302 = vunpack.c.h.b16 %v1034
    %v2303 = vunpack.c.l.b16 %v1035
    %v2304 = vunpack.c.h.b16 %v1035
    %v2305 = vunpack.c.l.b16 %v1036
    %v2306 = vunpack.c.h.b16 %v1036
    %v2307 = vunpack.c.l.b16 %v1037
    %v2308 = vunpack.c.h.b16 %v1037
    %v2309 = vunpack.c.l.b16 %v1038
    %v2310 = vunpack.c.h.b16 %v1038
    %v2311 = vunpack.c.l.b16 %v1039
    %v2312 = vunpack.c.h.b16 %v1039
    %v2313 = vunpack.c.l.b16 %v1040
    %v2314 = vunpack.c.h.b16 %v1040
    %v2315 = vunpack.c.l.b16 %v1041
    %v2316 = vunpack.c.h.b16 %v1041
    %v2317 = vunpack.c.l.b16 %v1042
    %v2318 = vunpack.c.h.b16 %v1042
    %v2319 = vunpack.c.l.b16 %v1043
    %v2320 = vunpack.c.h.b16 %v1043
    %v2321 = vunpack.c.l.b16 %v1044
    %v2322 = vunpack.c.h.b16 %v1044
    %v2323 = vunpack.c.l.b16 %v1045
    %v2324 = vunpack.c.h.b16 %v1045
    %v2325 = vunpack.c.l.b16 %v1046
    %v2326 = vunpack.c.h.b16 %v1046
    %v2327 = vunpack.c.l.b16 %v1047
    %v2328 = vunpack.c.h.b16 %v1047
    %v2329 = vunpack.c.l.b16 %v1048
    %v2330 = vunpack.c.h.b16 %v1048
    %v2331 = vunpack.c.l.b16 %v1049
    %v2332 = vunpack.c.h.b16 %v1049
    %v2333 = vunpack.c.l.b16 %v1050
    %v2334 = vunpack.c.h.b16 %v1050
    %v2335 = vunpack.c.l.b16 %v1051
    %v2336 = vunpack.c.h.b16 %v1051
    %v2337 = vunpack.c.l.b16 %v1052
    %v2338 = vunpack.c.h.b16 %v1052
    %v2339 = vunpack.c.l.b16 %v1053
    %v2340 = vunpack.c.h.b16 %v1053
    %v2341 = vunpack.c.l.b16 %v1054
    %v2342 = vunpack.c.h.b16 %v1054
    %v2343 = vunpack.c.l.b16 %v1055
    %v2344 = vunpack.c.h.b16 %v1055
    %v2345 = vunpack.c.l.b16 %v1056
    %v2346 = vunpack.c.h.b16 %v1056
    %v2347 = vunpack.c.l.b16 %v1057
    %v2348 = vunpack.c.h.b16 %v1057
    %v2349 = vunpack.c.l.b16 %v1058
    %v2350 = vunpack.c.h.b16 %v1058
    %v2351 = vunpack.c.l.b16 %v1059
    %v2352 = vunpack.c.h.b16 %v1059
    %v2353 = vunpack.c.l.b16 %v1060
    %v2354 = vunpack.c.h.b16 %v1060
    %v2355 = vunpack.c.l.b16 %v1061
    %v2356 = vunpack.c.h.b16 %v1061
    %v2357 = vunpack.c.l.b16 %v1062
    %v2358 = vunpack.c.h.b16 %v1062
    %v2359 = vunpack.c.l.b16 %v1063
    %v2360 = vunpack.c.h.b16 %v1063
    %v2361 = vunpack.c.l.b16 %v1064
    %v2362 = vunpack.c.h.b16 %v1064
    %v2363 = vunpack.c.l.b16 %v1065
    %v2364 = vunpack.c.h.b16 %v1065
    %v2365 = vunpack.c.l.b16 %v1066
    %v2366 = vunpack.c.h.b16 %v1066
    %v2367 = vunpack.c.l.b16 %v1067
    %v2368 = vunpack.c.h.b16 %v1067
    %v2369 = vunpack.c.l.b16 %v1068
    %v2370 = vunpack.c.h.b16 %v1068
    %v2371 = vunpack.c.l.b16 %v1069
    %v2372 = vunpack.c.h.b16 %v1069
    %v2373 = vunpack.c.l.b16 %v1070
    %v2374 = vunpack.c.h.b16 %v1070
    %v2375 = vunpack.c.l.b16 %v1071
    %v2376 = vunpack.c.h.b16 %v1071
    %v2377 = vunpack.c.l.b16 %v1072
    %v2378 = vunpack.c.h.b16 %v1072
    %v2379 = vunpack.c.l.b16 %v1073
    %v2380 = vunpack.c.h.b16 %v1073
    %v2381 = vunpack.c.l.b16 %v1074
    %v2382 = vunpack.c.h.b16 %v1074
    %v2383 = vunpack.c.l.b16 %v1075
    %v2384 = vunpack.c.h.b16 %v1075
    %v2385 = vunpack.c.l.b16 %v1076
    %v2386 = vunpack.c.h.b16 %v1076
    %v2387 = vunpack.c.l.b16 %v1077
    %v2388 = vunpack.c.h.b16 %v1077
    %v2389 = vunpack.c.l.b16 %v1078
    %v2390 = vunpack.c.h.b16 %v1078
    %v2391 = vunpack.c.l.b16 %v1079
    %v2392 = vunpack.c.h.b16 %v1079
    %v2393 = vunpack.c.l.b16 %v1080
    %v2394 = vunpack.c.h.b16 %v1080
    %v2395 = vunpack.c.l.b16 %v1081
    %v2396 = vunpack.c.h.b16 %v1081
    %v2397 = vunpack.c.l.b16 %v1082
    %v2398 = vunpack.c.h.b16 %v1082
    %v2399 = vunpack.c.l.b16 %v1083
    %v2400 = vunpack.c.h.b16 %v1083
    %v2401 = vunpack.c.l.b16 %v1084
    %v2402 = vunpack.c.h.b16 %v1084
    %v2403 = vunpack.c.l.b16 %v1085
    %v2404 = vunpack.c.h.b16 %v1085
    %v2405 = vunpack.c.l.b16 %v1086
    %v2406 = vunpack.c.h.b16 %v1086
    %v2407 = vunpack.c.l.b16 %v1087
    %v2408 = vunpack.c.h.b16 %v1087
    %v2409 = vunpack.c.l.b16 %v1088
    %v2410 = vunpack.c.h.b16 %v1088
    %v2411 = vunpack.c.l.b16 %v1089
    %v2412 = vunpack.c.h.b16 %v1089
    %v2413 = vunpack.c.l.b16 %v1090
    %v2414 = vunpack.c.h.b16 %v1090
    %v2415 = vunpack.c.l.b16 %v1091
    %v2416 = vunpack.c.h.b16 %v1091
    %v2417 = vunpack.c.l.b16 %v1092
    %v2418 = vunpack.c.h.b16 %v1092
    %v2419 = vunpack.c.l.b16 %v1093
    %v2420 = vunpack.c.h.b16 %v1093
    %v2421 = vunpack.c.l.b16 %v1094
    %v2422 = vunpack.c.h.b16 %v1094
    %v2423 = vunpack.c.l.b16 %v1095
    %v2424 = vunpack.c.h.b16 %v1095
    %v2425 = vunpack.c.l.b16 %v1096
    %v2426 = vunpack.c.h.b16 %v1096
    %v2427 = vunpack.c.l.b16 %v1097
    %v2428 = vunpack.c.h.b16 %v1097
    %v2429 = vunpack.c.l.b16 %v1098
    %v2430 = vunpack.c.h.b16 %v1098
    %v2431 = vunpack.c.l.b16 %v1099
    %v2432 = vunpack.c.h.b16 %v1099
    %v2433 = vunpack.c.l.b16 %v1100
    %v2434 = vunpack.c.h.b16 %v1100
    %v2435 = vunpack.c.l.b16 %v1101
    %v2436 = vunpack.c.h.b16 %v1101
    %v2437 = vunpack.c.l.b16 %v1102
    %v2438 = vunpack.c.h.b16 %v1102
    %v2439 = vunpack.c.l.b16 %v1103
    %v2440 = vunpack.c.h.b16 %v1103
    %v2441 = vunpack.c.l.b16 %v1104
    %v2442 = vunpack.c.h.b16 %v1104
    %v2443 = vunpack.c.l.b16 %v1105
    %v2444 = vunpack.c.h.b16 %v1105
    %v2445 = vunpack.c.l.b16 %v1106
    %v2446 = vunpack.c.h.b16 %v1106
    %v2447 = vunpack.c.l.b16 %v1107
    %v2448 = vunpack.c.h.b16 %v1107
    %v2449 = vunpack.c.l.b16 %v1108
    %v2450 = vunpack.c.h.b16 %v1108
    %v2451 = vunpack.c.l.b16 %v1109
    %v2452 = vunpack.c.h.b16 %v1109
    %v2453 = vunpack.c.l.b16 %v1110
    %v2454 = vunpack.c.h.b16 %v1110
    %v2455 = vunpack.c.l.b16 %v1111
    %v2456 = vunpack.c.h.b16 %v1111
    %v2457 = vunpack.c.l.b16 %v1112
    %v2458 = vunpack.c.h.b16 %v1112
    %v2459 = vunpack.c.l.b16 %v1113
    %v2460 = vunpack.c.h.b16 %v1113
    %v2461 = vunpack.c.l.b16 %v1114
    %v2462 = vunpack.c.h.b16 %v1114
    %v2463 = vunpack.c.l.b16 %v1115
    %v2464 = vunpack.c.h.b16 %v1115
    %v2465 = vunpack.c.l.b16 %v1116
    %v2466 = vunpack.c.h.b16 %v1116
    %v2467 = vunpack.c.l.b16 %v1117
    %v2468 = vunpack.c.h.b16 %v1117
    %v2469 = vunpack.c.l.b16 %v1118
    %v2470 = vunpack.c.h.b16 %v1118
    %v2471 = vunpack.c.l.b16 %v1119
    %v2472 = vunpack.c.h.b16 %v1119
    %v2473 = vunpack.c.l.b16 %v1120
    %v2474 = vunpack.c.h.b16 %v1120
    %v2475 = vunpack.c.l.b16 %v1121
    %v2476 = vunpack.c.h.b16 %v1121
    %v2477 = vunpack.c.l.b16 %v1122
    %v2478 = vunpack.c.h.b16 %v1122
    %v2479 = vunpack.c.l.b16 %v1123
    %v2480 = vunpack.c.h.b16 %v1123
    %v2481 = vunpack.c.l.b16 %v1124
    %v2482 = vunpack.c.h.b16 %v1124
    %v2483 = vunpack.c.l.b16 %v1125
    %v2484 = vunpack.c.h.b16 %v1125
    %v2485 = vunpack.c.l.b16 %v1126
    %v2486 = vunpack.c.h.b16 %v1126
    %v2487 = vunpack.c.l.b16 %v1127
    %v2488 = vunpack.c.h.b16 %v1127
    %v2489 = vunpack.c.l.b16 %v1128
    %v2490 = vunpack.c.h.b16 %v1128
    %v2491 = vunpack.c.l.b16 %v1129
    %v2492 = vunpack.c.h.b16 %v1129
    %v2493 = vunpack.c.l.b16 %v1130
    %v2494 = vunpack.c.h.b16 %v1130
    %v2495 = vunpack.c.l.b16 %v1131
    %v2496 = vunpack.c.h.b16 %v1131
    %v2497 = vunpack.c.l.b16 %v1132
    %v2498 = vunpack.c.h.b16 %v1132
    %v2499 = vunpack.c.l.b16 %v1133
    %v2500 = vunpack.c.h.b16 %v1133
    %v2501 = vunpack.c.l.b16 %v1134
    %v2502 = vunpack.c.h.b16 %v1134
    %v2503 = vunpack.c.l.b16 %v1135
    %v2504 = vunpack.c.h.b16 %v1135
    %v2505 = vunpack.c.l.b16 %v1136
    %v2506 = vunpack.c.h.b16 %v1136
    %v2507 = vunpack.c.l.b16 %v1137
    %v2508 = vunpack.c.h.b16 %v1137
    %v2509 = vunpack.c.l.b16 %v1138
    %v2510 = vunpack.c.h.b16 %v1138
    %v2511 = vunpack.c.l.b16 %v1139
    %v2512 = vunpack.c.h.b16 %v1139
    %v2513 = vunpack.c.l.b16 %v1140
    %v2514 = vunpack.c.h.b16 %v1140
    %v2515 = vunpack.c.l.b16 %v1141
    %v2516 = vunpack.c.h.b16 %v1141
    %v2517 = vunpack.c.l.b16 %v1142
    %v2518 = vunpack.c.h.b16 %v1142
    %v2519 = vunpack.c.l.b16 %v1143
    %v2520 = vunpack.c.h.b16 %v1143
    %v2521 = vunpack.c.l.b16 %v1144
    %v2522 = vunpack.c.h.b16 %v1144
    %v2523 = vunpack.c.l.b16 %v1145
    %v2524 = vunpack.c.h.b16 %v1145
    %v2525 = vunpack.c.l.b16 %v1146
    %v2526 = vunpack.c.h.b16 %v1146
    %v2527 = vunpack.c.l.b16 %v1147
    %v2528 = vunpack.c.h.b16 %v1147
    %v2529 = vunpack.c.l.b16 %v1148
    %v2530 = vunpack.c.h.b16 %v1148
    %v2531 = vunpack.c.l.b16 %v1149
    %v2532 = vunpack.c.h.b16 %v1149
    %v2533 = vunpack.c.l.b16 %v1150
    %v2534 = vunpack.c.h.b16 %v1150
    %v2535 = vunpack.c.l.b16 %v1151
    %v2536 = vunpack.c.h.b16 %v1151
    %v2537 = vunpack.c.l.b16 %v1152
    %v2538 = vunpack.c.h.b16 %v1152
    %v2539 = vunpack.c.l.b16 %v1153
    %v2540 = vunpack.c.h.b16 %v1153
    %v2541 = vunpack.c.l.b16 %v1154
    %v2542 = vunpack.c.h.b16 %v1154
    %v2543 = vunpack.c.l.b16 %v1155
    %v2544 = vunpack.c.h.b16 %v1155
    %v2545 = vunpack.c.l.b16 %v1156
    %v2546 = vunpack.c.h.b16 %v1156
    %v2547 = vunpack.c.l.b16 %v1157
    %v2548 = vunpack.c.h.b16 %v1157
    %v2549 = vunpack.c.l.b16 %v1158
    %v2550 = vunpack.c.h.b16 %v1158
    %v2551 = vunpack.c.l.b16 %v1159
    %v2552 = vunpack.c.h.b16 %v1159
    %v2553 = vunpack.c.l.b16 %v1160
    %v2554 = vunpack.c.h.b16 %v1160
    %v2555 = vunpack.c.l.b16 %v1161
    %v2556 = vunpack.c.h.b16 %v1161
    %v2557 = vunpack.c.l.b16 %v1162
    %v2558 = vunpack.c.h.b16 %v1162
    %v2559 = vunpack.c.l.b16 %v1163
    %v2560 = vunpack.c.h.b16 %v1163
    %v2561 = vunpack.c.l.b16 %v1164
    %v2562 = vunpack.c.h.b16 %v1164
    %v2563 = vunpack.c.l.b16 %v1165
    %v2564 = vunpack.c.h.b16 %v1165
    %v2565 = vunpack.c.l.b16 %v1166
    %v2566 = vunpack.c.h.b16 %v1166
    %v2567 = vunpack.c.l.b16 %v1167
    %v2568 = vunpack.c.h.b16 %v1167
    %v2569 = vunpack.c.l.b16 %v1168
    %v2570 = vunpack.c.h.b16 %v1168
    %v2571 = vunpack.c.l.b16 %v1169
    %v2572 = vunpack.c.h.b16 %v1169
    %v2573 = vunpack.c.l.b16 %v1170
    %v2574 = vunpack.c.h.b16 %v1170
    %v2575 = vunpack.c.l.b16 %v1171
    %v2576 = vunpack.c.h.b16 %v1171
    %v2577 = vunpack.c.l.b16 %v1172
    %v2578 = vunpack.c.h.b16 %v1172
    %v2579 = vunpack.c.l.b16 %v1173
    %v2580 = vunpack.c.h.b16 %v1173
    %v2581 = vunpack.c.l.b16 %v1174
    %v2582 = vunpack.c.h.b16 %v1174
    %v2583 = vunpack.c.l.b16 %v1175
    %v2584 = vunpack.c.h.b16 %v1175
    %v2585 = vunpack.c.l.b16 %v1176
    %v2586 = vunpack.c.h.b16 %v1176
    %v2587 = vunpack.c.l.b16 %v1177
    %v2588 = vunpack.c.h.b16 %v1177
    %v2589 = vunpack.c.l.b16 %v1178
    %v2590 = vunpack.c.h.b16 %v1178
    %v2591 = vunpack.c.l.b16 %v1179
    %v2592 = vunpack.c.h.b16 %v1179
    %v2593 = vunpack.c.l.b16 %v1180
    %v2594 = vunpack.c.h.b16 %v1180
    %v2595 = vunpack.c.l.b16 %v1181
    %v2596 = vunpack.c.h.b16 %v1181
    %v2597 = vunpack.c.l.b16 %v1182
    %v2598 = vunpack.c.h.b16 %v1182
    %v2599 = vunpack.c.l.b16 %v1183
    %v2600 = vunpack.c.h.b16 %v1183
    %v2601 = vunpack.c.l.b16 %v1184
    %v2602 = vunpack.c.h.b16 %v1184
    %v2603 = vunpack.c.l.b16 %v1185
    %v2604 = vunpack.c.h.b16 %v1185
    %v2605 = vunpack.c.l.b16 %v1186
    %v2606 = vunpack.c.h.b16 %v1186
    %v2607 = vunpack.c.l.b16 %v1187
    %v2608 = vunpack.c.h.b16 %v1187
    %v2609 = vunpack.c.l.b16 %v1188
    %v2610 = vunpack.c.h.b16 %v1188
    %v2611 = vunpack.c.l.b16 %v1189
    %v2612 = vunpack.c.h.b16 %v1189
    %v2613 = vunpack.c.l.b16 %v1190
    %v2614 = vunpack.c.h.b16 %v1190
    %v2615 = vunpack.c.l.b16 %v1191
    %v2616 = vunpack.c.h.b16 %v1191
    %v2617 = vunpack.c.l.b16 %v1192
    %v2618 = vunpack.c.h.b16 %v1192
    %v2619 = vunpack.c.l.b16 %v1193
    %v2620 = vunpack.c.h.b16 %v1193
    %v2621 = vunpack.c.l.b16 %v1194
    %v2622 = vunpack.c.h.b16 %v1194
    %v2623 = vunpack.c.l.b16 %v1195
    %v2624 = vunpack.c.h.b16 %v1195
    %v2625 = vunpack.c.l.b16 %v1196
    %v2626 = vunpack.c.h.b16 %v1196
    %v2627 = vunpack.c.l.b16 %v1197
    %v2628 = vunpack.c.h.b16 %v1197
    %v2629 = vunpack.c.l.b16 %v1198
    %v2630 = vunpack.c.h.b16 %v1198
    %v2631 = vunpack.c.l.b16 %v1199
    %v2632 = vunpack.c.h.b16 %v1199
    %v2633 = vunpack.c.l.b16 %v1200
    %v2634 = vunpack.c.h.b16 %v1200
    %v2635 = vunpack.c.l.b16 %v1201
    %v2636 = vunpack.c.h.b16 %v1201
    %v2637 = vunpack.c.l.b16 %v1202
    %v2638 = vunpack.c.h.b16 %v1202
    %v2639 = vunpack.c.l.b16 %v1203
    %v2640 = vunpack.c.h.b16 %v1203
    %v2641 = vunpack.c.l.b16 %v1204
    %v2642 = vunpack.c.h.b16 %v1204
    %v2643 = vunpack.c.l.b16 %v1205
    %v2644 = vunpack.c.h.b16 %v1205
    %v2645 = vunpack.c.l.b16 %v1206
    %v2646 = vunpack.c.h.b16 %v1206
    %v2647 = vunpack.c.l.b16 %v1207
    %v2648 = vunpack.c.h.b16 %v1207
    %v2649 = vunpack.c.l.b16 %v1208
    %v2650 = vunpack.c.h.b16 %v1208
    %v2651 = vunpack.c.l.b16 %v1209
    %v2652 = vunpack.c.h.b16 %v1209
    %v2653 = vunpack.c.l.b16 %v1210
    %v2654 = vunpack.c.h.b16 %v1210
    %v2655 = vunpack.c.l.b16 %v1211
    %v2656 = vunpack.c.h.b16 %v1211
    %v2657 = vunpack.c.l.b16 %v1212
    %v2658 = vunpack.c.h.b16 %v1212
    %v2659 = vunpack.c.l.b16 %v1213
    %v2660 = vunpack.c.h.b16 %v1213
    %v2661 = vunpack.c.l.b16 %v1214
    %v2662 = vunpack.c.h.b16 %v1214
    %v2663 = vunpack.c.l.b16 %v1215
    %v2664 = vunpack.c.h.b16 %v1215
    %v2665 = vunpack.c.l.b16 %v1216
    %v2666 = vunpack.c.h.b16 %v1216
    %v2667 = vunpack.c.l.b16 %v1217
    %v2668 = vunpack.c.h.b16 %v1217
    %v2669 = vunpack.c.l.b16 %v1218
    %v2670 = vunpack.c.h.b16 %v1218
    %v2671 = vunpack.c.l.b16 %v1219
    %v2672 = vunpack.c.h.b16 %v1219
    %v2673 = vunpack.c.l.b16 %v1220
    %v2674 = vunpack.c.h.b16 %v1220
    %v2675 = vunpack.c.l.b16 %v1221
    %v2676 = vunpack.c.h.b16 %v1221
    %v2677 = vunpack.c.l.b16 %v1222
    %v2678 = vunpack.c.h.b16 %v1222
    %v2679 = vunpack.c.l.b16 %v1223
    %v2680 = vunpack.c.h.b16 %v1223
    %v2681 = vunpack.c.l.b16 %v1224
    %v2682 = vunpack.c.h.b16 %v1224
    %v2683 = vunpack.c.l.b16 %v1225
    %v2684 = vunpack.c.h.b16 %v1225
    %v2685 = vunpack.c.l.b16 %v1226
    %v2686 = vunpack.c.h.b16 %v1226
    %v2687 = vunpack.c.l.b16 %v1227
    %v2688 = vunpack.c.h.b16 %v1227
    %v2689 = vunpack.c.l.b16 %v1228
    %v2690 = vunpack.c.h.b16 %v1228
    %v2691 = vunpack.c.l.b16 %v1229
    %v2692 = vunpack.c.h.b16 %v1229
    %v2693 = vunpack.c.l.b16 %v1230
    %v2694 = vunpack.c.h.b16 %v1230
    %v2695 = vunpack.c.l.b16 %v1231
    %v2696 = vunpack.c.h.b16 %v1231
    %v2697 = vunpack.c.l.b16 %v1232
    %v2698 = vunpack.c.h.b16 %v1232
    %v2699 = vunpack.c.l.b16 %v1233
    %v2700 = vunpack.c.h.b16 %v1233
    %v2701 = vunpack.c.l.b16 %v1234
    %v2702 = vunpack.c.h.b16 %v1234
    %v2703 = vunpack.c.l.b16 %v1235
    %v2704 = vunpack.c.h.b16 %v1235
    %v2705 = vunpack.c.l.b16 %v1236
    %v2706 = vunpack.c.h.b16 %v1236
    %v2707 = vunpack.c.l.b16 %v1237
    %v2708 = vunpack.c.h.b16 %v1237
    %v2709 = vunpack.c.l.b16 %v1238
    %v2710 = vunpack.c.h.b16 %v1238
    %v2711 = vunpack.c.l.b16 %v1239
    %v2712 = vunpack.c.h.b16 %v1239
    %v2713 = vunpack.c.l.b16 %v1240
    %v2714 = vunpack.c.h.b16 %v1240
    %v2715 = vunpack.c.l.b16 %v1241
    %v2716 = vunpack.c.h.b16 %v1241
    %v2717 = vunpack.c.l.b16 %v1242
    %v2718 = vunpack.c.h.b16 %v1242
    %v2719 = vunpack.c.l.b16 %v1243
    %v2720 = vunpack.c.h.b16 %v1243
    %v2721 = vunpack.c.l.b16 %v1244
    %v2722 = vunpack.c.h.b16 %v1244
    %v2723 = vunpack.c.l.b16 %v1245
    %v2724 = vunpack.c.h.b16 %v1245
    %v2725 = vunpack.c.l.b16 %v1246
    %v2726 = vunpack.c.h.b16 %v1246
    %v2727 = vunpack.c.l.b16 %v1247
    %v2728 = vunpack.c.h.b16 %v1247
    %v2729 = vunpack.c.l.b16 %v1248
    %v2730 = vunpack.c.h.b16 %v1248
    %v2731 = vunpack.c.l.b16 %v1249
    %v2732 = vunpack.c.h.b16 %v1249
    %v2733 = vunpack.c.l.b16 %v1250
    %v2734 = vunpack.c.h.b16 %v1250
    %v2735 = vunpack.c.l.b16 %v1251
    %v2736 = vunpack.c.h.b16 %v1251
    %v2737 = vunpack.c.l.b16 %v1252
    %v2738 = vunpack.c.h.b16 %v1252
    %v2739 = vunpack.c.l.b16 %v1253
    %v2740 = vunpack.c.h.b16 %v1253
    %v2741 = vunpack.c.l.b16 %v1254
    %v2742 = vunpack.c.h.b16 %v1254
    %v2743 = vunpack.c.l.b16 %v1255
    %v2744 = vunpack.c.h.b16 %v1255
    %v2745 = vunpack.c.l.b16 %v1256
    %v2746 = vunpack.c.h.b16 %v1256
    %v2747 = vunpack.c.l.b16 %v1257
    %v2748 = vunpack.c.h.b16 %v1257
    %v2749 = vunpack.c.l.b16 %v1258
    %v2750 = vunpack.c.h.b16 %v1258
    %v2751 = vunpack.c.l.b16 %v1259
    %v2752 = vunpack.c.h.b16 %v1259
    %v2753 = vunpack.c.l.b16 %v1260
    %v2754 = vunpack.c.h.b16 %v1260
    %v2755 = vunpack.c.l.b16 %v1261
    %v2756 = vunpack.c.h.b16 %v1261
    %v2757 = vunpack.c.l.b16 %v1262
    %v2758 = vunpack.c.h.b16 %v1262
    %v2759 = vunpack.c.l.b16 %v1263
    %v2760 = vunpack.c.h.b16 %v1263
    %v2761 = vunpack.c.l.b16 %v1264
    %v2762 = vunpack.c.h.b16 %v1264
    %v2763 = vunpack.c.l.b16 %v1265
    %v2764 = vunpack.c.h.b16 %v1265
    %v2765 = vunpack.c.l.b16 %v1266
    %v2766 = vunpack.c.h.b16 %v1266
    %v2767 = vunpack.c.l.b16 %v1267
    %v2768 = vunpack.c.h.b16 %v1267
    %v2769 = vunpack.c.l.b16 %v1268
    %v2770 = vunpack.c.h.b16 %v1268
    %v2771 = vunpack.c.l.b16 %v1269
    %v2772 = vunpack.c.h.b16 %v1269
    %v2773 = vunpack.c.l.b16 %v1270
    %v2774 = vunpack.c.h.b16 %v1270
    %v2775 = vunpack.c.l.b16 %v1271
    %v2776 = vunpack.c.h.b16 %v1271
    %v2777 = vunpack.c.l.b16 %v1272
    %v2778 = vunpack.c.h.b16 %v1272
    %v2779 = vunpack.c.l.b16 %v1273
    %v2780 = vunpack.c.h.b16 %v1273
    %v2781 = vunpack.c.l.b16 %v1274
    %v2782 = vunpack.c.h.b16 %v1274
    %v2783 = vunpack.c.l.b16 %v1275
    %v2784 = vunpack.c.h.b16 %v1275
    %v2785 = vunpack.c.l.b16 %v1276
    %v2786 = vunpack.c.h.b16 %v1276
    %v2787 = vunpack.c.l.b16 %v1277
    %v2788 = vunpack.c.h.b16 %v1277
    %v2789 = vunpack.c.l.b16 %v1278
    %v2790 = vunpack.c.h.b16 %v1278
    %v2791 = vunpack.c.l.b16 %v1279
    %v2792 = vunpack.c.h.b16 %v1279
    %v2793 = vunpack.c.l.b16 %v1280
    %v2794 = vunpack.c.h.b16 %v1280
    %v2795 = vunpack.c.l.b16 %v1281
    %v2796 = vunpack.c.h.b16 %v1281
    %v2797 = vunpack.c.l.b16 %v1282
    %v2798 = vunpack.c.h.b16 %v1282
    %v2799 = vunpack.c.l.b16 %v1283
    %v2800 = vunpack.c.h.b16 %v1283
    %v2801 = vunpack.c.l.b16 %v1284
    %v2802 = vunpack.c.h.b16 %v1284
    %v2803 = vunpack.c.l.b16 %v1285
    %v2804 = vunpack.c.h.b16 %v1285
    %v2805 = vunpack.c.l.b16 %v1286
    %v2806 = vunpack.c.h.b16 %v1286
    %v2807 = vunpack.c.l.b16 %v1287
    %v2808 = vunpack.c.h.b16 %v1287
    %v2809 = vunpack.c.l.b16 %v1288
    %v2810 = vunpack.c.h.b16 %v1288
    %v2811 = vunpack.c.l.b16 %v1289
    %v2812 = vunpack.c.h.b16 %v1289
    %v2813 = vunpack.c.l.b16 %v1290
    %v2814 = vunpack.c.h.b16 %v1290
    %v2815 = vunpack.c.l.b16 %v1291
    %v2816 = vunpack.c.h.b16 %v1291
    %v2817 = vunpack.c.l.b16 %v1292
    %v2818 = vunpack.c.h.b16 %v1292
    %v2819 = vunpack.c.l.b16 %v1293
    %v2820 = vunpack.c.h.b16 %v1293
    %v2821 = vunpack.c.l.b16 %v1294
    %v2822 = vunpack.c.h.b16 %v1294
    %v2823 = vunpack.c.l.b16 %v1295
    %v2824 = vunpack.c.h.b16 %v1295
    %v2825 = vunpack.c.l.b16 %v1296
    %v2826 = vunpack.c.h.b16 %v1296
    %v2827 = vunpack.c.l.b16 %v1297
    %v2828 = vunpack.c.h.b16 %v1297
    %v2829 = vunpack.c.l.b16 %v1298
    %v2830 = vunpack.c.h.b16 %v1298
    %v2831 = vunpack.c.l.b16 %v1299
    %v2832 = vunpack.c.h.b16 %v1299
    %v2833 = vunpack.c.l.b16 %v1300
    %v2834 = vunpack.c.h.b16 %v1300
    %v2835 = vunpack.c.l.b16 %v1301
    %v2836 = vunpack.c.h.b16 %v1301
    %v2837 = vunpack.c.l.b16 %v1302
    %v2838 = vunpack.c.h.b16 %v1302
    %v2839 = vunpack.c.l.b16 %v1303
    %v2840 = vunpack.c.h.b16 %v1303
    %v2841 = vunpack.c.l.b16 %v1304
    %v2842 = vunpack.c.h.b16 %v1304
    %v2843 = vunpack.c.l.b16 %v1305
    %v2844 = vunpack.c.h.b16 %v1305
    %v2845 = vunpack.c.l.b16 %v1306
    %v2846 = vunpack.c.h.b16 %v1306
    %v2847 = vunpack.c.l.b16 %v1307
    %v2848 = vunpack.c.h.b16 %v1307
    %v2849 = vunpack.c.l.b16 %v1308
    %v2850 = vunpack.c.h.b16 %v1308
    %v2851 = vunpack.c.l.b16 %v1309
    %v2852 = vunpack.c.h.b16 %v1309
    %v2853 = vunpack.c.l.b16 %v1310
    %v2854 = vunpack.c.h.b16 %v1310
    %v2855 = vunpack.c.l.b16 %v1311
    %v2856 = vunpack.c.h.b16 %v1311
    %v2857 = vunpack.c.l.b16 %v1312
    %v2858 = vunpack.c.h.b16 %v1312
    %v2859 = vunpack.c.l.b16 %v1313
    %v2860 = vunpack.c.h.b16 %v1313
    %v2861 = vunpack.c.l.b16 %v1314
    %v2862 = vunpack.c.h.b16 %v1314
    %v2863 = vunpack.c.l.b16 %v1315
    %v2864 = vunpack.c.h.b16 %v1315
    %v2865 = vunpack.c.l.b16 %v1316
    %v2866 = vunpack.c.h.b16 %v1316
    %v2867 = vunpack.c.l.b16 %v1317
    %v2868 = vunpack.c.h.b16 %v1317
    %v2869 = vunpack.c.l.b16 %v1318
    %v2870 = vunpack.c.h.b16 %v1318
    %v2871 = vunpack.c.l.b16 %v1319
    %v2872 = vunpack.c.h.b16 %v1319
    %v2873 = vunpack.c.l.b16 %v1320
    %v2874 = vunpack.c.h.b16 %v1320
    %v2875 = vunpack.c.l.b16 %v1321
    %v2876 = vunpack.c.h.b16 %v1321
    %v2877 = vunpack.c.l.b16 %v1322
    %v2878 = vunpack.c.h.b16 %v1322
    %v2879 = vunpack.c.l.b16 %v1323
    %v2880 = vunpack.c.h.b16 %v1323
    %v2881 = vunpack.c.l.b16 %v1324
    %v2882 = vunpack.c.h.b16 %v1324
    %v2883 = vpack.c.b16 %v1863, %v1859
    %v2884 = vpack.c.b16 %v1864, %v1860
    %v2885 = vpack.c.b16 %v1865, %v1861
    %v2886 = vpack.c.b16 %v1866, %v1862
    %v2887 = vpack.c.b16 %v1871, %v1867
    %v2888 = vpack.c.b16 %v1872, %v1868
    %v2889 = vpack.c.b16 %v1873, %v1869
    %v2890 = vpack.c.b16 %v1874, %v1870
    %v2891 = vpack.c.b16 %v1879, %v1875
    %v2892 = vpack.c.b16 %v1880, %v1876
    %v2893 = vpack.c.b16 %v1881, %v1877
    %v2894 = vpack.c.b16 %v1882, %v1878
    %v2895 = vpack.c.b16 %v1887, %v1883
    %v2896 = vpack.c.b16 %v1888, %v1884
    %v2897 = vpack.c.b16 %v1889, %v1885
    %v2898 = vpack.c.b16 %v1890, %v1886
    %v2899 = vpack.c.b16 %v1895, %v1891
    %v2900 = vpack.c.b16 %v1896, %v1892
    %v2901 = vpack.c.b16 %v1897, %v1893
    %v2902 = vpack.c.b16 %v1898, %v1894
    %v2903 = vpack.c.b16 %v1903, %v1899
    %v2904 = vpack.c.b16 %v1904, %v1900
    %v2905 = vpack.c.b16 %v1905, %v1901
    %v2906 = vpack.c.b16 %v1906, %v1902
    %v2907 = vpack.c.b16 %v1911, %v1907
    %v2908 = vpack.c.b16 %v1912, %v1908
    %v2909 = vpack.c.b16 %v1913, %v1909
    %v2910 = vpack.c.b16 %v1914, %v1910
    %v2911 = vpack.c.b16 %v1919, %v1915
    %v2912 = vpack.c.b16 %v1920, %v1916
    %v2913 = vpack.c.b16 %v1921, %v1917
    %v2914 = vpack.c.b16 %v1922, %v1918
    %v2915 = vpack.c.b16 %v1927, %v1923
    %v2916 = vpack.c.b16 %v1928, %v1924
    %v2917 = vpack.c.b16 %v1929, %v1925
    %v2918 = vpack.c.b16 %v1930, %v1926
    %v2919 = vpack.c.b16 %v1935, %v1931
    %v2920 = vpack.c.b16 %v1936, %v1932
    %v2921 = vpack.c.b16 %v1937, %v1933
    %v2922 = vpack.c.b16 %v1938, %v1934
    %v2923 = vpack.c.b16 %v1943, %v1939
    %v2924 = vpack.c.b16 %v1944, %v1940
    %v2925 = vpack.c.b16 %v1945, %v1941
    %v2926 = vpack.c.b16 %v1946, %v1942
    %v2927 = vpack.c.b16 %v1951, %v1947
    %v2928 = vpack.c.b16 %v1952, %v1948
    %v2929 = vpack.c.b16 %v1953, %v1949
    %v2930 = vpack.c.b16 %v1954, %v1950
    %v2931 = vpack.c.b16 %v1959, %v1955
    %v2932 = vpack.c.b16 %v1960, %v1956
    %v2933 = vpack.c.b16 %v1961, %v1957
    %v2934 = vpack.c.b16 %v1962, %v1958
    %v2935 = vpack.c.b16 %v1967, %v1963
    %v2936 = vpack.c.b16 %v1968, %v1964
    %v2937 = vpack.c.b16 %v1969, %v1965
    %v2938 = vpack.c.b16 %v1970, %v1966
    %v2939 = vpack.c.b16 %v1975, %v1971
    %v2940 = vpack.c.b16 %v1976, %v1972
    %v2941 = vpack.c.b16 %v1977, %v1973
    %v2942 = vpack.c.b16 %v1978, %v1974
    %v2943 = vpack.c.b16 %v1983, %v1979
    %v2944 = vpack.c.b16 %v1984, %v1980
    %v2945 = vpack.c.b16 %v1985, %v1981
    %v2946 = vpack.c.b16 %v1986, %v1982
    %v2947 = vpack.c.b16 %v1991, %v1987
    %v2948 = vpack.c.b16 %v1992, %v1988
    %v2949 = vpack.c.b16 %v1993, %v1989
    %v2950 = vpack.c.b16 %v1994, %v1990
    %v2951 = vpack.c.b16 %v1999, %v1995
    %v2952 = vpack.c.b16 %v2000, %v1996
    %v2953 = vpack.c.b16 %v2001, %v1997
    %v2954 = vpack.c.b16 %v2002, %v1998
    %v2955 = vpack.c.b16 %v2007, %v2003
    %v2956 = vpack.c.b16 %v2008, %v2004
    %v2957 = vpack.c.b16 %v2009, %v2005
    %v2958 = vpack.c.b16 %v2010, %v2006
    %v2959 = vpack.c.b16 %v2015, %v2011
    %v2960 = vpack.c.b16 %v2016, %v2012
    %v2961 = vpack.c.b16 %v2017, %v2013
    %v2962 = vpack.c.b16 %v2018, %v2014
    %v2963 = vpack.c.b16 %v2023, %v2019
    %v2964 = vpack.c.b16 %v2024, %v2020
    %v2965 = vpack.c.b16 %v2025, %v2021
    %v2966 = vpack.c.b16 %v2026, %v2022
    %v2967 = vpack.c.b16 %v2031, %v2027
    %v2968 = vpack.c.b16 %v2032, %v2028
    %v2969 = vpack.c.b16 %v2033, %v2029
    %v2970 = vpack.c.b16 %v2034, %v2030
    %v2971 = vpack.c.b16 %v2039, %v2035
    %v2972 = vpack.c.b16 %v2040, %v2036
    %v2973 = vpack.c.b16 %v2041, %v2037
    %v2974 = vpack.c.b16 %v2042, %v2038
    %v2975 = vpack.c.b16 %v2047, %v2043
    %v2976 = vpack.c.b16 %v2048, %v2044
    %v2977 = vpack.c.b16 %v2049, %v2045
    %v2978 = vpack.c.b16 %v2050, %v2046
    %v2979 = vpack.c.b16 %v2055, %v2051
    %v2980 = vpack.c.b16 %v2056, %v2052
    %v2981 = vpack.c.b16 %v2057, %v2053
    %v2982 = vpack.c.b16 %v2058, %v2054
    %v2983 = vpack.c.b16 %v2063, %v2059
    %v2984 = vpack.c.b16 %v2064, %v2060
    %v2985 = vpack.c.b16 %v2065, %v2061
    %v2986 = vpack.c.b16 %v2066, %v2062
    %v2987 = vpack.c.b16 %v2071, %v2067
    %v2988 = vpack.c.b16 %v2072, %v2068
    %v2989 = vpack.c.b16 %v2073, %v2069
    %v2990 = vpack.c.b16 %v2074, %v2070
    %v2991 = vpack.c.b16 %v2079, %v2075
    %v2992 = vpack.c.b16 %v2080, %v2076
    %v2993 = vpack.c.b16 %v2081, %v2077
    %v2994 = vpack.c.b16 %v2082, %v2078
    %v2995 = vpack.c.b16 %v2087, %v2083
    %v2996 = vpack.c.b16 %v2088, %v2084
    %v2997 = vpack.c.b16 %v2089, %v2085
    %v2998 = vpack.c.b16 %v2090, %v2086
    %v2999 = vpack.c.b16 %v2095, %v2091
    %v3000 = vpack.c.b16 %v2096, %v2092
    %v3001 = vpack.c.b16 %v2097, %v2093
    %v3002 = vpack.c.b16 %v2098, %v2094
    %v3003 = vpack.c.b16 %v2103, %v2099
    %v3004 = vpack.c.b16 %v2104, %v2100
    %v3005 = vpack.c.b16 %v2105, %v2101
    %v3006 = vpack.c.b16 %v2106, %v2102
    %v3007 = vpack.c.b16 %v2111, %v2107
    %v3008 = vpack.c.b16 %v2112, %v2108
    %v3009 = vpack.c.b16 %v2113, %v2109
    %v3010 = vpack.c.b16 %v2114, %v2110
    %v3011 = vpack.c.b16 %v2119, %v2115
    %v3012 = vpack.c.b16 %v2120, %v2116
    %v3013 = vpack.c.b16 %v2121, %v2117
    %v3014 = vpack.c.b16 %v2122, %v2118
    %v3015 = vpack.c.b16 %v2127, %v2123
    %v3016 = vpack.c.b16 %v2128, %v2124
    %v3017 = vpack.c.b16 %v2129, %v2125
    %v3018 = vpack.c.b16 %v2130, %v2126
    %v3019 = vpack.c.b16 %v2135, %v2131
    %v3020 = vpack.c.b16 %v2136, %v2132
    %v3021 = vpack.c.b16 %v2137, %v2133
    %v3022 = vpack.c.b16 %v2138, %v2134
    %v3023 = vpack.c.b16 %v2143, %v2139
    %v3024 = vpack.c.b16 %v2144, %v2140
    %v3025 = vpack.c.b16 %v2145, %v2141
    %v3026 = vpack.c.b16 %v2146, %v2142
    %v3027 = vpack.c.b16 %v2151, %v2147
    %v3028 = vpack.c.b16 %v2152, %v2148
    %v3029 = vpack.c.b16 %v2153, %v2149
    %v3030 = vpack.c.b16 %v2154, %v2150
    %v3031 = vpack.c.b16 %v2159, %v2155
    %v3032 = vpack.c.b16 %v2160, %v2156
    %v3033 = vpack.c.b16 %v2161, %v2157
    %v3034 = vpack.c.b16 %v2162, %v2158
    %v3035 = vpack.c.b16 %v2167, %v2163
    %v3036 = vpack.c.b16 %v2168, %v2164
    %v3037 = vpack.c.b16 %v2169, %v2165
    %v3038 = vpack.c.b16 %v2170, %v2166
    %v3039 = vpack.c.b16 %v2175, %v2171
    %v3040 = vpack.c.b16 %v2176, %v2172
    %v3041 = vpack.c.b16 %v2177, %v2173
    %v3042 = vpack.c.b16 %v2178, %v2174
    %v3043 = vpack.c.b16 %v2183, %v2179
    %v3044 = vpack.c.b16 %v2184, %v2180
    %v3045 = vpack.c.b16 %v2185, %v2181
    %v3046 = vpack.c.b16 %v2186, %v2182
    %v3047 = vpack.c.b16 %v2191, %v2187
    %v3048 = vpack.c.b16 %v2192, %v2188
    %v3049 = vpack.c.b16 %v2193, %v2189
    %v3050 = vpack.c.b16 %v2194, %v2190
    %v3051 = vpack.c.b16 %v2199, %v2195
    %v3052 = vpack.c.b16 %v2200, %v2196
    %v3053 = vpack.c.b16 %v2201, %v2197
    %v3054 = vpack.c.b16 %v2202, %v2198
    %v3055 = vpack.c.b16 %v2207, %v2203
    %v3056 = vpack.c.b16 %v2208, %v2204
    %v3057 = vpack.c.b16 %v2209, %v2205
    %v3058 = vpack.c.b16 %v2210, %v2206
    %v3059 = vpack.c.b16 %v2215, %v2211
    %v3060 = vpack.c.b16 %v2216, %v2212
    %v3061 = vpack.c.b16 %v2217, %v2213
    %v3062 = vpack.c.b16 %v2218, %v2214
    %v3063 = vpack.c.b16 %v2223, %v2219
    %v3064 = vpack.c.b16 %v2224, %v2220
    %v3065 = vpack.c.b16 %v2225, %v2221
    %v3066 = vpack.c.b16 %v2226, %v2222
    %v3067 = vpack.c.b16 %v2231, %v2227
    %v3068 = vpack.c.b16 %v2232, %v2228
    %v3069 = vpack.c.b16 %v2233, %v2229
    %v3070 = vpack.c.b16 %v2234, %v2230
    %v3071 = vpack.c.b16 %v2239, %v2235
    %v3072 = vpack.c.b16 %v2240, %v2236
    %v3073 = vpack.c.b16 %v2241, %v2237
    %v3074 = vpack.c.b16 %v2242, %v2238
    %v3075 = vpack.c.b16 %v2247, %v2243
    %v3076 = vpack.c.b16 %v2248, %v2244
    %v3077 = vpack.c.b16 %v2249, %v2245
    %v3078 = vpack.c.b16 %v2250, %v2246
    %v3079 = vpack.c.b16 %v2255, %v2251
    %v3080 = vpack.c.b16 %v2256, %v2252
    %v3081 = vpack.c.b16 %v2257, %v2253
    %v3082 = vpack.c.b16 %v2258, %v2254
    %v3083 = vpack.c.b16 %v2263, %v2259
    %v3084 = vpack.c.b16 %v2264, %v2260
    %v3085 = vpack.c.b16 %v2265, %v2261
    %v3086 = vpack.c.b16 %v2266, %v2262
    %v3087 = vpack.c.b16 %v2271, %v2267
    %v3088 = vpack.c.b16 %v2272, %v2268
    %v3089 = vpack.c.b16 %v2273, %v2269
    %v3090 = vpack.c.b16 %v2274, %v2270
    %v3091 = vpack.c.b16 %v2279, %v2275
    %v3092 = vpack.c.b16 %v2280, %v2276
    %v3093 = vpack.c.b16 %v2281, %v2277
    %v3094 = vpack.c.b16 %v2282, %v2278
    %v3095 = vpack.c.b16 %v2287, %v2283
    %v3096 = vpack.c.b16 %v2288, %v2284
    %v3097 = vpack.c.b16 %v2289, %v2285
    %v3098 = vpack.c.b16 %v2290, %v2286
    %v3099 = vpack.c.b16 %v2295, %v2291
    %v3100 = vpack.c.b16 %v2296, %v2292
    %v3101 = vpack.c.b16 %v2297, %v2293
    %v3102 = vpack.c.b16 %v2298, %v2294
    %v3103 = vpack.c.b16 %v2303, %v2299
    %v3104 = vpack.c.b16 %v2304, %v2300
    %v3105 = vpack.c.b16 %v2305, %v2301
    %v3106 = vpack.c.b16 %v2306, %v2302
    %v3107 = vpack.c.b16 %v2311, %v2307
    %v3108 = vpack.c.b16 %v2312, %v2308
    %v3109 = vpack.c.b16 %v2313, %v2309
    %v3110 = vpack.c.b16 %v2314, %v2310
    %v3111 = vpack.c.b16 %v2319, %v2315
    %v3112 = vpack.c.b16 %v2320, %v2316
    %v3113 = vpack.c.b16 %v2321, %v2317
    %v3114 = vpack.c.b16 %v2322, %v2318
    %v3115 = vpack.c.b16 %v2327, %v2323
    %v3116 = vpack.c.b16 %v2328, %v2324
    %v3117 = vpack.c.b16 %v2329, %v2325
    %v3118 = vpack.c.b16 %v2330, %v2326
    %v3119 = vpack.c.b16 %v2335, %v2331
    %v3120 = vpack.c.b16 %v2336, %v2332
    %v3121 = vpack.c.b16 %v2337, %v2333
    %v3122 = vpack.c.b16 %v2338, %v2334
    %v3123 = vpack.c.b16 %v2343, %v2339
    %v3124 = vpack.c.b16 %v2344, %v2340
    %v3125 = vpack.c.b16 %v2345, %v2341
    %v3126 = vpack.c.b16 %v2346, %v2342
    %v3127 = vpack.c.b16 %v2351, %v2347
    %v3128 = vpack.c.b16 %v2352, %v2348
    %v3129 = vpack.c.b16 %v2353, %v2349
    %v3130 = vpack.c.b16 %v2354, %v2350
    %v3131 = vpack.c.b16 %v2359, %v2355
    %v3132 = vpack.c.b16 %v2360, %v2356
    %v3133 = vpack.c.b16 %v2361, %v2357
    %v3134 = vpack.c.b16 %v2362, %v2358
    %v3135 = vpack.c.b16 %v2367, %v2363
    %v3136 = vpack.c.b16 %v2368, %v2364
    %v3137 = vpack.c.b16 %v2369, %v2365
    %v3138 = vpack.c.b16 %v2370, %v2366
    %v3139 = vpack.c.b16 %v2375, %v2371
    %v3140 = vpack.c.b16 %v2376, %v2372
    %v3141 = vpack.c.b16 %v2377, %v2373
    %v3142 = vpack.c.b16 %v2378, %v2374
    %v3143 = vpack.c.b16 %v2383, %v2379
    %v3144 = vpack.c.b16 %v2384, %v2380
    %v3145 = vpack.c.b16 %v2385, %v2381
    %v3146 = vpack.c.b16 %v2386, %v2382
    %v3147 = vpack.c.b16 %v2391, %v2387
    %v3148 = vpack.c.b16 %v2392, %v2388
    %v3149 = vpack.c.b16 %v2393, %v2389
    %v3150 = vpack.c.b16 %v2394, %v2390
    %v3151 = vpack.c.b16 %v2399, %v2395
    %v3152 = vpack.c.b16 %v2400, %v2396
    %v3153 = vpack.c.b16 %v2401, %v2397
    %v3154 = vpack.c.b16 %v2402, %v2398
    %v3155 = vpack.c.b16 %v2407, %v2403
    %v3156 = vpack.c.b16 %v2408, %v2404
    %v3157 = vpack.c.b16 %v2409, %v2405
    %v3158 = vpack.c.b16 %v2410, %v2406
    %v3159 = vpack.c.b16 %v2415, %v2411
    %v3160 = vpack.c.b16 %v2416, %v2412
    %v3161 = vpack.c.b16 %v2417, %v2413
    %v3162 = vpack.c.b16 %v2418, %v2414
    %v3163 = vpack.c.b16 %v2423, %v2419
    %v3164 = vpack.c.b16 %v2424, %v2420
    %v3165 = vpack.c.b16 %v2425, %v2421
    %v3166 = vpack.c.b16 %v2426, %v2422
    %v3167 = vpack.c.b16 %v2431, %v2427
    %v3168 = vpack.c.b16 %v2432, %v2428
    %v3169 = vpack.c.b16 %v2433, %v2429
    %v3170 = vpack.c.b16 %v2434, %v2430
    %v3171 = vpack.c.b16 %v2439, %v2435
    %v3172 = vpack.c.b16 %v2440, %v2436
    %v3173 = vpack.c.b16 %v2441, %v2437
    %v3174 = vpack.c.b16 %v2442, %v2438
    %v3175 = vpack.c.b16 %v2447, %v2443
    %v3176 = vpack.c.b16 %v2448, %v2444
    %v3177 = vpack.c.b16 %v2449, %v2445
    %v3178 = vpack.c.b16 %v2450, %v2446
    %v3179 = vpack.c.b16 %v2455, %v2451
    %v3180 = vpack.c.b16 %v2456, %v2452
    %v3181 = vpack.c.b16 %v2457, %v2453
    %v3182 = vpack.c.b16 %v2458, %v2454
    %v3183 = vpack.c.b16 %v2463, %v2459
    %v3184 = vpack.c.b16 %v2464, %v2460
    %v3185 = vpack.c.b16 %v2465, %v2461
    %v3186 = vpack.c.b16 %v2466, %v2462
    %v3187 = vpack.c.b16 %v2471, %v2467
    %v3188 = vpack.c.b16 %v2472, %v2468
    %v3189 = vpack.c.b16 %v2473, %v2469
    %v3190 = vpack.c.b16 %v2474, %v2470
    %v3191 = vpack.c.b16 %v2479, %v2475
    %v3192 = vpack.c.b16 %v2480, %v2476
    %v3193 = vpack.c.b16 %v2481, %v2477
    %v3194 = vpack.c.b16 %v2482, %v2478
    %v3195 = vpack.c.b16 %v2487, %v2483
    %v3196 = vpack.c.b16 %v2488, %v2484
    %v3197 = vpack.c.b16 %v2489, %v2485
    %v3198 = vpack.c.b16 %v2490, %v2486
    %v3199 = vpack.c.b16 %v2495, %v2491
    %v3200 = vpack.c.b16 %v2496, %v2492
    %v3201 = vpack.c.b16 %v2497, %v2493
    %v3202 = vpack.c.b16 %v2498, %v2494
    %v3203 = vpack.c.b16 %v2503, %v2499
    %v3204 = vpack.c.b16 %v2504, %v2500
    %v3205 = vpack.c.b16 %v2505, %v2501
    %v3206 = vpack.c.b16 %v2506, %v2502
    %v3207 = vpack.c.b16 %v2511, %v2507
    %v3208 = vpack.c.b16 %v2512, %v2508
    %v3209 = vpack.c.b16 %v2513, %v2509
    %v3210 = vpack.c.b16 %v2514, %v2510
    %v3211 = vpack.c.b16 %v2519, %v2515
    %v3212 = vpack.c.b16 %v2520, %v2516
    %v3213 = vpack.c.b16 %v2521, %v2517
    %v3214 = vpack.c.b16 %v2522, %v2518
    %v3215 = vpack.c.b16 %v2527, %v2523
    %v3216 = vpack.c.b16 %v2528, %v2524
    %v3217 = vpack.c.b16 %v2529, %v2525
    %v3218 = vpack.c.b16 %v2530, %v2526
    %v3219 = vpack.c.b16 %v2535, %v2531
    %v3220 = vpack.c.b16 %v2536, %v2532
    %v3221 = vpack.c.b16 %v2537, %v2533
    %v3222 = vpack.c.b16 %v2538, %v2534
    %v3223 = vpack.c.b16 %v2543, %v2539
    %v3224 = vpack.c.b16 %v2544, %v2540
    %v3225 = vpack.c.b16 %v2545, %v2541
    %v3226 = vpack.c.b16 %v2546, %v2542
    %v3227 = vpack.c.b16 %v2551, %v2547
    %v3228 = vpack.c.b16 %v2552, %v2548
    %v3229 = vpack.c.b16 %v2553, %v2549
    %v3230 = vpack.c.b16 %v2554, %v2550
    %v3231 = vpack.c.b16 %v2559, %v2555
    %v3232 = vpack.c.b16 %v2560, %v2556
    %v3233 = vpack.c.b16 %v2561, %v2557
    %v3234 = vpack.c.b16 %v2562, %v2558
    %v3235 = vpack.c.b16 %v2567, %v2563
    %v3236 = vpack.c.b16 %v2568, %v2564
    %v3237 = vpack.c.b16 %v2569, %v2565
    %v3238 = vpack.c.b16 %v2570, %v2566
    %v3239 = vpack.c.b16 %v2575, %v2571
    %v3240 = vpack.c.b16 %v2576, %v2572
    %v3241 = vpack.c.b16 %v2577, %v2573
    %v3242 = vpack.c.b16 %v2578, %v2574
    %v3243 = vpack.c.b16 %v2583, %v2579
    %v3244 = vpack.c.b16 %v2584, %v2580
    %v3245 = vpack.c.b16 %v2585, %v2581
    %v3246 = vpack.c.b16 %v2586, %v2582
    %v3247 = vpack.c.b16 %v2591, %v2587
    %v3248 = vpack.c.b16 %v2592, %v2588
    %v3249 = vpack.c.b16 %v2593, %v2589
    %v3250 = vpack.c.b16 %v2594, %v2590
    %v3251 = vpack.c.b16 %v2599, %v2595
    %v3252 = vpack.c.b16 %v2600, %v2596
    %v3253 = vpack.c.b16 %v2601, %v2597
    %v3254 = vpack.c.b16 %v2602, %v2598
    %v3255 = vpack.c.b16 %v2607, %v2603
    %v3256 = vpack.c.b16 %v2608, %v2604
    %v3257 = vpack.c.b16 %v2609, %v2605
    %v3258 = vpack.c.b16 %v2610, %v2606
    %v3259 = vpack.c.b16 %v2615, %v2611
    %v3260 = vpack.c.b16 %v2616, %v2612
    %v3261 = vpack.c.b16 %v2617, %v2613
    %v3262 = vpack.c.b16 %v2618, %v2614
    %v3263 = vpack.c.b16 %v2623, %v2619
    %v3264 = vpack.c.b16 %v2624, %v2620
    %v3265 = vpack.c.b16 %v2625, %v2621
    %v3266 = vpack.c.b16 %v2626, %v2622
    %v3267 = vpack.c.b16 %v2631, %v2627
    %v3268 = vpack.c.b16 %v2632, %v2628
    %v3269 = vpack.c.b16 %v2633, %v2629
    %v3270 = vpack.c.b16 %v2634, %v2630
    %v3271 = vpack.c.b16 %v2639, %v2635
    %v3272 = vpack.c.b16 %v2640, %v2636
    %v3273 = vpack.c.b16 %v2641, %v2637
    %v3274 = vpack.c.b16 %v2642, %v2638
    %v3275 = vpack.c.b16 %v2647, %v2643
    %v3276 = vpack.c.b16 %v2648, %v2644
    %v3277 = vpack.c.b16 %v2649, %v2645
    %v3278 = vpack.c.b16 %v2650, %v2646
    %v3279 = vpack.c.b16 %v2655, %v2651
    %v3280 = vpack.c.b16 %v2656, %v2652
    %v3281 = vpack.c.b16 %v2657, %v2653
    %v3282 = vpack.c.b16 %v2658, %v2654
    %v3283 = vpack.c.b16 %v2663, %v2659
    %v3284 = vpack.c.b16 %v2664, %v2660
    %v3285 = vpack.c.b16 %v2665, %v2661
    %v3286 = vpack.c.b16 %v2666, %v2662
    %v3287 = vpack.c.b16 %v2671, %v2667
    %v3288 = vpack.c.b16 %v2672, %v2668
    %v3289 = vpack.c.b16 %v2673, %v2669
    %v3290 = vpack.c.b16 %v2674, %v2670
    %v3291 = vpack.c.b16 %v2679, %v2675
    %v3292 = vpack.c.b16 %v2680, %v2676
    %v3293 = vpack.c.b16 %v2681, %v2677
    %v3294 = vpack.c.b16 %v2682, %v2678
    %v3295 = vpack.c.b16 %v2687, %v2683
    %v3296 = vpack.c.b16 %v2688, %v2684
    %v3297 = vpack.c.b16 %v2689, %v2685
    %v3298 = vpack.c.b16 %v2690, %v2686
    %v3299 = vpack.c.b16 %v2695, %v2691
    %v3300 = vpack.c.b16 %v2696, %v2692
    %v3301 = vpack.c.b16 %v2697, %v2693
    %v3302 = vpack.c.b16 %v2698, %v2694
    %v3303 = vpack.c.b16 %v2703, %v2699
    %v3304 = vpack.c.b16 %v2704, %v2700
    %v3305 = vpack.c.b16 %v2705, %v2701
    %v3306 = vpack.c.b16 %v2706, %v2702
    %v3307 = vpack.c.b16 %v2711, %v2707
    %v3308 = vpack.c.b16 %v2712, %v2708
    %v3309 = vpack.c.b16 %v2713, %v2709
    %v3310 = vpack.c.b16 %v2714, %v2710
    %v3311 = vpack.c.b16 %v2719, %v2715
    %v3312 = vpack.c.b16 %v2720, %v2716
    %v3313 = vpack.c.b16 %v2721, %v2717
    %v3314 = vpack.c.b16 %v2722, %v2718
    %v3315 = vpack.c.b16 %v2727, %v2723
    %v3316 = vpack.c.b16 %v2728, %v2724
    %v3317 = vpack.c.b16 %v2729, %v2725
    %v3318 = vpack.c.b16 %v2730, %v2726
    %v3319 = vpack.c.b16 %v2735, %v2731
    %v3320 = vpack.c.b16 %v2736, %v2732
    %v3321 = vpack.c.b16 %v2737, %v2733
    %v3322 = vpack.c.b16 %v2738, %v2734
    %v3323 = vpack.c.b16 %v2743, %v2739
    %v3324 = vpack.c.b16 %v2744, %v2740
    %v3325 = vpack.c.b16 %v2745, %v2741
    %v3326 = vpack.c.b16 %v2746, %v2742
    %v3327 = vpack.c.b16 %v2751, %v2747
    %v3328 = vpack.c.b16 %v2752, %v2748
    %v3329 = vpack.c.b16 %v2753, %v2749
    %v3330 = vpack.c.b16 %v2754, %v2750
    %v3331 = vpack.c.b16 %v2759, %v2755
    %v3332 = vpack.c.b16 %v2760, %v2756
    %v3333 = vpack.c.b16 %v2761, %v2757
    %v3334 = vpack.c.b16 %v2762, %v2758
    %v3335 = vpack.c.b16 %v2767, %v2763
    %v3336 = vpack.c.b16 %v2768, %v2764
    %v3337 = vpack.c.b16 %v2769, %v2765
    %v3338 = vpack.c.b16 %v2770, %v2766
    %v3339 = vpack.c.b16 %v2775, %v2771
    %v3340 = vpack.c.b16 %v2776, %v2772
    %v3341 = vpack.c.b16 %v2777, %v2773
    %v3342 = vpack.c.b16 %v2778, %v2774
    %v3343 = vpack.c.b16 %v2783, %v2779
    %v3344 = vpack.c.b16 %v2784, %v2780
    %v3345 = vpack.c.b16 %v2785, %v2781
    %v3346 = vpack.c.b16 %v2786, %v2782
    %v3347 = vpack.c.b16 %v2791, %v2787
    %v3348 = vpack.c.b16 %v2792, %v2788
    %v3349 = vpack.c.b16 %v2793, %v2789
    %v3350 = vpack.c.b16 %v2794, %v2790
    %v3351 = vpack.c.b16 %v2799, %v2795
    %v3352 = vpack.c.b16 %v2800, %v2796
    %v3353 = vpack.c.b16 %v2801, %v2797
    %v3354 = vpack.c.b16 %v2802, %v2798
    %v3355 = vpack.c.b16 %v2807, %v2803
    %v3356 = vpack.c.b16 %v2808, %v2804
    %v3357 = vpack.c.b16 %v2809, %v2805
    %v3358 = vpack.c.b16 %v2810, %v2806
    %v3359 = vpack.c.b16 %v2815, %v2811
    %v3360 = vpack.c.b16 %v2816, %v2812
    %v3361 = vpack.c.b16 %v2817, %v2813
    %v3362 = vpack.c.b16 %v2818, %v2814
    %v3363 = vpack.c.b16 %v2823, %v2819
    %v3364 = vpack.c.b16 %v2824, %v2820
    %v3365 = vpack.c.b16 %v2825, %v2821
    %v3366 = vpack.c.b16 %v2826, %v2822
    %v3367 = vpack.c.b16 %v2831, %v2827
    %v3368 = vpack.c.b16 %v2832, %v2828
    %v3369 = vpack.c.b16 %v2833, %v2829
    %v3370 = vpack.c.b16 %v2834, %v2830
    %v3371 = vpack.c.b16 %v2839, %v2835
    %v3372 = vpack.c.b16 %v2840, %v2836
    %v3373 = vpack.c.b16 %v2841, %v2837
    %v3374 = vpack.c.b16 %v2842, %v2838
    %v3375 = vpack.c.b16 %v2847, %v2843
    %v3376 = vpack.c.b16 %v2848, %v2844
    %v3377 = vpack.c.b16 %v2849, %v2845
    %v3378 = vpack.c.b16 %v2850, %v2846
    %v3379 = vpack.c.b16 %v2855, %v2851
    %v3380 = vpack.c.b16 %v2856, %v2852
    %v3381 = vpack.c.b16 %v2857, %v2853
    %v3382 = vpack.c.b16 %v2858, %v2854
    %v3383 = vpack.c.b16 %v2863, %v2859
    %v3384 = vpack.c.b16 %v2864, %v2860
    %v3385 = vpack.c.b16 %v2865, %v2861
    %v3386 = vpack.c.b16 %v2866, %v2862
    %v3387 = vpack.c.b16 %v2871, %v2867
    %v3388 = vpack.c.b16 %v2872, %v2868
    %v3389 = vpack.c.b16 %v2873, %v2869
    %v3390 = vpack.c.b16 %v2874, %v2870
    %v3391 = vpack.c.b16 %v2879, %v2875
    %v3392 = vpack.c.b16 %v2880, %v2876
    %v3393 = vpack.c.b16 %v2881, %v2877
    %v3394 = vpack.c.b16 %v2882, %v2878
    %3907 = vmatprep.subr.bf16.mxu0 %v2884
    %3908 = vmatpush1.bf16.msra.mxu0 %v2883
    %3909 = vmatprep.subr.bf16.mxu0 %v2888
    %3910 = vmatpush1.bf16.msra.mxu0 %v2887
    %3911 = vmatprep.subr.bf16.mxu0 %v2892
    %3912 = vmatpush1.bf16.msra.mxu0 %v2891
    %3913 = vmatprep.subr.bf16.mxu0 %v2896
    %3914 = vmatpush1.bf16.msra.mxu0 %v2895
    %3915 = vmatprep.subr.bf16.mxu0 %v2900
    %3916 = vmatpush1.bf16.msra.mxu0 %v2899
    %3917 = vmatprep.subr.bf16.mxu0 %v2904
    %3918 = vmatpush1.bf16.msra.mxu0 %v2903
    %3919 = vmatprep.subr.bf16.mxu0 %v2908
    %3920 = vmatpush1.bf16.msra.mxu0 %v2907
    %3921 = vmatprep.subr.bf16.mxu0 %v2912
    %3922 = vmatpush1.bf16.msra.mxu0 %v2911
    %3923 = vmatprep.subr.bf16.mxu0 %v2916
    %3924 = vmatpush1.bf16.msra.mxu0 %v2915
    %3925 = vmatprep.subr.bf16.mxu0 %v2920
    %3926 = vmatpush1.bf16.msra.mxu0 %v2919
    %3927 = vmatprep.subr.bf16.mxu0 %v2924
    %3928 = vmatpush1.bf16.msra.mxu0 %v2923
    %3929 = vmatprep.subr.bf16.mxu0 %v2928
    %3930 = vmatpush1.bf16.msra.mxu0 %v2927
    %3931 = vmatprep.subr.bf16.mxu0 %v2932
    %3932 = vmatpush1.bf16.msra.mxu0 %v2931
    %3933 = vmatprep.subr.bf16.mxu0 %v2936
    %3934 = vmatpush1.bf16.msra.mxu0 %v2935
    %3935 = vmatprep.subr.bf16.mxu0 %v2940
    %3936 = vmatpush1.bf16.msra.mxu0 %v2939
    %3937 = vmatprep.subr.bf16.mxu0 %v2944
    %3938 = vmatpush1.bf16.msra.mxu0 %v2943
    %3939 = vmatprep.mubr.bf16.mxu0 %v798
    %3940 = vmatmul.mubr.bf16.gmra.mrb[0].mxu0 %v797
    %v3941 = vpop.f32.mrb[0].mxu0
    %v3942 = vadd.f32 %v1330, %v3941
    %v3943 = vpop.f32.mrb[0].mxu0
    %v3944 = vadd.f32 %v1334, %v3943
    %v3945 = vpop.f32.mrb[0].mxu0
    %v3946 = vadd.f32 %v1330, %v3945
    %v3947 = vpop.f32.mrb[0].mxu0
    %v3948 = vadd.f32 %v1334, %v3947
    %3949 = vdwg.mxu0
    %3950 = vmatprep.subr.bf16.mxu0 %v2948
    %3951 = vmatpush1.bf16.msra.mxu0 %v2947
    %3952 = vmatprep.subr.bf16.mxu0 %v2952
    %3953 = vmatpush1.bf16.msra.mxu0 %v2951
    %3954 = vmatprep.subr.bf16.mxu0 %v2956
    %3955 = vmatpush1.bf16.msra.mxu0 %v2955
    %3956 = vmatprep.subr.bf16.mxu0 %v2960
    %3957 = vmatpush1.bf16.msra.mxu0 %v2959
    %3958 = vmatprep.subr.bf16.mxu0 %v2964
    %3959 = vmatpush1.bf16.msra.mxu0 %v2963
    %3960 = vmatprep.subr.bf16.mxu0 %v2968
    %3961 = vmatpush1.bf16.msra.mxu0 %v2967
    %3962 = vmatprep.subr.bf16.mxu0 %v2972
    %3963 = vmatpush1.bf16.msra.mxu0 %v2971
    %3964 = vmatprep.subr.bf16.mxu0 %v2976
    %3965 = vmatpush1.bf16.msra.mxu0 %v2975
    %3966 = vmatprep.subr.bf16.mxu0 %v2980
    %3967 = vmatpush1.bf16.msra.mxu0 %v2979
    %3968 = vmatprep.subr.bf16.mxu0 %v2984
    %3969 = vmatpush1.bf16.msra.mxu0 %v2983
    %3970 = vmatprep.subr.bf16.mxu0 %v2988
    %3971 = vmatpush1.bf16.msra.mxu0 %v2987
    %3972 = vmatprep.subr.bf16.mxu0 %v2992
    %3973 = vmatpush1.bf16.msra.mxu0 %v2991
    %3974 = vmatprep.subr.bf16.mxu0 %v2996
    %3975 = vmatpush1.bf16.msra.mxu0 %v2995
    %3976 = vmatprep.subr.bf16.mxu0 %v3000
    %3977 = vmatpush1.bf16.msra.mxu0 %v2999
    %3978 = vmatprep.subr.bf16.mxu0 %v3004
    %3979 = vmatpush1.bf16.msra.mxu0 %v3003
    %3980 = vmatprep.subr.bf16.mxu0 %v3008
    %3981 = vmatpush1.bf16.msra.mxu0 %v3007
    %3982 = vmatprep.mubr.bf16.mxu0 %v800
    %3983 = vmatmul.mubr.bf16.gmra.mrb[0].mxu0 %v799
    %v3984 = vpop.f32.mrb[0].mxu0
    %v3985 = vadd.f32 %v3942, %v3984
    %v3986 = vpop.f32.mrb[0].mxu0
    %v3987 = vadd.f32 %v3944, %v3986
    %v3988 = vpop.f32.mrb[0].mxu0
    %v3989 = vadd.f32 %v3946, %v3988
    %v3990 = vpop.f32.mrb[0].mxu0
    %v3991 = vadd.f32 %v3948, %v3990
    %3992 = vdwg.mxu0
    %3993 = vmatprep.subr.bf16.mxu0 %v3012
    %3994 = vmatpush1.bf16.msra.mxu0 %v3011
    %3995 = vmatprep.subr.bf16.mxu0 %v3016
    %3996 = vmatpush1.bf16.msra.mxu0 %v3015
    %3997 = vmatprep.subr.bf16.mxu0 %v3020
    %3998 = vmatpush1.bf16.msra.mxu0 %v3019
    %3999 = vmatprep.subr.bf16.mxu0 %v3024
    %4000 = vmatpush1.bf16.msra.mxu0 %v3023
    %4001 = vmatprep.subr.bf16.mxu0 %v3028
    %4002 = vmatpush1.bf16.msra.mxu0 %v3027
    %4003 = vmatprep.subr.bf16.mxu0 %v3032
    %4004 = vmatpush1.bf16.msra.mxu0 %v3031
    %4005 = vmatprep.subr.bf16.mxu0 %v3036
    %4006 = vmatpush1.bf16.msra.mxu0 %v3035
    %4007 = vmatprep.subr.bf16.mxu0 %v3040
    %4008 = vmatpush1.bf16.msra.mxu0 %v3039
    %4009 = vmatprep.subr.bf16.mxu0 %v3044
    %4010 = vmatpush1.bf16.msra.mxu0 %v3043
    %4011 = vmatprep.subr.bf16.mxu0 %v3048
    %4012 = vmatpush1.bf16.msra.mxu0 %v3047
    %4013 = vmatprep.subr.bf16.mxu0 %v3052
    %4014 = vmatpush1.bf16.msra.mxu0 %v3051
    %4015 = vmatprep.subr.bf16.mxu0 %v3056
    %4016 = vmatpush1.bf16.msra.mxu0 %v3055
    %4017 = vmatprep.subr.bf16.mxu0 %v3060
    %4018 = vmatpush1.bf16.msra.mxu0 %v3059
    %4019 = vmatprep.subr.bf16.mxu0 %v3064
    %4020 = vmatpush1.bf16.msra.mxu0 %v3063
    %4021 = vmatprep.subr.bf16.mxu0 %v3068
    %4022 = vmatpush1.bf16.msra.mxu0 %v3067
    %4023 = vmatprep.subr.bf16.mxu0 %v3072
    %4024 = vmatpush1.bf16.msra.mxu0 %v3071
    %4025 = vmatprep.mubr.bf16.mxu0 %v802
    %4026 = vmatmul.mubr.bf16.gmra.mrb[0].mxu0 %v801
    %v4027 = vpop.f32.mrb[0].mxu0
    %v4028 = vadd.f32 %v3985, %v4027
    %v4029 = vpop.f32.mrb[0].mxu0
    %v4030 = vadd.f32 %v3987, %v4029
    %v4031 = vpop.f32.mrb[0].mxu0
    %v4032 = vadd.f32 %v3989, %v4031
    %v4033 = vpop.f32.mrb[0].mxu0
    %v4034 = vadd.f32 %v3991, %v4033
    %4035 = vdwg.mxu0
    %4036 = vmatprep.subr.bf16.mxu0 %v3076
    %4037 = vmatpush1.bf16.msra.mxu0 %v3075
    %4038 = vmatprep.subr.bf16.mxu0 %v3080
    %4039 = vmatpush1.bf16.msra.mxu0 %v3079
    %4040 = vmatprep.subr.bf16.mxu0 %v3084
    %4041 = vmatpush1.bf16.msra.mxu0 %v3083
    %4042 = vmatprep.subr.bf16.mxu0 %v3088
    %4043 = vmatpush1.bf16.msra.mxu0 %v3087
    %4044 = vmatprep.subr.bf16.mxu0 %v3092
    %4045 = vmatpush1.bf16.msra.mxu0 %v3091
    %4046 = vmatprep.subr.bf16.mxu0 %v3096
    %4047 = vmatpush1.bf16.msra.mxu0 %v3095
    %4048 = vmatprep.subr.bf16.mxu0 %v3100
    %4049 = vmatpush1.bf16.msra.mxu0 %v3099
    %4050 = vmatprep.subr.bf16.mxu0 %v3104
    %4051 = vmatpush1.bf16.msra.mxu0 %v3103
    %4052 = vmatprep.subr.bf16.mxu0 %v3108
    %4053 = vmatpush1.bf16.msra.mxu0 %v3107
    %4054 = vmatprep.subr.bf16.mxu0 %v3112
    %4055 = vmatpush1.bf16.msra.mxu0 %v3111
    %4056 = vmatprep.subr.bf16.mxu0 %v3116
    %4057 = vmatpush1.bf16.msra.mxu0 %v3115
    %4058 = vmatprep.subr.bf16.mxu0 %v3120
    %4059 = vmatpush1.bf16.msra.mxu0 %v3119
    %4060 = vmatprep.subr.bf16.mxu0 %v3124
    %4061 = vmatpush1.bf16.msra.mxu0 %v3123
    %4062 = vmatprep.subr.bf16.mxu0 %v3128
    %4063 = vmatpush1.bf16.msra.mxu0 %v3127
    %4064 = vmatprep.subr.bf16.mxu0 %v3132
    %4065 = vmatpush1.bf16.msra.mxu0 %v3131
    %4066 = vmatprep.subr.bf16.mxu0 %v3136
    %4067 = vmatpush1.bf16.msra.mxu0 %v3135
    %4068 = vmatprep.mubr.bf16.mxu0 %v804
    %4069 = vmatmul.mubr.bf16.gmra.mrb[0].mxu0 %v803
    %v4070 = vpop.f32.mrb[0].mxu0
    %v4071 = vadd.f32 %v4028, %v4070
    %v4072 = vpop.f32.mrb[0].mxu0
    %v4073 = vadd.f32 %v4030, %v4072
    %v4074 = vpop.f32.mrb[0].mxu0
    %v4075 = vadd.f32 %v4032, %v4074
    %v4076 = vpop.f32.mrb[0].mxu0
    %v4077 = vadd.f32 %v4034, %v4076
    %4078 = vdwg.mxu0
    %4079 = vmatprep.subr.bf16.mxu0 %v3140
    %4080 = vmatpush1.bf16.msra.mxu0 %v3139
    %4081 = vmatprep.subr.bf16.mxu0 %v3144
    %4082 = vmatpush1.bf16.msra.mxu0 %v3143
    %4083 = vmatprep.subr.bf16.mxu0 %v3148
    %4084 = vmatpush1.bf16.msra.mxu0 %v3147
    %4085 = vmatprep.subr.bf16.mxu0 %v3152
    %4086 = vmatpush1.bf16.msra.mxu0 %v3151
    %4087 = vmatprep.subr.bf16.mxu0 %v3156
    %4088 = vmatpush1.bf16.msra.mxu0 %v3155
    %4089 = vmatprep.subr.bf16.mxu0 %v3160
    %4090 = vmatpush1.bf16.msra.mxu0 %v3159
    %4091 = vmatprep.subr.bf16.mxu0 %v3164
    %4092 = vmatpush1.bf16.msra.mxu0 %v3163
    %4093 = vmatprep.subr.bf16.mxu0 %v3168
    %4094 = vmatpush1.bf16.msra.mxu0 %v3167
    %4095 = vmatprep.subr.bf16.mxu0 %v3172
    %4096 = vmatpush1.bf16.msra.mxu0 %v3171
    %4097 = vmatprep.subr.bf16.mxu0 %v3176
    %4098 = vmatpush1.bf16.msra.mxu0 %v3175
    %4099 = vmatprep.subr.bf16.mxu0 %v3180
    %4100 = vmatpush1.bf16.msra.mxu0 %v3179
    %4101 = vmatprep.subr.bf16.mxu0 %v3184
    %4102 = vmatpush1.bf16.msra.mxu0 %v3183
    %4103 = vmatprep.subr.bf16.mxu0 %v3188
    %4104 = vmatpush1.bf16.msra.mxu0 %v3187
    %4105 = vmatprep.subr.bf16.mxu0 %v3192
    %4106 = vmatpush1.bf16.msra.mxu0 %v3191
    %4107 = vmatprep.subr.bf16.mxu0 %v3196
    %4108 = vmatpush1.bf16.msra.mxu0 %v3195
    %4109 = vmatprep.subr.bf16.mxu0 %v3200
    %4110 = vmatpush1.bf16.msra.mxu0 %v3199
    %4111 = vmatprep.mubr.bf16.mxu0 %v806
    %4112 = vmatmul.mubr.bf16.gmra.mrb[0].mxu0 %v805
    %v4113 = vpop.f32.mrb[0].mxu0
    %v4114 = vadd.f32 %v4071, %v4113
    %v4115 = vpop.f32.mrb[0].mxu0
    %v4116 = vadd.f32 %v4073, %v4115
    %v4117 = vpop.f32.mrb[0].mxu0
    %v4118 = vadd.f32 %v4075, %v4117
    %v4119 = vpop.f32.mrb[0].mxu0
    %v4120 = vadd.f32 %v4077, %v4119
    %4121 = vdwg.mxu0
    %4122 = vmatprep.subr.bf16.mxu0 %v3204
    %4123 = vmatpush1.bf16.msra.mxu0 %v3203
    %4124 = vmatprep.subr.bf16.mxu0 %v3208
    %4125 = vmatpush1.bf16.msra.mxu0 %v3207
    %4126 = vmatprep.subr.bf16.mxu0 %v3212
    %4127 = vmatpush1.bf16.msra.mxu0 %v3211
    %4128 = vmatprep.subr.bf16.mxu0 %v3216
    %4129 = vmatpush1.bf16.msra.mxu0 %v3215
    %4130 = vmatprep.subr.bf16.mxu0 %v3220
    %4131 = vmatpush1.bf16.msra.mxu0 %v3219
    %4132 = vmatprep.subr.bf16.mxu0 %v3224
    %4133 = vmatpush1.bf16.msra.mxu0 %v3223
    %4134 = vmatprep.subr.bf16.mxu0 %v3228
    %4135 = vmatpush1.bf16.msra.mxu0 %v3227
    %4136 = vmatprep.subr.bf16.mxu0 %v3232
    %4137 = vmatpush1.bf16.msra.mxu0 %v3231
    %4138 = vmatprep.subr.bf16.mxu0 %v3236
    %4139 = vmatpush1.bf16.msra.mxu0 %v3235
    %4140 = vmatprep.subr.bf16.mxu0 %v3240
    %4141 = vmatpush1.bf16.msra.mxu0 %v3239
    %4142 = vmatprep.subr.bf16.mxu0 %v3244
    %4143 = vmatpush1.bf16.msra.mxu0 %v3243
    %4144 = vmatprep.subr.bf16.mxu0 %v3248
    %4145 = vmatpush1.bf16.msra.mxu0 %v3247
    %4146 = vmatprep.subr.bf16.mxu0 %v3252
    %4147 = vmatpush1.bf16.msra.mxu0 %v3251
    %4148 = vmatprep.subr.bf16.mxu0 %v3256
    %4149 = vmatpush1.bf16.msra.mxu0 %v3255
    %4150 = vmatprep.subr.bf16.mxu0 %v3260
    %4151 = vmatpush1.bf16.msra.mxu0 %v3259
    %4152 = vmatprep.subr.bf16.mxu0 %v3264
    %4153 = vmatpush1.bf16.msra.mxu0 %v3263
    %4154 = vmatprep.mubr.bf16.mxu0 %v808
    %4155 = vmatmul.mubr.bf16.gmra.mrb[0].mxu0 %v807
    %v4156 = vpop.f32.mrb[0].mxu0
    %v4157 = vadd.f32 %v4114, %v4156
    %v4158 = vpop.f32.mrb[0].mxu0
    %v4159 = vadd.f32 %v4116, %v4158
    %v4160 = vpop.f32.mrb[0].mxu0
    %v4161 = vadd.f32 %v4118, %v4160
    %v4162 = vpop.f32.mrb[0].mxu0
    %v4163 = vadd.f32 %v4120, %v4162
    %4164 = vdwg.mxu0
    %4165 = vmatprep.subr.bf16.mxu0 %v3268
    %4166 = vmatpush1.bf16.msra.mxu0 %v3267
    %4167 = vmatprep.subr.bf16.mxu0 %v3272
    %4168 = vmatpush1.bf16.msra.mxu0 %v3271
    %4169 = vmatprep.subr.bf16.mxu0 %v3276
    %4170 = vmatpush1.bf16.msra.mxu0 %v3275
    %4171 = vmatprep.subr.bf16.mxu0 %v3280
    %4172 = vmatpush1.bf16.msra.mxu0 %v3279
    %4173 = vmatprep.subr.bf16.mxu0 %v3284
    %4174 = vmatpush1.bf16.msra.mxu0 %v3283
    %4175 = vmatprep.subr.bf16.mxu0 %v3288
    %4176 = vmatpush1.bf16.msra.mxu0 %v3287
    %4177 = vmatprep.subr.bf16.mxu0 %v3292
    %4178 = vmatpush1.bf16.msra.mxu0 %v3291
    %4179 = vmatprep.subr.bf16.mxu0 %v3296
    %4180 = vmatpush1.bf16.msra.mxu0 %v3295
    %4181 = vmatprep.subr.bf16.mxu0 %v3300
    %4182 = vmatpush1.bf16.msra.mxu0 %v3299
    %4183 = vmatprep.subr.bf16.mxu0 %v3304
    %4184 = vmatpush1.bf16.msra.mxu0 %v3303
    %4185 = vmatprep.subr.bf16.mxu0 %v3308
    %4186 = vmatpush1.bf16.msra.mxu0 %v3307
    %4187 = vmatprep.subr.bf16.mxu0 %v3312
    %4188 = vmatpush1.bf16.msra.mxu0 %v3311
    %4189 = vmatprep.subr.bf16.mxu0 %v3316
    %4190 = vmatpush1.bf16.msra.mxu0 %v3315
    %4191 = vmatprep.subr.bf16.mxu0 %v3320
    %4192 = vmatpush1.bf16.msra.mxu0 %v3319
    %4193 = vmatprep.subr.bf16.mxu0 %v3324
    %4194 = vmatpush1.bf16.msra.mxu0 %v3323
    %4195 = vmatprep.subr.bf16.mxu0 %v3328
    %4196 = vmatpush1.bf16.msra.mxu0 %v3327
    %4197 = vmatprep.mubr.bf16.mxu0 %v810
    %4198 = vmatmul.mubr.bf16.gmra.mrb[0].mxu0 %v809
    %v4199 = vpop.f32.mrb[0].mxu0
    %v4200 = vadd.f32 %v4157, %v4199
    %v4201 = vpop.f32.mrb[0].mxu0
    %v4202 = vadd.f32 %v4159, %v4201
    %v4203 = vpop.f32.mrb[0].mxu0
    %v4204 = vadd.f32 %v4161, %v4203
    %v4205 = vpop.f32.mrb[0].mxu0
    %v4206 = vadd.f32 %v4163, %v4205
    %4207 = vdwg.mxu0
    %4208 = vmatprep.subr.bf16.mxu0 %v3332
    %4209 = vmatpush1.bf16.msra.mxu0 %v3331
    %4210 = vmatprep.subr.bf16.mxu0 %v3336
    %4211 = vmatpush1.bf16.msra.mxu0 %v3335
    %4212 = vmatprep.subr.bf16.mxu0 %v3340
    %4213 = vmatpush1.bf16.msra.mxu0 %v3339
    %4214 = vmatprep.subr.bf16.mxu0 %v3344
    %4215 = vmatpush1.bf16.msra.mxu0 %v3343
    %4216 = vmatprep.subr.bf16.mxu0 %v3348
    %4217 = vmatpush1.bf16.msra.mxu0 %v3347
    %4218 = vmatprep.subr.bf16.mxu0 %v3352
    %4219 = vmatpush1.bf16.msra.mxu0 %v3351
    %4220 = vmatprep.subr.bf16.mxu0 %v3356
    %4221 = vmatpush1.bf16.msra.mxu0 %v3355
    %4222 = vmatprep.subr.bf16.mxu0 %v3360
    %4223 = vmatpush1.bf16.msra.mxu0 %v3359
    %4224 = vmatprep.subr.bf16.mxu0 %v3364
    %4225 = vmatpush1.bf16.msra.mxu0 %v3363
    %4226 = vmatprep.subr.bf16.mxu0 %v3368
    %4227 = vmatpush1.bf16.msra.mxu0 %v3367
    %4228 = vmatprep.subr.bf16.mxu0 %v3372
    %4229 = vmatpush1.bf16.msra.mxu0 %v3371
    %4230 = vmatprep.subr.bf16.mxu0 %v3376
    %4231 = vmatpush1.bf16.msra.mxu0 %v3375
    %4232 = vmatprep.subr.bf16.mxu0 %v3380
    %4233 = vmatpush1.bf16.msra.mxu0 %v3379
    %4234 = vmatprep.subr.bf16.mxu0 %v3384
    %4235 = vmatpush1.bf16.msra.mxu0 %v3383
    %4236 = vmatprep.subr.bf16.mxu0 %v3388
    %4237 = vmatpush1.bf16.msra.mxu0 %v3387
    %4238 = vmatprep.subr.bf16.mxu0 %v3392
    %4239 = vmatpush1.bf16.msra.mxu0 %v3391
    %4240 = vmatprep.mubr.bf16.mxu0 %v812
    %4241 = vmatmul.mubr.bf16.gmra.mrb[0].mxu0 %v811
    %v4242 = vpop.f32.mrb[0].mxu0
    %v4243 = vadd.f32 %v4200, %v4242
    %v4244 = vpop.f32.mrb[0].mxu0
    %v4245 = vadd.f32 %v4202, %v4244
    %v4246 = vpop.f32.mrb[0].mxu0
    %v4247 = vadd.f32 %v4204, %v4246
    %v4248 = vpop.f32.mrb[0].mxu0
    %v4249 = vadd.f32 %v4206, %v4248
    %4250 = vdwg.mxu0
    %4251 = vmatprep.subr.bf16.mxu0 %v2886
    %4252 = vmatpush1.bf16.msra.mxu0 %v2885
    %4253 = vmatprep.subr.bf16.mxu0 %v2890
    %4254 = vmatpush1.bf16.msra.mxu0 %v2889
    %4255 = vmatprep.subr.bf16.mxu0 %v2894
    %4256 = vmatpush1.bf16.msra.mxu0 %v2893
    %4257 = vmatprep.subr.bf16.mxu0 %v2898
    %4258 = vmatpush1.bf16.msra.mxu0 %v2897
    %4259 = vmatprep.subr.bf16.mxu0 %v2902
    %4260 = vmatpush1.bf16.msra.mxu0 %v2901
    %4261 = vmatprep.subr.bf16.mxu0 %v2906
    %4262 = vmatpush1.bf16.msra.mxu0 %v2905
    %4263 = vmatprep.subr.bf16.mxu0 %v2910
    %4264 = vmatpush1.bf16.msra.mxu0 %v2909
    %4265 = vmatprep.subr.bf16.mxu0 %v2914
    %4266 = vmatpush1.bf16.msra.mxu0 %v2913
    %4267 = vmatprep.subr.bf16.mxu0 %v2918
    %4268 = vmatpush1.bf16.msra.mxu0 %v2917
    %4269 = vmatprep.subr.bf16.mxu0 %v2922
    %4270 = vmatpush1.bf16.msra.mxu0 %v2921
    %4271 = vmatprep.subr.bf16.mxu0 %v2926
    %4272 = vmatpush1.bf16.msra.mxu0 %v2925
    %4273 = vmatprep.subr.bf16.mxu0 %v2930
    %4274 = vmatpush1.bf16.msra.mxu0 %v2929
    %4275 = vmatprep.subr.bf16.mxu0 %v2934
    %4276 = vmatpush1.bf16.msra.mxu0 %v2933
    %4277 = vmatprep.subr.bf16.mxu0 %v2938
    %4278 = vmatpush1.bf16.msra.mxu0 %v2937
    %4279 = vmatprep.subr.bf16.mxu0 %v2942
    %4280 = vmatpush1.bf16.msra.mxu0 %v2941
    %4281 = vmatprep.subr.bf16.mxu0 %v2946
    %4282 = vmatpush1.bf16.msra.mxu0 %v2945
    %4283 = vmatprep.mubr.bf16.mxu0 %v798
    %4284 = vmatmul.mubr.bf16.gmra.mrb[0].mxu0 %v797
    %v4285 = vpop.f32.mrb[0].mxu0
    %v4286 = vadd.f32 %v1338, %v4285
    %v4287 = vpop.f32.mrb[0].mxu0
    %v4288 = vadd.f32 %v1342, %v4287
    %v4289 = vpop.f32.mrb[0].mxu0
    %v4290 = vadd.f32 %v1338, %v4289
    %v4291 = vpop.f32.mrb[0].mxu0
    %v4292 = vadd.f32 %v1342, %v4291
    %4293 = vdwg.mxu0
    %4294 = vmatprep.subr.bf16.mxu0 %v2950
    %4295 = vmatpush1.bf16.msra.mxu0 %v2949
    %4296 = vmatprep.subr.bf16.mxu0 %v2954
    %4297 = vmatpush1.bf16.msra.mxu0 %v2953
    %4298 = vmatprep.subr.bf16.mxu0 %v2958
    %4299 = vmatpush1.bf16.msra.mxu0 %v2957
    %4300 = vmatprep.subr.bf16.mxu0 %v2962
    %4301 = vmatpush1.bf16.msra.mxu0 %v2961
    %4302 = vmatprep.subr.bf16.mxu0 %v2966
    %4303 = vmatpush1.bf16.msra.mxu0 %v2965
    %4304 = vmatprep.subr.bf16.mxu0 %v2970
    %4305 = vmatpush1.bf16.msra.mxu0 %v2969
    %4306 = vmatprep.subr.bf16.mxu0 %v2974
    %4307 = vmatpush1.bf16.msra.mxu0 %v2973
    %4308 = vmatprep.subr.bf16.mxu0 %v2978
    %4309 = vmatpush1.bf16.msra.mxu0 %v2977
    %4310 = vmatprep.subr.bf16.mxu0 %v2982
    %4311 = vmatpush1.bf16.msra.mxu0 %v2981
    %4312 = vmatprep.subr.bf16.mxu0 %v2986
    %4313 = vmatpush1.bf16.msra.mxu0 %v2985
    %4314 = vmatprep.subr.bf16.mxu0 %v2990
    %4315 = vmatpush1.bf16.msra.mxu0 %v2989
    %4316 = vmatprep.subr.bf16.mxu0 %v2994
    %4317 = vmatpush1.bf16.msra.mxu0 %v2993
    %4318 = vmatprep.subr.bf16.mxu0 %v2998
    %4319 = vmatpush1.bf16.msra.mxu0 %v2997
    %4320 = vmatprep.subr.bf16.mxu0 %v3002
    %4321 = vmatpush1.bf16.msra.mxu0 %v3001
    %4322 = vmatprep.subr.bf16.mxu0 %v3006
    %4323 = vmatpush1.bf16.msra.mxu0 %v3005
    %4324 = vmatprep.subr.bf16.mxu0 %v3010
    %4325 = vmatpush1.bf16.msra.mxu0 %v3009
    %4326 = vmatprep.mubr.bf16.mxu0 %v800
    %4327 = vmatmul.mubr.bf16.gmra.mrb[0].mxu0 %v799
    %v4328 = vpop.f32.mrb[0].mxu0
    %v4329 = vadd.f32 %v4286, %v4328
    %v4330 = vpop.f32.mrb[0].mxu0
    %v4331 = vadd.f32 %v4288, %v4330
    %v4332 = vpop.f32.mrb[0].mxu0
    %v4333 = vadd.f32 %v4290, %v4332
    %v4334 = vpop.f32.mrb[0].mxu0
    %v4335 = vadd.f32 %v4292, %v4334
    %4336 = vdwg.mxu0
    %4337 = vmatprep.subr.bf16.mxu0 %v3014
    %4338 = vmatpush1.bf16.msra.mxu0 %v3013
    %4339 = vmatprep.subr.bf16.mxu0 %v3018
    %4340 = vmatpush1.bf16.msra.mxu0 %v3017
    %4341 = vmatprep.subr.bf16.mxu0 %v3022
    %4342 = vmatpush1.bf16.msra.mxu0 %v3021
    %4343 = vmatprep.subr.bf16.mxu0 %v3026
    %4344 = vmatpush1.bf16.msra.mxu0 %v3025
    %4345 = vmatprep.subr.bf16.mxu0 %v3030
    %4346 = vmatpush1.bf16.msra.mxu0 %v3029
    %4347 = vmatprep.subr.bf16.mxu0 %v3034
    %4348 = vmatpush1.bf16.msra.mxu0 %v3033
    %4349 = vmatprep.subr.bf16.mxu0 %v3038
    %4350 = vmatpush1.bf16.msra.mxu0 %v3037
    %4351 = vmatprep.subr.bf16.mxu0 %v3042
    %4352 = vmatpush1.bf16.msra.mxu0 %v3041
    %4353 = vmatprep.subr.bf16.mxu0 %v3046
    %4354 = vmatpush1.bf16.msra.mxu0 %v3045
    %4355 = vmatprep.subr.bf16.mxu0 %v3050
    %4356 = vmatpush1.bf16.msra.mxu0 %v3049
    %4357 = vmatprep.subr.bf16.mxu0 %v3054
    %4358 = vmatpush1.bf16.msra.mxu0 %v3053
    %4359 = vmatprep.subr.bf16.mxu0 %v3058
    %4360 = vmatpush1.bf16.msra.mxu0 %v3057
    %4361 = vmatprep.subr.bf16.mxu0 %v3062
    %4362 = vmatpush1.bf16.msra.mxu0 %v3061
    %4363 = vmatprep.subr.bf16.mxu0 %v3066
    %4364 = vmatpush1.bf16.msra.mxu0 %v3065
    %4365 = vmatprep.subr.bf16.mxu0 %v3070
    %4366 = vmatpush1.bf16.msra.mxu0 %v3069
    %4367 = vmatprep.subr.bf16.mxu0 %v3074
    %4368 = vmatpush1.bf16.msra.mxu0 %v3073
    %4369 = vmatprep.mubr.bf16.mxu0 %v802
    %4370 = vmatmul.mubr.bf16.gmra.mrb[0].mxu0 %v801
    %v4371 = vpop.f32.mrb[0].mxu0
    %v4372 = vadd.f32 %v4329, %v4371
    %v4373 = vpop.f32.mrb[0].mxu0
    %v4374 = vadd.f32 %v4331, %v4373
    %v4375 = vpop.f32.mrb[0].mxu0
    %v4376 = vadd.f32 %v4333, %v4375
    %v4377 = vpop.f32.mrb[0].mxu0
    %v4378 = vadd.f32 %v4335, %v4377
    %4379 = vdwg.mxu0
    %4380 = vmatprep.subr.bf16.mxu0 %v3078
    %4381 = vmatpush1.bf16.msra.mxu0 %v3077
    %4382 = vmatprep.subr.bf16.mxu0 %v3082
    %4383 = vmatpush1.bf16.msra.mxu0 %v3081
    %4384 = vmatprep.subr.bf16.mxu0 %v3086
    %4385 = vmatpush1.bf16.msra.mxu0 %v3085
    %4386 = vmatprep.subr.bf16.mxu0 %v3090
    %4387 = vmatpush1.bf16.msra.mxu0 %v3089
    %4388 = vmatprep.subr.bf16.mxu0 %v3094
    %4389 = vmatpush1.bf16.msra.mxu0 %v3093
    %4390 = vmatprep.subr.bf16.mxu0 %v3098
    %4391 = vmatpush1.bf16.msra.mxu0 %v3097
    %4392 = vmatprep.subr.bf16.mxu0 %v3102
    %4393 = vmatpush1.bf16.msra.mxu0 %v3101
    %4394 = vmatprep.subr.bf16.mxu0 %v3106
    %4395 = vmatpush1.bf16.msra.mxu0 %v3105
    %4396 = vmatprep.subr.bf16.mxu0 %v3110
    %4397 = vmatpush1.bf16.msra.mxu0 %v3109
    %4398 = vmatprep.subr.bf16.mxu0 %v3114
    %4399 = vmatpush1.bf16.msra.mxu0 %v3113
    %4400 = vmatprep.subr.bf16.mxu0 %v3118
    %4401 = vmatpush1.bf16.msra.mxu0 %v3117
    %4402 = vmatprep.subr.bf16.mxu0 %v3122
    %4403 = vmatpush1.bf16.msra.mxu0 %v3121
    %4404 = vmatprep.subr.bf16.mxu0 %v3126
    %4405 = vmatpush1.bf16.msra.mxu0 %v3125
    %4406 = vmatprep.subr.bf16.mxu0 %v3130
    %4407 = vmatpush1.bf16.msra.mxu0 %v3129
    %4408 = vmatprep.subr.bf16.mxu0 %v3134
    %4409 = vmatpush1.bf16.msra.mxu0 %v3133
    %4410 = vmatprep.subr.bf16.mxu0 %v3138
    %4411 = vmatpush1.bf16.msra.mxu0 %v3137
    %4412 = vmatprep.mubr.bf16.mxu0 %v804
    %4413 = vmatmul.mubr.bf16.gmra.mrb[0].mxu0 %v803
    %v4414 = vpop.f32.mrb[0].mxu0
    %v4415 = vadd.f32 %v4372, %v4414
    %v4416 = vpop.f32.mrb[0].mxu0
    %v4417 = vadd.f32 %v4374, %v4416
    %v4418 = vpop.f32.mrb[0].mxu0
    %v4419 = vadd.f32 %v4376, %v4418
    %v4420 = vpop.f32.mrb[0].mxu0
    %v4421 = vadd.f32 %v4378, %v4420
    %4422 = vdwg.mxu0
    %4423 = vmatprep.subr.bf16.mxu0 %v3142
    %4424 = vmatpush1.bf16.msra.mxu0 %v3141
    %4425 = vmatprep.subr.bf16.mxu0 %v3146
    %4426 = vmatpush1.bf16.msra.mxu0 %v3145
    %4427 = vmatprep.subr.bf16.mxu0 %v3150
    %4428 = vmatpush1.bf16.msra.mxu0 %v3149
    %4429 = vmatprep.subr.bf16.mxu0 %v3154
    %4430 = vmatpush1.bf16.msra.mxu0 %v3153
    %4431 = vmatprep.subr.bf16.mxu0 %v3158
    %4432 = vmatpush1.bf16.msra.mxu0 %v3157
    %4433 = vmatprep.subr.bf16.mxu0 %v3162
    %4434 = vmatpush1.bf16.msra.mxu0 %v3161
    %4435 = vmatprep.subr.bf16.mxu0 %v3166
    %4436 = vmatpush1.bf16.msra.mxu0 %v3165
    %4437 = vmatprep.subr.bf16.mxu0 %v3170
    %4438 = vmatpush1.bf16.msra.mxu0 %v3169
    %4439 = vmatprep.subr.bf16.mxu0 %v3174
    %4440 = vmatpush1.bf16.msra.mxu0 %v3173
    %4441 = vmatprep.subr.bf16.mxu0 %v3178
    %4442 = vmatpush1.bf16.msra.mxu0 %v3177
    %4443 = vmatprep.subr.bf16.mxu0 %v3182
    %4444 = vmatpush1.bf16.msra.mxu0 %v3181
    %4445 = vmatprep.subr.bf16.mxu0 %v3186
    %4446 = vmatpush1.bf16.msra.mxu0 %v3185
    %4447 = vmatprep.subr.bf16.mxu0 %v3190
    %4448 = vmatpush1.bf16.msra.mxu0 %v3189
    %4449 = vmatprep.subr.bf16.mxu0 %v3194
    %4450 = vmatpush1.bf16.msra.mxu0 %v3193
    %4451 = vmatprep.subr.bf16.mxu0 %v3198
    %4452 = vmatpush1.bf16.msra.mxu0 %v3197
    %4453 = vmatprep.subr.bf16.mxu0 %v3202
    %4454 = vmatpush1.bf16.msra.mxu0 %v3201
    %4455 = vmatprep.mubr.bf16.mxu0 %v806
    %4456 = vmatmul.mubr.bf16.gmra.mrb[0].mxu0 %v805
    %v4457 = vpop.f32.mrb[0].mxu0
    %v4458 = vadd.f32 %v4415, %v4457
    %v4459 = vpop.f32.mrb[0].mxu0
    %v4460 = vadd.f32 %v4417, %v4459
    %v4461 = vpop.f32.mrb[0].mxu0
    %v4462 = vadd.f32 %v4419, %v4461
    %v4463 = vpop.f32.mrb[0].mxu0
    %v4464 = vadd.f32 %v4421, %v4463
    %4465 = vdwg.mxu0
    %4466 = vmatprep.subr.bf16.mxu0 %v3206
    %4467 = vmatpush1.bf16.msra.mxu0 %v3205
    %4468 = vmatprep.subr.bf16.mxu0 %v3210
    %4469 = vmatpush1.bf16.msra.mxu0 %v3209
    %4470 = vmatprep.subr.bf16.mxu0 %v3214
    %4471 = vmatpush1.bf16.msra.mxu0 %v3213
    %4472 = vmatprep.subr.bf16.mxu0 %v3218
    %4473 = vmatpush1.bf16.msra.mxu0 %v3217
    %4474 = vmatprep.subr.bf16.mxu0 %v3222
    %4475 = vmatpush1.bf16.msra.mxu0 %v3221
    %4476 = vmatprep.subr.bf16.mxu0 %v3226
    %4477 = vmatpush1.bf16.msra.mxu0 %v3225
    %4478 = vmatprep.subr.bf16.mxu0 %v3230
    %4479 = vmatpush1.bf16.msra.mxu0 %v3229
    %4480 = vmatprep.subr.bf16.mxu0 %v3234
    %4481 = vmatpush1.bf16.msra.mxu0 %v3233
    %4482 = vmatprep.subr.bf16.mxu0 %v3238
    %4483 = vmatpush1.bf16.msra.mxu0 %v3237
    %4484 = vmatprep.subr.bf16.mxu0 %v3242
    %4485 = vmatpush1.bf16.msra.mxu0 %v3241
    %4486 = vmatprep.subr.bf16.mxu0 %v3246
    %4487 = vmatpush1.bf16.msra.mxu0 %v3245
    %4488 = vmatprep.subr.bf16.mxu0 %v3250
    %4489 = vmatpush1.bf16.msra.mxu0 %v3249
    %4490 = vmatprep.subr.bf16.mxu0 %v3254
    %4491 = vmatpush1.bf16.msra.mxu0 %v3253
    %4492 = vmatprep.subr.bf16.mxu0 %v3258
    %4493 = vmatpush1.bf16.msra.mxu0 %v3257
    %4494 = vmatprep.subr.bf16.mxu0 %v3262
    %4495 = vmatpush1.bf16.msra.mxu0 %v3261
    %4496 = vmatprep.subr.bf16.mxu0 %v3266
    %4497 = vmatpush1.bf16.msra.mxu0 %v3265
    %4498 = vmatprep.mubr.bf16.mxu0 %v808
    %4499 = vmatmul.mubr.bf16.gmra.mrb[0].mxu0 %v807
    %v4500 = vpop.f32.mrb[0].mxu0
    %v4501 = vadd.f32 %v4458, %v4500
    %v4502 = vpop.f32.mrb[0].mxu0
    %v4503 = vadd.f32 %v4460, %v4502
    %v4504 = vpop.f32.mrb[0].mxu0
    %v4505 = vadd.f32 %v4462, %v4504
    %v4506 = vpop.f32.mrb[0].mxu0
    %v4507 = vadd.f32 %v4464, %v4506
    %4508 = vdwg.mxu0
    %4509 = vmatprep.subr.bf16.mxu0 %v3270
    %4510 = vmatpush1.bf16.msra.mxu0 %v3269
    %4511 = vmatprep.subr.bf16.mxu0 %v3274
    %4512 = vmatpush1.bf16.msra.mxu0 %v3273
    %4513 = vmatprep.subr.bf16.mxu0 %v3278
    %4514 = vmatpush1.bf16.msra.mxu0 %v3277
    %4515 = vmatprep.subr.bf16.mxu0 %v3282
    %4516 = vmatpush1.bf16.msra.mxu0 %v3281
    %4517 = vmatprep.subr.bf16.mxu0 %v3286
    %4518 = vmatpush1.bf16.msra.mxu0 %v3285
    %4519 = vmatprep.subr.bf16.mxu0 %v3290
    %4520 = vmatpush1.bf16.msra.mxu0 %v3289
    %4521 = vmatprep.subr.bf16.mxu0 %v3294
    %4522 = vmatpush1.bf16.msra.mxu0 %v3293
    %4523 = vmatprep.subr.bf16.mxu0 %v3298
    %4524 = vmatpush1.bf16.msra.mxu0 %v3297
    %4525 = vmatprep.subr.bf16.mxu0 %v3302
    %4526 = vmatpush1.bf16.msra.mxu0 %v3301
    %4527 = vmatprep.subr.bf16.mxu0 %v3306
    %4528 = vmatpush1.bf16.msra.mxu0 %v3305
    %4529 = vmatprep.subr.bf16.mxu0 %v3310
    %4530 = vmatpush1.bf16.msra.mxu0 %v3309
    %4531 = vmatprep.subr.bf16.mxu0 %v3314
    %4532 = vmatpush1.bf16.msra.mxu0 %v3313
    %4533 = vmatprep.subr.bf16.mxu0 %v3318
    %4534 = vmatpush1.bf16.msra.mxu0 %v3317
    %4535 = vmatprep.subr.bf16.mxu0 %v3322
    %4536 = vmatpush1.bf16.msra.mxu0 %v3321
    %4537 = vmatprep.subr.bf16.mxu0 %v3326
    %4538 = vmatpush1.bf16.msra.mxu0 %v3325
    %4539 = vmatprep.subr.bf16.mxu0 %v3330
    %4540 = vmatpush1.bf16.msra.mxu0 %v3329
    %4541 = vmatprep.mubr.bf16.mxu0 %v810
    %4542 = vmatmul.mubr.bf16.gmra.mrb[0].mxu0 %v809
    %v4543 = vpop.f32.mrb[0].mxu0
    %v4544 = vadd.f32 %v4501, %v4543
    %v4545 = vpop.f32.mrb[0].mxu0
    %v4546 = vadd.f32 %v4503, %v4545
    %v4547 = vpop.f32.mrb[0].mxu0
    %v4548 = vadd.f32 %v4505, %v4547
    %v4549 = vpop.f32.mrb[0].mxu0
    %v4550 = vadd.f32 %v4507, %v4549
    %4551 = vdwg.mxu0
    %4552 = vmatprep.subr.bf16.mxu0 %v3334
    %4553 = vmatpush1.bf16.msra.mxu0 %v3333
    %4554 = vmatprep.subr.bf16.mxu0 %v3338
    %4555 = vmatpush1.bf16.msra.mxu0 %v3337
    %4556 = vmatprep.subr.bf16.mxu0 %v3342
    %4557 = vmatpush1.bf16.msra.mxu0 %v3341
    %4558 = vmatprep.subr.bf16.mxu0 %v3346
    %4559 = vmatpush1.bf16.msra.mxu0 %v3345
    %4560 = vmatprep.subr.bf16.mxu0 %v3350
    %4561 = vmatpush1.bf16.msra.mxu0 %v3349
    %4562 = vmatprep.subr.bf16.mxu0 %v3354
    %4563 = vmatpush1.bf16.msra.mxu0 %v3353
    %4564 = vmatprep.subr.bf16.mxu0 %v3358
    %4565 = vmatpush1.bf16.msra.mxu0 %v3357
    %4566 = vmatprep.subr.bf16.mxu0 %v3362
    %4567 = vmatpush1.bf16.msra.mxu0 %v3361
    %4568 = vmatprep.subr.bf16.mxu0 %v3366
    %4569 = vmatpush1.bf16.msra.mxu0 %v3365
    %4570 = vmatprep.subr.bf16.mxu0 %v3370
    %4571 = vmatpush1.bf16.msra.mxu0 %v3369
    %4572 = vmatprep.subr.bf16.mxu0 %v3374
    %4573 = vmatpush1.bf16.msra.mxu0 %v3373
    %4574 = vmatprep.subr.bf16.mxu0 %v3378
    %4575 = vmatpush1.bf16.msra.mxu0 %v3377
    %4576 = vmatprep.subr.bf16.mxu0 %v3382
    %4577 = vmatpush1.bf16.msra.mxu0 %v3381
    %4578 = vmatprep.subr.bf16.mxu0 %v3386
    %4579 = vmatpush1.bf16.msra.mxu0 %v3385
    %4580 = vmatprep.subr.bf16.mxu0 %v3390
    %4581 = vmatpush1.bf16.msra.mxu0 %v3389
    %4582 = vmatprep.subr.bf16.mxu0 %v3394
    %4583 = vmatpush1.bf16.msra.mxu0 %v3393
    %4584 = vmatprep.mubr.bf16.mxu0 %v812
    %4585 = vmatmul.mubr.bf16.gmra.mrb[0].mxu0 %v811
    %v4586 = vpop.f32.mrb[0].mxu0
    %v4587 = vadd.f32 %v4544, %v4586
    %v4588 = vpop.f32.mrb[0].mxu0
    %v4589 = vadd.f32 %v4546, %v4588
    %v4590 = vpop.f32.mrb[0].mxu0
    %v4591 = vadd.f32 %v4548, %v4590
    %v4592 = vpop.f32.mrb[0].mxu0
    %v4593 = vadd.f32 %v4550, %v4592
    %4594 = vdwg.mxu0
    %v4595 = vmax.f32 %v4243, 0.0
    %v4596 = vmax.f32 %v4245, 0.0
    %v4597 = vmax.f32 %v4587, 0.0
    %v4598 = vmax.f32 %v4589, 0.0
    %v4599 = vmax.f32 %v4247, 0.0
    %v4600 = vmax.f32 %v4249, 0.0
    %v4601 = vmax.f32 %v4591, 0.0
    %v4602 = vmax.f32 %v4593, 0.0
    %v4603 = vpack.c.bf16 %v4599, %v4595
    %v4604 = vpack.c.bf16 %v4600, %v4596
    %v4605 = vpack.c.bf16 %v4601, %v4597
    %v4606 = vpack.c.bf16 %v4602, %v4598
    %v4607 = vld [vmem:[#allocation9] sm:$0xff]
    %v4608 = vld [vmem:[#allocation9 + $0x8] sm:$0xff]
    %v4609 = vld [vmem:[#allocation9 + $0x10] sm:$0xff]
    %v4610 = vld [vmem:[#allocation9 + $0x18] sm:$0xff]
    %v4611 = vld [vmem:[#allocation9 + $0x20] sm:$0xff]
    %v4612 = vld [vmem:[#allocation9 + $0x28] sm:$0xff]
    %v4613 = vld [vmem:[#allocation9 + $0x30] sm:$0xff]
    %v4614 = vld [vmem:[#allocation9 + $0x38] sm:$0xff]
    %v4615 = vld [vmem:[#allocation9 + $0x40] sm:$0xff]
    %v4616 = vld [vmem:[#allocation9 + $0x48] sm:$0xff]
    %v4617 = vld [vmem:[#allocation9 + $0x50] sm:$0xff]
    %v4618 = vld [vmem:[#allocation9 + $0x58] sm:$0xff]
    %v4619 = vld [vmem:[#allocation9 + $0x60] sm:$0xff]
    %v4620 = vld [vmem:[#allocation9 + $0x68] sm:$0xff]
    %v4621 = vld [vmem:[#allocation9 + $0x70] sm:$0xff]
    %v4622 = vld [vmem:[#allocation9 + $0x78] sm:$0xff]
    %v4623 = vld [vmem:[#allocation9 + $0x80] sm:$0xff]
    %v4624 = vld [vmem:[#allocation9 + $0x88] sm:$0xff]
    %v4625 = vld [vmem:[#allocation9 + $0x90] sm:$0xff]
    %v4626 = vld [vmem:[#allocation9 + $0x98] sm:$0xff]
    %v4627 = vld [vmem:[#allocation9 + $0xa0] sm:$0xff]
    %v4628 = vld [vmem:[#allocation9 + $0xa8] sm:$0xff]
    %v4629 = vld [vmem:[#allocation9 + $0xb0] sm:$0xff]
    %v4630 = vld [vmem:[#allocation9 + $0xb8] sm:$0xff]
    %v4631 = vld [vmem:[#allocation9 + $0xc0] sm:$0xff]
    %v4632 = vld [vmem:[#allocation9 + $0xc8] sm:$0xff]
    %v4633 = vld [vmem:[#allocation9 + $0xd0] sm:$0xff]
    %v4634 = vld [vmem:[#allocation9 + $0xd8] sm:$0xff]
    %v4635 = vld [vmem:[#allocation9 + $0xe0] sm:$0xff]
    %v4636 = vld [vmem:[#allocation9 + $0xe8] sm:$0xff]
    %v4637 = vld [vmem:[#allocation9 + $0xf0] sm:$0xff]
    %v4638 = vld [vmem:[#allocation9 + $0xf8] sm:$0xff]
    %v4639 = vld [vmem:[#allocation9 + $0x100] sm:$0xff]
    %v4640 = vld [vmem:[#allocation9 + $0x108] sm:$0xff]
    %v4641 = vld [vmem:[#allocation9 + $0x110] sm:$0xff]
    %v4642 = vld [vmem:[#allocation9 + $0x118] sm:$0xff]
    %v4643 = vld [vmem:[#allocation9 + $0x120] sm:$0xff]
    %v4644 = vld [vmem:[#allocation9 + $0x128] sm:$0xff]
    %v4645 = vld [vmem:[#allocation9 + $0x130] sm:$0xff]
    %v4646 = vld [vmem:[#allocation9 + $0x138] sm:$0xff]
    %v4647 = vld [vmem:[#allocation9 + $0x140] sm:$0xff]
    %v4648 = vld [vmem:[#allocation9 + $0x148] sm:$0xff]
    %v4649 = vld [vmem:[#allocation9 + $0x150] sm:$0xff]
    %v4650 = vld [vmem:[#allocation9 + $0x158] sm:$0xff]
    %v4651 = vld [vmem:[#allocation9 + $0x160] sm:$0xff]
    %v4652 = vld [vmem:[#allocation9 + $0x168] sm:$0xff]
    %v4653 = vld [vmem:[#allocation9 + $0x170] sm:$0xff]
    %v4654 = vld [vmem:[#allocation9 + $0x178] sm:$0xff]
    %v4655 = vld [vmem:[#allocation9 + $0x180] sm:$0xff]
    %v4656 = vld [vmem:[#allocation9 + $0x188] sm:$0xff]
    %v4657 = vld [vmem:[#allocation9 + $0x190] sm:$0xff]
    %v4658 = vld [vmem:[#allocation9 + $0x198] sm:$0xff]
    %v4659 = vld [vmem:[#allocation9 + $0x1a0] sm:$0xff]
    %v4660 = vld [vmem:[#allocation9 + $0x1a8] sm:$0xff]
    %v4661 = vld [vmem:[#allocation9 + $0x1b0] sm:$0xff]
    %v4662 = vld [vmem:[#allocation9 + $0x1b8] sm:$0xff]
    %v4663 = vld [vmem:[#allocation9 + $0x1c0] sm:$0xff]
    %v4664 = vld [vmem:[#allocation9 + $0x1c8] sm:$0xff]
    %v4665 = vld [vmem:[#allocation9 + $0x1d0] sm:$0xff]
    %v4666 = vld [vmem:[#allocation9 + $0x1d8] sm:$0xff]
    %v4667 = vld [vmem:[#allocation9 + $0x1e0] sm:$0xff]
    %v4668 = vld [vmem:[#allocation9 + $0x1e8] sm:$0xff]
    %v4669 = vld [vmem:[#allocation9 + $0x1f0] sm:$0xff]
    %v4670 = vld [vmem:[#allocation9 + $0x1f8] sm:$0xff]
    %v4671 = vld [vmem:[#allocation10] sm:$0x3]
    %v4673 = vlaneseq
    %v4674 = vshrl.u32 %v4673, 7
    %v4675 = vsub.s32 0, %v4674
    %v4676 = vrot.slane %v4671, %v4675
    %v4677 = vlaneseq
    %v4678 = vshrl.u32 %v4677, 7
    %v4679 = vsub.s32 1, %v4678
    %v4680 = vrot.slane %v4671, %v4679
    %v4747 = vunpack.c.l.b16 %v4607
    %v4748 = vunpack.c.h.b16 %v4607
    %v4749 = vunpack.c.l.b16 %v4608
    %v4750 = vunpack.c.h.b16 %v4608
    %v4751 = vunpack.c.l.b16 %v4609
    %v4752 = vunpack.c.h.b16 %v4609
    %v4753 = vunpack.c.l.b16 %v4610
    %v4754 = vunpack.c.h.b16 %v4610
    %v4755 = vunpack.c.l.b16 %v4611
    %v4756 = vunpack.c.h.b16 %v4611
    %v4757 = vunpack.c.l.b16 %v4612
    %v4758 = vunpack.c.h.b16 %v4612
    %v4759 = vunpack.c.l.b16 %v4613
    %v4760 = vunpack.c.h.b16 %v4613
    %v4761 = vunpack.c.l.b16 %v4614
    %v4762 = vunpack.c.h.b16 %v4614
    %v4763 = vunpack.c.l.b16 %v4615
    %v4764 = vunpack.c.h.b16 %v4615
    %v4765 = vunpack.c.l.b16 %v4616
    %v4766 = vunpack.c.h.b16 %v4616
    %v4767 = vunpack.c.l.b16 %v4617
    %v4768 = vunpack.c.h.b16 %v4617
    %v4769 = vunpack.c.l.b16 %v4618
    %v4770 = vunpack.c.h.b16 %v4618
    %v4771 = vunpack.c.l.b16 %v4619
    %v4772 = vunpack.c.h.b16 %v4619
    %v4773 = vunpack.c.l.b16 %v4620
    %v4774 = vunpack.c.h.b16 %v4620
    %v4775 = vunpack.c.l.b16 %v4621
    %v4776 = vunpack.c.h.b16 %v4621
    %v4777 = vunpack.c.l.b16 %v4622
    %v4778 = vunpack.c.h.b16 %v4622
    %v4779 = vunpack.c.l.b16 %v4623
    %v4780 = vunpack.c.h.b16 %v4623
    %v4781 = vunpack.c.l.b16 %v4624
    %v4782 = vunpack.c.h.b16 %v4624
    %v4783 = vunpack.c.l.b16 %v4625
    %v4784 = vunpack.c.h.b16 %v4625
    %v4785 = vunpack.c.l.b16 %v4626
    %v4786 = vunpack.c.h.b16 %v4626
    %v4787 = vunpack.c.l.b16 %v4627
    %v4788 = vunpack.c.h.b16 %v4627
    %v4789 = vunpack.c.l.b16 %v4628
    %v4790 = vunpack.c.h.b16 %v4628
    %v4791 = vunpack.c.l.b16 %v4629
    %v4792 = vunpack.c.h.b16 %v4629
    %v4793 = vunpack.c.l.b16 %v4630
    %v4794 = vunpack.c.h.b16 %v4630
    %v4795 = vunpack.c.l.b16 %v4631
    %v4796 = vunpack.c.h.b16 %v4631
    %v4797 = vunpack.c.l.b16 %v4632
    %v4798 = vunpack.c.h.b16 %v4632
    %v4799 = vunpack.c.l.b16 %v4633
    %v4800 = vunpack.c.h.b16 %v4633
    %v4801 = vunpack.c.l.b16 %v4634
    %v4802 = vunpack.c.h.b16 %v4634
    %v4803 = vunpack.c.l.b16 %v4635
    %v4804 = vunpack.c.h.b16 %v4635
    %v4805 = vunpack.c.l.b16 %v4636
    %v4806 = vunpack.c.h.b16 %v4636
    %v4807 = vunpack.c.l.b16 %v4637
    %v4808 = vunpack.c.h.b16 %v4637
    %v4809 = vunpack.c.l.b16 %v4638
    %v4810 = vunpack.c.h.b16 %v4638
    %v4811 = vunpack.c.l.b16 %v4639
    %v4812 = vunpack.c.h.b16 %v4639
    %v4813 = vunpack.c.l.b16 %v4640
    %v4814 = vunpack.c.h.b16 %v4640
    %v4815 = vunpack.c.l.b16 %v4641
    %v4816 = vunpack.c.h.b16 %v4641
    %v4817 = vunpack.c.l.b16 %v4642
    %v4818 = vunpack.c.h.b16 %v4642
    %v4819 = vunpack.c.l.b16 %v4643
    %v4820 = vunpack.c.h.b16 %v4643
    %v4821 = vunpack.c.l.b16 %v4644
    %v4822 = vunpack.c.h.b16 %v4644
    %v4823 = vunpack.c.l.b16 %v4645
    %v4824 = vunpack.c.h.b16 %v4645
    %v4825 = vunpack.c.l.b16 %v4646
    %v4826 = vunpack.c.h.b16 %v4646
    %v4827 = vunpack.c.l.b16 %v4647
    %v4828 = vunpack.c.h.b16 %v4647
    %v4829 = vunpack.c.l.b16 %v4648
    %v4830 = vunpack.c.h.b16 %v4648
    %v4831 = vunpack.c.l.b16 %v4649
    %v4832 = vunpack.c.h.b16 %v4649
    %v4833 = vunpack.c.l.b16 %v4650
    %v4834 = vunpack.c.h.b16 %v4650
    %v4835 = vunpack.c.l.b16 %v4651
    %v4836 = vunpack.c.h.b16 %v4651
    %v4837 = vunpack.c.l.b16 %v4652
    %v4838 = vunpack.c.h.b16 %v4652
    %v4839 = vunpack.c.l.b16 %v4653
    %v4840 = vunpack.c.h.b16 %v4653
    %v4841 = vunpack.c.l.b16 %v4654
    %v4842 = vunpack.c.h.b16 %v4654
    %v4843 = vunpack.c.l.b16 %v4655
    %v4844 = vunpack.c.h.b16 %v4655
    %v4845 = vunpack.c.l.b16 %v4656
    %v4846 = vunpack.c.h.b16 %v4656
    %v4847 = vunpack.c.l.b16 %v4657
    %v4848 = vunpack.c.h.b16 %v4657
    %v4849 = vunpack.c.l.b16 %v4658
    %v4850 = vunpack.c.h.b16 %v4658
    %v4851 = vunpack.c.l.b16 %v4659
    %v4852 = vunpack.c.h.b16 %v4659
    %v4853 = vunpack.c.l.b16 %v4660
    %v4854 = vunpack.c.h.b16 %v4660
    %v4855 = vunpack.c.l.b16 %v4661
    %v4856 = vunpack.c.h.b16 %v4661
    %v4857 = vunpack.c.l.b16 %v4662
    %v4858 = vunpack.c.h.b16 %v4662
    %v4859 = vunpack.c.l.b16 %v4663
    %v4860 = vunpack.c.h.b16 %v4663
    %v4861 = vunpack.c.l.b16 %v4664
    %v4862 = vunpack.c.h.b16 %v4664
    %v4863 = vunpack.c.l.b16 %v4665
    %v4864 = vunpack.c.h.b16 %v4665
    %v4865 = vunpack.c.l.b16 %v4666
    %v4866 = vunpack.c.h.b16 %v4666
    %v4867 = vunpack.c.l.b16 %v4667
    %v4868 = vunpack.c.h.b16 %v4667
    %v4869 = vunpack.c.l.b16 %v4668
    %v4870 = vunpack.c.h.b16 %v4668
    %v4871 = vunpack.c.l.b16 %v4669
    %v4872 = vunpack.c.h.b16 %v4669
    %v4873 = vunpack.c.l.b16 %v4670
    %v4874 = vunpack.c.h.b16 %v4670
    %v4875 = vpack.c.b16 %v4749, %v4747
    %v4876 = vpack.c.b16 %v4750, %v4748
    %v4877 = vpack.c.b16 %v4753, %v4751
    %v4878 = vpack.c.b16 %v4754, %v4752
    %v4879 = vpack.c.b16 %v4757, %v4755
    %v4880 = vpack.c.b16 %v4758, %v4756
    %v4881 = vpack.c.b16 %v4761, %v4759
    %v4882 = vpack.c.b16 %v4762, %v4760
    %v4883 = vpack.c.b16 %v4765, %v4763
    %v4884 = vpack.c.b16 %v4766, %v4764
    %v4885 = vpack.c.b16 %v4769, %v4767
    %v4886 = vpack.c.b16 %v4770, %v4768
    %v4887 = vpack.c.b16 %v4773, %v4771
    %v4888 = vpack.c.b16 %v4774, %v4772
    %v4889 = vpack.c.b16 %v4777, %v4775
    %v4890 = vpack.c.b16 %v4778, %v4776
    %v4891 = vpack.c.b16 %v4781, %v4779
    %v4892 = vpack.c.b16 %v4782, %v4780
    %v4893 = vpack.c.b16 %v4785, %v4783
    %v4894 = vpack.c.b16 %v4786, %v4784
    %v4895 = vpack.c.b16 %v4789, %v4787
    %v4896 = vpack.c.b16 %v4790, %v4788
    %v4897 = vpack.c.b16 %v4793, %v4791
    %v4898 = vpack.c.b16 %v4794, %v4792
    %v4899 = vpack.c.b16 %v4797, %v4795
    %v4900 = vpack.c.b16 %v4798, %v4796
    %v4901 = vpack.c.b16 %v4801, %v4799
    %v4902 = vpack.c.b16 %v4802, %v4800
    %v4903 = vpack.c.b16 %v4805, %v4803
    %v4904 = vpack.c.b16 %v4806, %v4804
    %v4905 = vpack.c.b16 %v4809, %v4807
    %v4906 = vpack.c.b16 %v4810, %v4808
    %v4907 = vpack.c.b16 %v4813, %v4811
    %v4908 = vpack.c.b16 %v4814, %v4812
    %v4909 = vpack.c.b16 %v4817, %v4815
    %v4910 = vpack.c.b16 %v4818, %v4816
    %v4911 = vpack.c.b16 %v4821, %v4819
    %v4912 = vpack.c.b16 %v4822, %v4820
    %v4913 = vpack.c.b16 %v4825, %v4823
    %v4914 = vpack.c.b16 %v4826, %v4824
    %v4915 = vpack.c.b16 %v4829, %v4827
    %v4916 = vpack.c.b16 %v4830, %v4828
    %v4917 = vpack.c.b16 %v4833, %v4831
    %v4918 = vpack.c.b16 %v4834, %v4832
    %v4919 = vpack.c.b16 %v4837, %v4835
    %v4920 = vpack.c.b16 %v4838, %v4836
    %v4921 = vpack.c.b16 %v4841, %v4839
    %v4922 = vpack.c.b16 %v4842, %v4840
    %v4923 = vpack.c.b16 %v4845, %v4843
    %v4924 = vpack.c.b16 %v4846, %v4844
    %v4925 = vpack.c.b16 %v4849, %v4847
    %v4926 = vpack.c.b16 %v4850, %v4848
    %v4927 = vpack.c.b16 %v4853, %v4851
    %v4928 = vpack.c.b16 %v4854, %v4852
    %v4929 = vpack.c.b16 %v4857, %v4855
    %v4930 = vpack.c.b16 %v4858, %v4856
    %v4931 = vpack.c.b16 %v4861, %v4859
    %v4932 = vpack.c.b16 %v4862, %v4860
    %v4933 = vpack.c.b16 %v4865, %v4863
    %v4934 = vpack.c.b16 %v4866, %v4864
    %v4935 = vpack.c.b16 %v4869, %v4867
    %v4936 = vpack.c.b16 %v4870, %v4868
    %v4937 = vpack.c.b16 %v4873, %v4871
    %v4938 = vpack.c.b16 %v4874, %v4872
    %5003 = vmatprep.subr.bf16.mxu0 %v4876
    %5004 = vmatpush1.bf16.msra.mxu0 %v4875
    %5005 = vmatprep.subr.bf16.mxu0 %v4878
    %5006 = vmatpush1.bf16.msra.mxu0 %v4877
    %5007 = vmatprep.subr.bf16.mxu0 %v4880
    %5008 = vmatpush1.bf16.msra.mxu0 %v4879
    %5009 = vmatprep.subr.bf16.mxu0 %v4882
    %5010 = vmatpush1.bf16.msra.mxu0 %v4881
    %5011 = vmatprep.subr.bf16.mxu0 %v4884
    %5012 = vmatpush1.bf16.msra.mxu0 %v4883
    %5013 = vmatprep.subr.bf16.mxu0 %v4886
    %5014 = vmatpush1.bf16.msra.mxu0 %v4885
    %5015 = vmatprep.subr.bf16.mxu0 %v4888
    %5016 = vmatpush1.bf16.msra.mxu0 %v4887
    %5017 = vmatprep.subr.bf16.mxu0 %v4890
    %5018 = vmatpush1.bf16.msra.mxu0 %v4889
    %5019 = vmatprep.subr.bf16.mxu0 %v4892
    %5020 = vmatpush1.bf16.msra.mxu0 %v4891
    %5021 = vmatprep.subr.bf16.mxu0 %v4894
    %5022 = vmatpush1.bf16.msra.mxu0 %v4893
    %5023 = vmatprep.subr.bf16.mxu0 %v4896
    %5024 = vmatpush1.bf16.msra.mxu0 %v4895
    %5025 = vmatprep.subr.bf16.mxu0 %v4898
    %5026 = vmatpush1.bf16.msra.mxu0 %v4897
    %5027 = vmatprep.subr.bf16.mxu0 %v4900
    %5028 = vmatpush1.bf16.msra.mxu0 %v4899
    %5029 = vmatprep.subr.bf16.mxu0 %v4902
    %5030 = vmatpush1.bf16.msra.mxu0 %v4901
    %5031 = vmatprep.subr.bf16.mxu0 %v4904
    %5032 = vmatpush1.bf16.msra.mxu0 %v4903
    %5033 = vmatprep.subr.bf16.mxu0 %v4906
    %5034 = vmatpush1.bf16.msra.mxu0 %v4905
    %5035 = vmatprep.mubr.bf16.mxu0 %v4604
    %5036 = vmatmul.mubr.bf16.gmra.mrb[0].mxu0 %v4603
    %v5037 = vpop.f32.mrb[0].mxu0
    %v5038 = vadd.f32 %v4676, %v5037
    %v5039 = vpop.f32.mrb[0].mxu0
    %v5040 = vadd.f32 %v4680, %v5039
    %v5041 = vpop.f32.mrb[0].mxu0
    %v5042 = vadd.f32 %v4676, %v5041
    %v5043 = vpop.f32.mrb[0].mxu0
    %v5044 = vadd.f32 %v4680, %v5043
    %5045 = vdwg.mxu0
    %5046 = vmatprep.subr.bf16.mxu0 %v4908
    %5047 = vmatpush1.bf16.msra.mxu0 %v4907
    %5048 = vmatprep.subr.bf16.mxu0 %v4910
    %5049 = vmatpush1.bf16.msra.mxu0 %v4909
    %5050 = vmatprep.subr.bf16.mxu0 %v4912
    %5051 = vmatpush1.bf16.msra.mxu0 %v4911
    %5052 = vmatprep.subr.bf16.mxu0 %v4914
    %5053 = vmatpush1.bf16.msra.mxu0 %v4913
    %5054 = vmatprep.subr.bf16.mxu0 %v4916
    %5055 = vmatpush1.bf16.msra.mxu0 %v4915
    %5056 = vmatprep.subr.bf16.mxu0 %v4918
    %5057 = vmatpush1.bf16.msra.mxu0 %v4917
    %5058 = vmatprep.subr.bf16.mxu0 %v4920
    %5059 = vmatpush1.bf16.msra.mxu0 %v4919
    %5060 = vmatprep.subr.bf16.mxu0 %v4922
    %5061 = vmatpush1.bf16.msra.mxu0 %v4921
    %5062 = vmatprep.subr.bf16.mxu0 %v4924
    %5063 = vmatpush1.bf16.msra.mxu0 %v4923
    %5064 = vmatprep.subr.bf16.mxu0 %v4926
    %5065 = vmatpush1.bf16.msra.mxu0 %v4925
    %5066 = vmatprep.subr.bf16.mxu0 %v4928
    %5067 = vmatpush1.bf16.msra.mxu0 %v4927
    %5068 = vmatprep.subr.bf16.mxu0 %v4930
    %5069 = vmatpush1.bf16.msra.mxu0 %v4929
    %5070 = vmatprep.subr.bf16.mxu0 %v4932
    %5071 = vmatpush1.bf16.msra.mxu0 %v4931
    %5072 = vmatprep.subr.bf16.mxu0 %v4934
    %5073 = vmatpush1.bf16.msra.mxu0 %v4933
    %5074 = vmatprep.subr.bf16.mxu0 %v4936
    %5075 = vmatpush1.bf16.msra.mxu0 %v4935
    %5076 = vmatprep.subr.bf16.mxu0 %v4938
    %5077 = vmatpush1.bf16.msra.mxu0 %v4937
    %5078 = vmatprep.mubr.bf16.mxu0 %v4606
    %5079 = vmatmul.mubr.bf16.gmra.mrb[0].mxu0 %v4605
    %v5080 = vpop.f32.mrb[0].mxu0
    %v5081 = vadd.f32 %v5038, %v5080
    %v5082 = vpop.f32.mrb[0].mxu0
    %v5083 = vadd.f32 %v5040, %v5082
    %v5084 = vpop.f32.mrb[0].mxu0
    %v5085 = vadd.f32 %v5042, %v5084
    %v5086 = vpop.f32.mrb[0].mxu0
    %v5087 = vadd.f32 %v5044, %v5086
    %5088 = vdwg.mxu0
    %v5089 = vmax.f32 %v5081, 0.0
    %v5090 = vmax.f32 %v5083, 0.0
    %v5091 = vmax.f32 %v5085, 0.0
    %v5092 = vmax.f32 %v5087, 0.0
    %v5093 = vpack.c.bf16 %v5091, %v5089
    %v5094 = vpack.c.bf16 %v5092, %v5090
    %v5095 = vld [vmem:[#allocation12] sm:$0xf]
    %v5096 = vld [vmem:[#allocation12 + $0x4] sm:$0xf]
    %v5097 = vld [vmem:[#allocation12 + $0x8] sm:$0xf]
    %v5098 = vld [vmem:[#allocation12 + $0xc] sm:$0xf]
    %v5099 = vld [vmem:[#allocation12 + $0x10] sm:$0xf]
    %v5100 = vld [vmem:[#allocation12 + $0x14] sm:$0xf]
    %v5101 = vld [vmem:[#allocation12 + $0x18] sm:$0xf]
    %v5102 = vld [vmem:[#allocation12 + $0x1c] sm:$0xf]
    %v5103 = vld [vmem:[#allocation12 + $0x20] sm:$0xf]
    %v5104 = vld [vmem:[#allocation12 + $0x24] sm:$0xf]
    %v5105 = vld [vmem:[#allocation12 + $0x28] sm:$0xf]
    %v5106 = vld [vmem:[#allocation12 + $0x2c] sm:$0xf]
    %v5107 = vld [vmem:[#allocation12 + $0x30] sm:$0xf]
    %v5108 = vld [vmem:[#allocation12 + $0x34] sm:$0xf]
    %v5109 = vld [vmem:[#allocation12 + $0x38] sm:$0xf]
    %v5110 = vld [vmem:[#allocation12 + $0x3c] sm:$0xf]
    %v5111 = vld [vmem:[#allocation12 + $0x40] sm:$0xf]
    %v5112 = vld [vmem:[#allocation12 + $0x44] sm:$0xf]
    %v5113 = vld [vmem:[#allocation12 + $0x48] sm:$0xf]
    %v5114 = vld [vmem:[#allocation12 + $0x4c] sm:$0xf]
    %v5115 = vld [vmem:[#allocation12 + $0x50] sm:$0xf]
    %v5116 = vld [vmem:[#allocation12 + $0x54] sm:$0xf]
    %v5117 = vld [vmem:[#allocation12 + $0x58] sm:$0xf]
    %v5118 = vld [vmem:[#allocation12 + $0x5c] sm:$0xf]
    %v5119 = vld [vmem:[#allocation12 + $0x60] sm:$0xf]
    %v5120 = vld [vmem:[#allocation12 + $0x64] sm:$0xf]
    %v5121 = vld [vmem:[#allocation12 + $0x68] sm:$0xf]
    %v5122 = vld [vmem:[#allocation12 + $0x6c] sm:$0xf]
    %v5123 = vld [vmem:[#allocation12 + $0x70] sm:$0xf]
    %v5124 = vld [vmem:[#allocation12 + $0x74] sm:$0xf]
    %v5125 = vld [vmem:[#allocation12 + $0x78] sm:$0xf]
    %v5126 = vld [vmem:[#allocation12 + $0x7c] sm:$0xf]
    %v5127 = vld [vmem:[#allocation13] sm:$0x1]
    %v5129 = vlaneseq
    %v5130 = vshrl.u32 %v5129, 7
    %v5131 = vsub.s32 0, %v5130
    %v5132 = vrot.slane %v5127, %v5131
    %v5166 = vunpack.c.l.b16 %v5095
    %v5167 = vunpack.c.l.b16 %v5096
    %v5168 = vunpack.c.l.b16 %v5097
    %v5169 = vunpack.c.l.b16 %v5098
    %v5170 = vunpack.c.l.b16 %v5099
    %v5171 = vunpack.c.l.b16 %v5100
    %v5172 = vunpack.c.l.b16 %v5101
    %v5173 = vunpack.c.l.b16 %v5102
    %v5174 = vunpack.c.l.b16 %v5103
    %v5175 = vunpack.c.l.b16 %v5104
    %v5176 = vunpack.c.l.b16 %v5105
    %v5177 = vunpack.c.l.b16 %v5106
    %v5178 = vunpack.c.l.b16 %v5107
    %v5179 = vunpack.c.l.b16 %v5108
    %v5180 = vunpack.c.l.b16 %v5109
    %v5181 = vunpack.c.l.b16 %v5110
    %v5182 = vunpack.c.l.b16 %v5111
    %v5183 = vunpack.c.l.b16 %v5112
    %v5184 = vunpack.c.l.b16 %v5113
    %v5185 = vunpack.c.l.b16 %v5114
    %v5186 = vunpack.c.l.b16 %v5115
    %v5187 = vunpack.c.l.b16 %v5116
    %v5188 = vunpack.c.l.b16 %v5117
    %v5189 = vunpack.c.l.b16 %v5118
    %v5190 = vunpack.c.l.b16 %v5119
    %v5191 = vunpack.c.l.b16 %v5120
    %v5192 = vunpack.c.l.b16 %v5121
    %v5193 = vunpack.c.l.b16 %v5122
    %v5194 = vunpack.c.l.b16 %v5123
    %v5195 = vunpack.c.l.b16 %v5124
    %v5196 = vunpack.c.l.b16 %v5125
    %v5197 = vunpack.c.l.b16 %v5126
    %v5198 = vpack.c.b16 %v5167, %v5166
    %v5199 = vpack.c.b16 %v5169, %v5168
    %v5200 = vpack.c.b16 %v5171, %v5170
    %v5201 = vpack.c.b16 %v5173, %v5172
    %v5202 = vpack.c.b16 %v5175, %v5174
    %v5203 = vpack.c.b16 %v5177, %v5176
    %v5204 = vpack.c.b16 %v5179, %v5178
    %v5205 = vpack.c.b16 %v5181, %v5180
    %v5206 = vpack.c.b16 %v5183, %v5182
    %v5207 = vpack.c.b16 %v5185, %v5184
    %v5208 = vpack.c.b16 %v5187, %v5186
    %v5209 = vpack.c.b16 %v5189, %v5188
    %v5210 = vpack.c.b16 %v5191, %v5190
    %v5211 = vpack.c.b16 %v5193, %v5192
    %v5212 = vpack.c.b16 %v5195, %v5194
    %v5213 = vpack.c.b16 %v5197, %v5196
    %5230 = vmatprep.subr.bf16.mxu0 0
    %5231 = vmatpush1.bf16.msra.mxu0 %v5198
    %5232 = vmatprep.subr.bf16.mxu0 0
    %5233 = vmatpush1.bf16.msra.mxu0 %v5199
    %5234 = vmatprep.subr.bf16.mxu0 0
    %5235 = vmatpush1.bf16.msra.mxu0 %v5200
    %5236 = vmatprep.subr.bf16.mxu0 0
    %5237 = vmatpush1.bf16.msra.mxu0 %v5201
    %5238 = vmatprep.subr.bf16.mxu0 0
    %5239 = vmatpush1.bf16.msra.mxu0 %v5202
    %5240 = vmatprep.subr.bf16.mxu0 0
    %5241 = vmatpush1.bf16.msra.mxu0 %v5203
    %5242 = vmatprep.subr.bf16.mxu0 0
    %5243 = vmatpush1.bf16.msra.mxu0 %v5204
    %5244 = vmatprep.subr.bf16.mxu0 0
    %5245 = vmatpush1.bf16.msra.mxu0 %v5205
    %5246 = vmatprep.subr.bf16.mxu0 0
    %5247 = vmatpush1.bf16.msra.mxu0 %v5206
    %5248 = vmatprep.subr.bf16.mxu0 0
    %5249 = vmatpush1.bf16.msra.mxu0 %v5207
    %5250 = vmatprep.subr.bf16.mxu0 0
    %5251 = vmatpush1.bf16.msra.mxu0 %v5208
    %5252 = vmatprep.subr.bf16.mxu0 0
    %5253 = vmatpush1.bf16.msra.mxu0 %v5209
    %5254 = vmatprep.subr.bf16.mxu0 0
    %5255 = vmatpush1.bf16.msra.mxu0 %v5210
    %5256 = vmatprep.subr.bf16.mxu0 0
    %5257 = vmatpush1.bf16.msra.mxu0 %v5211
    %5258 = vmatprep.subr.bf16.mxu0 0
    %5259 = vmatpush1.bf16.msra.mxu0 %v5212
    %5260 = vmatprep.subr.bf16.mxu0 0
    %5261 = vmatpush1.bf16.msra.mxu0 %v5213
    %5262 = vmatprep.mubr.bf16.mxu0 %v5094
    %5263 = vmatmul.mubr.bf16.gmra.mrb[0].mxu0 %v5093
    %v5264 = vpop.f32.mrb[0].mxu0
    %v5265 = vadd.f32 %v5132, %v5264
    %v5266 = vpop.f32.mrb[0].mxu0
    %v5267 = vpop.f32.mrb[0].mxu0
    %v5268 = vadd.f32 %v5132, %v5267
    %v5269 = vpop.f32.mrb[0].mxu0
    %5270 = vdwg.mxu0
    %5271 = vst [vmem:[%s9] sm:$0xff] %v5265
    %5272 = vst [vmem:[%s9 + $0x8] sm:$0xff] %v5268
    // Predicated region
    $region70: #{feature_model_forward.1} parent=1 // pred_check
      _
    $region71: #{feature_model_forward.1} parent=1 // pred_check_branch
      %5274 = sbr.rel (0) target = $region73
    $region72: #{feature_model_forward.1} parent=1 // pred_region
      _
    $region73: #{feature_model_forward.1} parent=1 // pred_fallthru
      _
    // Predicated region
    $region74: #{feature_model_forward.1} parent=1 // pred_check
      _
    $region75: #{feature_model_forward.1} parent=1 // pred_check_branch
      %5276 = sbr.rel (0) target = $region77
    $region76: #{feature_model_forward.1} parent=1 // pred_region
      _
    $region77: #{feature_model_forward.1} parent=1 // pred_fallthru
      _
    %5277 = vsyncpa [#allocation3], 1
    %5278 = vsyncpa [#allocation5], 1
    %5279 = vsyncpa [#allocation8], 1
    %5280 = vsyncpa [#allocation11], 1
    %5281 = vsyncpa [#allocation14], 1

</llo_original>
